<compile_context>
chip_gen: v5e
topology: v5e:2x2
jax: 0.10.0
libtpu: 0.0.40
codegen_flags: <defaults>
</compile_context>

<pallas_src>
import jax
import jax.numpy as jnp
from jax.experimental import pallas as pl
from jax.experimental.pallas import tpu as pltpu

# ----------------------------- model sizes -----------------------------------
B = 8          # batch
S_SRC = 8      # source sequence length
T_DEC = 8      # decoder (label set) length
E = 128        # embedding dim
H = 128        # hidden dim
SRC_VOCAB = 256
TGT_VOCAB = 128

assert B & (B - 1) == 0, "B must be a power of two (bitwise %/÷ in kernel)"
B_SHIFT = B.bit_length() - 1

NEG_INF = -1e30


# ----------------------------- in-kernel GRU recurrence -----------------------
def _gru_scan(gx_ref, wh_bf16, b_hn, h0, n_steps, hseq_ref, keep_ref=None):
    """GRU recurrence; gx_ref (VMEM scratch) holds x @ Wx + bias for every step.

    gx_ref:   VMEM ref (n_steps*B, 3H) f32, row = t*B + b, torch gate order r,z,n
              (hidden-side r,z biases already folded into the bias).
    wh_bf16:  (H, 3H) bf16   recurrent weights (MXU operand, loaded once).
    b_hn:     (1, H) f32     hidden-side new-gate bias (gated by r).
    h0:       (B, H) f32     initial hidden state.
    hseq_ref: VMEM ref (n_steps*B, H) f32, receives h_t rows.
    keep_ref: optional VMEM ref (n_steps*B, 1) f32; 0.0 freezes h (padded steps).
    """
    bsz, hd = h0.shape
    b_hn_b = jnp.broadcast_to(b_hn, (bsz, hd))   # hoisted once (1 vreg)

    h = h0
    for t in range(n_steps):          # tiny static trip count -> fully unrolled
        row = t * bsz
        gx = gx_ref[row:row + bsz, :]                            # (B, 3H) load
        gh = jnp.dot(h.astype(jnp.bfloat16), wh_bf16,
                     preferred_element_type=jnp.float32)         # (B, 3H) f32
        rz = jax.nn.sigmoid(gx[:, :2 * hd] + gh[:, :2 * hd])     # joint r,z
        r = rz[:, :hd]
        z = rz[:, hd:]
        n = jnp.tanh(gx[:, 2 * hd:] + r * (gh[:, 2 * hd:] + b_hn_b))
        h_new = (1.0 - z) * n + z * h
        if keep_ref is not None:
            keep = keep_ref[row:row + bsz, :]                    # (B, 1)
            h_new = keep * h_new + (1.0 - keep) * h              # freeze padded
        h = h_new
        hseq_ref[row:row + bsz, :] = h
    return h


# ----------------------------- fused encoder+decoder kernel -------------------
def seq2set_kernel(src_len_ref,
                   src_emb_ref, dec_emb_ref,
                   enc_wx_ref, enc_wh_ref, enc_bgx_ref, enc_bhn_ref,
                   dec_wx_ref, dec_wh_ref, dec_bgx_ref, dec_bhn_ref,
                   wc_ref, wo_ref, bo_ref,
                   out_ref,
                   ctx_ref, hdec_ref, gx_enc_ref, gx_dec_ref, keep_ref):
    f32 = jnp.float32
    bf16 = jnp.bfloat16

    # -- source-length keep mask (row = t*B + b), built from SMEM scalars ------
    r1 = jax.lax.broadcasted_iota(jnp.int32, (S_SRC * B, 1), 0)
    r1_b = jnp.bitwise_and(r1, B - 1)
    r1_t = jnp.right_shift(r1, B_SHIFT)
    lens_row = jnp.zeros((S_SRC * B, 1), jnp.int32)
    for b in range(B):
        lens_row = jnp.where(r1_b == b, src_len_ref[b], lens_row)
    keep_ref[...] = (r1_t < lens_row).astype(f32)

    # -- encoder: input-side projections for ALL steps -> VMEM scratch ---------
    gx_enc_ref[...] = jnp.dot(src_emb_ref[...], enc_wx_ref[...],
                              preferred_element_type=f32) + enc_bgx_ref[...]
    h0 = jnp.zeros((B, H), f32)
    enc_state = _gru_scan(gx_enc_ref, enc_wh_ref[...], enc_bhn_ref[...],
                          h0, S_SRC, ctx_ref, keep_ref=keep_ref)

    # -- decoder: its gx is computed right before its scan (bounds live range) -
    gx_dec_ref[...] = jnp.dot(dec_emb_ref[...], dec_wx_ref[...],
                              preferred_element_type=f32) + dec_bgx_ref[...]
    _gru_scan(gx_dec_ref, dec_wh_ref[...], dec_bhn_ref[...],
              enc_state, T_DEC, hdec_ref)

    # -- batched Luong attention over all decoder steps -------------------------
    # Additive bias keeps only same-batch (row%B == col%B) and in-length
    # (col//B < src_len[col%B]) source positions; built in-kernel from src_len.
    rq = jax.lax.broadcasted_iota(jnp.int32, (T_DEC * B, S_SRC * B), 0)
    ck = jax.lax.broadcasted_iota(jnp.int32, (T_DEC * B, S_SRC * B), 1)
    batch_match = jnp.bitwise_and(rq, B - 1) == jnp.bitwise_and(ck, B - 1)

    c1 = jax.lax.broadcasted_iota(jnp.int32, (1, S_SRC * B), 1)
    c1_b = jnp.bitwise_and(c1, B - 1)
    c1_s = jnp.right_shift(c1, B_SHIFT)
    lens_col = jnp.zeros((1, S_SRC * B), jnp.int32)
    for b in range(B):
        lens_col = jnp.where(c1_b == b, src_len_ref[b], lens_col)
    in_len = c1_s < lens_col                                       # (1, S*B)
    attn_bias = jnp.where(jnp.logical_and(batch_match, in_len),
                          0.0, NEG_INF).astype(f32)                # (T*B, S*B)

    ctx_bf = ctx_ref[...].astype(bf16)     # (S*B, H)
    hdec_bf = hdec_ref[...].astype(bf16)   # (T*B, H)

    scores = jax.lax.dot_general(
        hdec_bf, ctx_bf, (((1,), (1,)), ((), ())),
        preferred_element_type=f32) + attn_bias                    # (T*B, S*B)
    m = jnp.max(scores, axis=-1, keepdims=True)
    p = jnp.exp(scores - m)
    attn = p / jnp.sum(p, axis=-1, keepdims=True)                  # exact
    c_att = jnp.dot(attn.astype(bf16), ctx_bf,
                    preferred_element_type=f32)                    # (T*B, H)

    # combined = tanh(W_c [h ; c_att]) as ONE K=2H matmul (stacked weight).
    hc = jnp.concatenate([hdec_bf, c_att.astype(bf16)], axis=-1)   # (T*B, 2H)
    comb = jnp.tanh(jnp.dot(hc, wc_ref[...], preferred_element_type=f32))

    out_ref[...] = (jnp.dot(comb.astype(bf16), wo_ref[...],
                            preferred_element_type=f32) + bo_ref[...])


def _seq2set_pallas(src_len, src_emb, dec_emb, p):
    vmem = pl.BlockSpec(memory_space=pltpu.MemorySpace.VMEM)
    smem = pl.BlockSpec(memory_space=pltpu.MemorySpace.SMEM)
    args = (src_len, src_emb, dec_emb,
            p["enc_wx"], p["enc_wh"], p["enc_b_gx"], p["enc_b_hn"],
            p["dec_wx"], p["dec_wh"], p["dec_b_gx"], p["dec_b_hn"],
            p["w_comb"], p["w_out"], p["b_out"])
    return pl.pallas_call(
        seq2set_kernel,
        out_shape=jax.ShapeDtypeStruct((T_DEC * B, TGT_VOCAB), jnp.float32),
        in_specs=[smem] + [vmem] * (len(args) - 1),
        out_specs=vmem,
        scratch_shapes=[
            pltpu.VMEM((S_SRC * B, H), jnp.float32),       # encoder contexts
            pltpu.VMEM((T_DEC * B, H), jnp.float32),       # decoder hidden seq
            pltpu.VMEM((S_SRC * B, 3 * H), jnp.float32),   # encoder gx scratch
            pltpu.VMEM((T_DEC * B, 3 * H), jnp.float32),   # decoder gx scratch
            pltpu.VMEM((S_SRC * B, 1), jnp.float32),       # step keep mask
        ],
    )(*args)


# ----------------------------- params ------------------------------------------
def init_params(key):
    ks = jax.random.split(key, 13)
    s = 0.05
    f32 = jnp.float32

    def w(k, shape):  # MXU operands stored in bf16 (f32 accumulation in-kernel)
        return (s * jax.random.normal(k, shape, f32)).astype(jnp.bfloat16)

    def bias(k, shape):
        return s * jax.random.normal(k, shape, f32)

    def fold_bias(b_ih, b_hh):
        # torch gate order (r, z, n): fold the hidden-side r,z biases into the
        # input-projection bias; b_hn stays separate (it is gated by r).
        b_gx = b_ih.at[:, :2 * H].add(b_hh[:, :2 * H])
        b_hn = b_hh[:, 2 * H:]
        return b_gx, b_hn

    enc_b_gx, enc_b_hn = fold_bias(bias(ks[9], (1, 3 * H)),
                                   bias(ks[10], (1, 3 * H)))
    dec_b_gx, dec_b_hn = fold_bias(bias(ks[11], (1, 3 * H)),
                                   bias(ks[12], (1, 3 * H)))

    wc_h = w(ks[6], (H, H))
    wc_c = w(ks[7], (H, H))

    return {
        "src_embed": w(ks[0], (SRC_VOCAB, E)),
        "tgt_embed": w(ks[1], (TGT_VOCAB, E)),
        "enc_wx": w(ks[2], (E, 3 * H)),
        "enc_wh": w(ks[3], (H, 3 * H)),
        "enc_b_gx": enc_b_gx,
        "enc_b_hn": enc_b_hn,
        "dec_wx": w(ks[4], (E, 3 * H)),
        "dec_wh": w(ks[5], (H, 3 * H)),
        "dec_b_gx": dec_b_gx,
        "dec_b_hn": dec_b_hn,
        # stacked combine weight: tanh([h ; c_att] @ w_comb) — one K=2H matmul
        "w_comb": jnp.concatenate([wc_h, wc_c], axis=0),        # (2H, H) bf16
        "w_out": w(ks[8], (H, TGT_VOCAB)),
        "b_out": jnp.zeros((1, TGT_VOCAB), f32),
    }


# ----------------------------- full forward (Seq2Set.forward) ------------------
@jax.jit
def seq2set_forward(src, src_mask, src_len, dec, targets, segment_ids, params):
    # Matches PyTorch: src/dec/targets arrive batch-major and are transposed.
    del src_mask, segment_ids   # src_mask is redundant with src_len here
    src_t = src.T               # (S, B)
    dec_t = dec.T               # (T, B)
    targets_t = targets.T       # (T, B)

    # Embedding lookups (gathers) are glue; rows flattened time-major (t*B + b)
    # so the kernel only sees lane-dense 2-D slabs.
    src_emb = jnp.take(params["src_embed"], src_t.reshape(-1), axis=0)  # (S*B, E)
    dec_emb = jnp.take(params["tgt_embed"], dec_t.reshape(-1), axis=0)  # (T*B, E)

    out_flat = _seq2set_pallas(src_len.astype(jnp.int32), src_emb, dec_emb,
                               params)
    outputs = out_flat.reshape(T_DEC, B, TGT_VOCAB)   # time-major like PyTorch
    return outputs, targets_t


# ----------------------------- main --------------------------------------------
if __name__ == "__main__":
    key = jax.random.PRNGKey(0)
    kp, k1, k2, k3, k4 = jax.random.split(key, 5)
    params = init_params(kp)

    src = jax.random.randint(k1, (B, S_SRC), 0, SRC_VOCAB, dtype=jnp.int32)
    dec = jax.random.randint(k2, (B, T_DEC), 0, TGT_VOCAB, dtype=jnp.int32)
    targets = jax.random.randint(k3, (B, T_DEC), 0, TGT_VOCAB, dtype=jnp.int32)
    src_len = jax.random.randint(k4, (B,), S_SRC // 2, S_SRC + 1, dtype=jnp.int32)
    src_mask = (jnp.arange(S_SRC)[None, :] < src_len[:, None]).astype(jnp.int32)
    segment_ids = jnp.zeros((B, S_SRC), jnp.int32)

    outputs, tgt_t = seq2set_forward(src, src_mask, src_len, dec, targets,
                                     segment_ids, params)
    jax.block_until_ready((outputs, tgt_t))
    assert outputs.shape == (T_DEC, B, TGT_VOCAB)
    assert tgt_t.shape == (T_DEC, B)
    assert bool(jnp.all(jnp.isfinite(outputs)))
    print("KERNEL_OK")
</pallas_src>

<mosaic_0001>
module attributes {stable_mosaic.version = 11 : i64} {
  func.func @seq2set_kernel(%arg0: memref<8xi32, #tpu.memory_space<smem>>, %arg1: memref<64x128xbf16, #tpu.memory_space<vmem>>, %arg2: memref<64x128xbf16, #tpu.memory_space<vmem>>, %arg3: memref<128x384xbf16, #tpu.memory_space<vmem>>, %arg4: memref<128x384xbf16, #tpu.memory_space<vmem>>, %arg5: memref<1x384xf32, #tpu.memory_space<vmem>>, %arg6: memref<1x128xf32, #tpu.memory_space<vmem>>, %arg7: memref<128x384xbf16, #tpu.memory_space<vmem>>, %arg8: memref<128x384xbf16, #tpu.memory_space<vmem>>, %arg9: memref<1x384xf32, #tpu.memory_space<vmem>>, %arg10: memref<1x128xf32, #tpu.memory_space<vmem>>, %arg11: memref<256x128xbf16, #tpu.memory_space<vmem>>, %arg12: memref<128x128xbf16, #tpu.memory_space<vmem>>, %arg13: memref<1x128xf32, #tpu.memory_space<vmem>>, %arg14: memref<64x128xf32, #tpu.memory_space<vmem>>, %arg15: memref<64x128xf32, #tpu.memory_space<vmem>>, %arg16: memref<64x128xf32, #tpu.memory_space<vmem>>, %arg17: memref<64x384xf32, #tpu.memory_space<vmem>>, %arg18: memref<64x384xf32, #tpu.memory_space<vmem>>, %arg19: memref<64x1xf32, #tpu.memory_space<vmem>>) attributes {dimension_semantics = [], scalar_prefetch = 0 : i64, scratch_operands = 5 : i64, tpu.core_type = #tpu.core_type<tc>} {
    %0 = tpu.iota {dimensions = array<i32: 0>} : vector<64x1xi32>
    %c7_i32 = arith.constant 7 : i32
    %1 = vector.broadcast %c7_i32 : i32 to vector<64x1xi32>
    %2 = arith.andi %0, %1 : vector<64x1xi32>
    %c3_i32 = arith.constant 3 : i32
    %3 = vector.broadcast %c3_i32 : i32 to vector<64x1xi32>
    %4 = arith.shrsi %0, %3 : vector<64x1xi32>
    %c0_i32 = arith.constant 0 : i32
    %5 = vector.broadcast %c0_i32 : i32 to vector<64x1xi32>
    %c0_i32_0 = arith.constant 0 : i32
    %6 = vector.broadcast %c0_i32_0 : i32 to vector<64x1xi32>
    %7 = arith.cmpi eq, %2, %6 : vector<64x1xi32>
    %c0 = arith.constant 0 : index
    %8 = memref.load %arg0[%c0] : memref<8xi32, #tpu.memory_space<smem>>
    %9 = vector.broadcast %8 : i32 to vector<64x1xi32>
    %10 = arith.select %7, %9, %5 : vector<64x1xi1>, vector<64x1xi32>
    %c1_i32 = arith.constant 1 : i32
    %11 = vector.broadcast %c1_i32 : i32 to vector<64x1xi32>
    %12 = arith.cmpi eq, %2, %11 : vector<64x1xi32>
    %c1 = arith.constant 1 : index
    %13 = memref.load %arg0[%c1] : memref<8xi32, #tpu.memory_space<smem>>
    %14 = vector.broadcast %13 : i32 to vector<64x1xi32>
    %15 = arith.select %12, %14, %10 : vector<64x1xi1>, vector<64x1xi32>
    %c2_i32 = arith.constant 2 : i32
    %16 = vector.broadcast %c2_i32 : i32 to vector<64x1xi32>
    %17 = arith.cmpi eq, %2, %16 : vector<64x1xi32>
    %c2 = arith.constant 2 : index
    %18 = memref.load %arg0[%c2] : memref<8xi32, #tpu.memory_space<smem>>
    %19 = vector.broadcast %18 : i32 to vector<64x1xi32>
    %20 = arith.select %17, %19, %15 : vector<64x1xi1>, vector<64x1xi32>
    %c3_i32_1 = arith.constant 3 : i32
    %21 = vector.broadcast %c3_i32_1 : i32 to vector<64x1xi32>
    %22 = arith.cmpi eq, %2, %21 : vector<64x1xi32>
    %c3 = arith.constant 3 : index
    %23 = memref.load %arg0[%c3] : memref<8xi32, #tpu.memory_space<smem>>
    %24 = vector.broadcast %23 : i32 to vector<64x1xi32>
    %25 = arith.select %22, %24, %20 : vector<64x1xi1>, vector<64x1xi32>
    %c4_i32 = arith.constant 4 : i32
    %26 = vector.broadcast %c4_i32 : i32 to vector<64x1xi32>
    %27 = arith.cmpi eq, %2, %26 : vector<64x1xi32>
    %c4 = arith.constant 4 : index
    %28 = memref.load %arg0[%c4] : memref<8xi32, #tpu.memory_space<smem>>
    %29 = vector.broadcast %28 : i32 to vector<64x1xi32>
    %30 = arith.select %27, %29, %25 : vector<64x1xi1>, vector<64x1xi32>
    %c5_i32 = arith.constant 5 : i32
    %31 = vector.broadcast %c5_i32 : i32 to vector<64x1xi32>
    %32 = arith.cmpi eq, %2, %31 : vector<64x1xi32>
    %c5 = arith.constant 5 : index
    %33 = memref.load %arg0[%c5] : memref<8xi32, #tpu.memory_space<smem>>
    %34 = vector.broadcast %33 : i32 to vector<64x1xi32>
    %35 = arith.select %32, %34, %30 : vector<64x1xi1>, vector<64x1xi32>
    %c6_i32 = arith.constant 6 : i32
    %36 = vector.broadcast %c6_i32 : i32 to vector<64x1xi32>
    %37 = arith.cmpi eq, %2, %36 : vector<64x1xi32>
    %c6 = arith.constant 6 : index
    %38 = memref.load %arg0[%c6] : memref<8xi32, #tpu.memory_space<smem>>
    %39 = vector.broadcast %38 : i32 to vector<64x1xi32>
    %40 = arith.select %37, %39, %35 : vector<64x1xi1>, vector<64x1xi32>
    %c7_i32_2 = arith.constant 7 : i32
    %41 = vector.broadcast %c7_i32_2 : i32 to vector<64x1xi32>
    %42 = arith.cmpi eq, %2, %41 : vector<64x1xi32>
    %c7 = arith.constant 7 : index
    %43 = memref.load %arg0[%c7] : memref<8xi32, #tpu.memory_space<smem>>
    %44 = vector.broadcast %43 : i32 to vector<64x1xi32>
    %45 = arith.select %42, %44, %40 : vector<64x1xi1>, vector<64x1xi32>
    %46 = arith.cmpi slt, %4, %45 : vector<64x1xi32>
    %47 = arith.extui %46 : vector<64x1xi1> to vector<64x1xi32>
    %48 = arith.sitofp %47 : vector<64x1xi32> to vector<64x1xf32>
    %c0_3 = arith.constant 0 : index
    %c0_4 = arith.constant 0 : index
    %49 = vector.load %arg19[%c0_3, %c0_4] : memref<64x1xf32, #tpu.memory_space<vmem>>, vector<64x1xf32>
    tpu.vector_store %arg19[%c0_3, %c0_4], %48 {strides = array<i32>} : memref<64x1xf32, #tpu.memory_space<vmem>>, vector<64x1xf32>,
    %c0_5 = arith.constant 0 : index
    %c0_6 = arith.constant 0 : index
    %50 = vector.load %arg1[%c0_5, %c0_6] : memref<64x128xbf16, #tpu.memory_space<vmem>>, vector<64x128xbf16>
    %c0_7 = arith.constant 0 : index
    %c0_8 = arith.constant 0 : index
    %51 = vector.load %arg3[%c0_7, %c0_8] : memref<128x384xbf16, #tpu.memory_space<vmem>>, vector<128x384xbf16>
    %cst = arith.constant dense<0.000000e+00> : vector<64x384xf32>
    %52 = tpu.matmul %50, %51, %cst {dimension_numbers = #tpu.dot_dimension_numbers<[1], [0], [0], [1], [0, 0, 1, 1], [], []>} : vector<64x128xbf16>, vector<128x384xbf16>, vector<64x384xf32> -> vector<64x384xf32>
    %c0_9 = arith.constant 0 : index
    %c0_10 = arith.constant 0 : index
    %53 = vector.load %arg5[%c0_9, %c0_10] : memref<1x384xf32, #tpu.memory_space<vmem>>, vector<1x384xf32>
    %54 = vector.broadcast %53 : vector<1x384xf32> to vector<64x384xf32>
    %55 = arith.addf %52, %54 : vector<64x384xf32>
    %c0_11 = arith.constant 0 : index
    %c0_12 = arith.constant 0 : index
    %56 = vector.load %arg17[%c0_11, %c0_12] : memref<64x384xf32, #tpu.memory_space<vmem>>, vector<64x384xf32>
    tpu.vector_store %arg17[%c0_11, %c0_12], %55 {strides = array<i32>} : memref<64x384xf32, #tpu.memory_space<vmem>>, vector<64x384xf32>,
    %cst_13 = arith.constant 0.000000e+00 : f32
    %57 = vector.broadcast %cst_13 : f32 to vector<8x128xf32>
    %c0_14 = arith.constant 0 : index
    %c0_15 = arith.constant 0 : index
    %58 = vector.load %arg4[%c0_14, %c0_15] : memref<128x384xbf16, #tpu.memory_space<vmem>>, vector<128x384xbf16>
    %c0_16 = arith.constant 0 : index
    %c0_17 = arith.constant 0 : index
    %59 = vector.load %arg6[%c0_16, %c0_17] : memref<1x128xf32, #tpu.memory_space<vmem>>, vector<1x128xf32>
    %60 = vector.shape_cast %59 : vector<1x128xf32> to vector<1x128xf32>
    %61 = vector.broadcast %60 : vector<1x128xf32> to vector<8x128xf32>
    %c0_18 = arith.constant 0 : index
    %c0_19 = arith.constant 0 : index
    %62 = vector.load %arg17[%c0_18, %c0_19] : memref<64x384xf32, #tpu.memory_space<vmem>>, vector<8x384xf32>
    %63 = arith.truncf %57 : vector<8x128xf32> to vector<8x128xbf16>
    %cst_20 = arith.constant dense<0.000000e+00> : vector<8x384xf32>
    %64 = tpu.matmul %63, %58, %cst_20 {dimension_numbers = #tpu.dot_dimension_numbers<[1], [0], [0], [1], [0, 0, 1, 1], [], []>} : vector<8x128xbf16>, vector<128x384xbf16>, vector<8x384xf32> -> vector<8x384xf32>
    %65 = vector.extract_strided_slice %62 {offsets = [0, 0], sizes = [8, 256], strides = [1, 1]} : vector<8x384xf32> to vector<8x256xf32>
    %66 = vector.extract_strided_slice %64 {offsets = [0, 0], sizes = [8, 256], strides = [1, 1]} : vector<8x384xf32> to vector<8x256xf32>
    %67 = arith.addf %65, %66 : vector<8x256xf32>
    %68 = arith.negf %67 : vector<8x256xf32>
    %69 = math.exp %68 : vector<8x256xf32>
    %cst_21 = arith.constant 1.000000e+00 : f32
    %70 = vector.broadcast %cst_21 : f32 to vector<8x256xf32>
    %71 = arith.addf %70, %69 : vector<8x256xf32>
    %72 = arith.divf %70, %71 : vector<8x256xf32>
    %73 = vector.extract_strided_slice %72 {offsets = [0, 0], sizes = [8, 128], strides = [1, 1]} : vector<8x256xf32> to vector<8x128xf32>
    %74 = vector.extract_strided_slice %72 {offsets = [0, 128], sizes = [8, 128], strides = [1, 1]} : vector<8x256xf32> to vector<8x128xf32>
    %75 = vector.extract_strided_slice %62 {offsets = [0, 256], sizes = [8, 128], strides = [1, 1]} : vector<8x384xf32> to vector<8x128xf32>
    %76 = vector.extract_strided_slice %64 {offsets = [0, 256], sizes = [8, 128], strides = [1, 1]} : vector<8x384xf32> to vector<8x128xf32>
    %77 = arith.addf %76, %61 : vector<8x128xf32>
    %78 = arith.mulf %73, %77 : vector<8x128xf32>
    %79 = arith.addf %75, %78 : vector<8x128xf32>
    %80 = math.tanh %79 : vector<8x128xf32>
    %cst_22 = arith.constant 1.000000e+00 : f32
    %81 = vector.broadcast %cst_22 : f32 to vector<8x128xf32>
    %82 = arith.subf %81, %74 : vector<8x128xf32>
    %83 = arith.mulf %82, %80 : vector<8x128xf32>
    %84 = arith.mulf %74, %57 : vector<8x128xf32>
    %85 = arith.addf %83, %84 : vector<8x128xf32>
    %c0_23 = arith.constant 0 : index
    %c0_24 = arith.constant 0 : index
    %86 = vector.load %arg19[%c0_23, %c0_24] : memref<64x1xf32, #tpu.memory_space<vmem>>, vector<8x1xf32>
    %87 = vector.broadcast %86 : vector<8x1xf32> to vector<8x128xf32>
    %88 = arith.mulf %87, %85 : vector<8x128xf32>
    %cst_25 = arith.constant 1.000000e+00 : f32
    %89 = vector.broadcast %cst_25 : f32 to vector<8x1xf32>
    %90 = arith.subf %89, %86 : vector<8x1xf32>
    %91 = vector.broadcast %90 : vector<8x1xf32> to vector<8x128xf32>
    %92 = arith.mulf %91, %57 : vector<8x128xf32>
    %93 = arith.addf %88, %92 : vector<8x128xf32>
    %c0_26 = arith.constant 0 : index
    %c0_27 = arith.constant 0 : index
    %94 = vector.load %arg15[%c0_26, %c0_27] : memref<64x128xf32, #tpu.memory_space<vmem>>, vector<8x128xf32>
    tpu.vector_store %arg15[%c0_26, %c0_27], %93 {strides = array<i32>} : memref<64x128xf32, #tpu.memory_space<vmem>>, vector<8x128xf32>,
    %c8 = arith.constant 8 : index
    %c0_28 = arith.constant 0 : index
    %95 = vector.load %arg17[%c8, %c0_28] : memref<64x384xf32, #tpu.memory_space<vmem>>, vector<8x384xf32>
    %96 = arith.truncf %93 : vector<8x128xf32> to vector<8x128xbf16>
    %cst_29 = arith.constant dense<0.000000e+00> : vector<8x384xf32>
    %97 = tpu.matmul %96, %58, %cst_29 {dimension_numbers = #tpu.dot_dimension_numbers<[1], [0], [0], [1], [0, 0, 1, 1], [], []>} : vector<8x128xbf16>, vector<128x384xbf16>, vector<8x384xf32> -> vector<8x384xf32>
    %98 = vector.extract_strided_slice %95 {offsets = [0, 0], sizes = [8, 256], strides = [1, 1]} : vector<8x384xf32> to vector<8x256xf32>
    %99 = vector.extract_strided_slice %97 {offsets = [0, 0], sizes = [8, 256], strides = [1, 1]} : vector<8x384xf32> to vector<8x256xf32>
    %100 = arith.addf %98, %99 : vector<8x256xf32>
    %101 = arith.negf %100 : vector<8x256xf32>
    %102 = math.exp %101 : vector<8x256xf32>
    %cst_30 = arith.constant 1.000000e+00 : f32
    %103 = vector.broadcast %cst_30 : f32 to vector<8x256xf32>
    %104 = arith.addf %103, %102 : vector<8x256xf32>
    %105 = arith.divf %103, %104 : vector<8x256xf32>
    %106 = vector.extract_strided_slice %105 {offsets = [0, 0], sizes = [8, 128], strides = [1, 1]} : vector<8x256xf32> to vector<8x128xf32>
    %107 = vector.extract_strided_slice %105 {offsets = [0, 128], sizes = [8, 128], strides = [1, 1]} : vector<8x256xf32> to vector<8x128xf32>
    %108 = vector.extract_strided_slice %95 {offsets = [0, 256], sizes = [8, 128], strides = [1, 1]} : vector<8x384xf32> to vector<8x128xf32>
    %109 = vector.extract_strided_slice %97 {offsets = [0, 256], sizes = [8, 128], strides = [1, 1]} : vector<8x384xf32> to vector<8x128xf32>
    %110 = arith.addf %109, %61 : vector<8x128xf32>
    %111 = arith.mulf %106, %110 : vector<8x128xf32>
    %112 = arith.addf %108, %111 : vector<8x128xf32>
    %113 = math.tanh %112 : vector<8x128xf32>
    %cst_31 = arith.constant 1.000000e+00 : f32
    %114 = vector.broadcast %cst_31 : f32 to vector<8x128xf32>
    %115 = arith.subf %114, %107 : vector<8x128xf32>
    %116 = arith.mulf %115, %113 : vector<8x128xf32>
    %117 = arith.mulf %107, %93 : vector<8x128xf32>
    %118 = arith.addf %116, %117 : vector<8x128xf32>
    %c8_32 = arith.constant 8 : index
    %c0_33 = arith.constant 0 : index
    %119 = vector.load %arg19[%c8_32, %c0_33] : memref<64x1xf32, #tpu.memory_space<vmem>>, vector<8x1xf32>
    %120 = vector.broadcast %119 : vector<8x1xf32> to vector<8x128xf32>
    %121 = arith.mulf %120, %118 : vector<8x128xf32>
    %cst_34 = arith.constant 1.000000e+00 : f32
    %122 = vector.broadcast %cst_34 : f32 to vector<8x1xf32>
    %123 = arith.subf %122, %119 : vector<8x1xf32>
    %124 = vector.broadcast %123 : vector<8x1xf32> to vector<8x128xf32>
    %125 = arith.mulf %124, %93 : vector<8x128xf32>
    %126 = arith.addf %121, %125 : vector<8x128xf32>
    %c8_35 = arith.constant 8 : index
    %c0_36 = arith.constant 0 : index
    %127 = vector.load %arg15[%c8_35, %c0_36] : memref<64x128xf32, #tpu.memory_space<vmem>>, vector<8x128xf32>
    tpu.vector_store %arg15[%c8_35, %c0_36], %126 {strides = array<i32>} : memref<64x128xf32, #tpu.memory_space<vmem>>, vector<8x128xf32>,
    %c16 = arith.constant 16 : index
    %c0_37 = arith.constant 0 : index
    %128 = vector.load %arg17[%c16, %c0_37] : memref<64x384xf32, #tpu.memory_space<vmem>>, vector<8x384xf32>
    %129 = arith.truncf %126 : vector<8x128xf32> to vector<8x128xbf16>
    %cst_38 = arith.constant dense<0.000000e+00> : vector<8x384xf32>
    %130 = tpu.matmul %129, %58, %cst_38 {dimension_numbers = #tpu.dot_dimension_numbers<[1], [0], [0], [1], [0, 0, 1, 1], [], []>} : vector<8x128xbf16>, vector<128x384xbf16>, vector<8x384xf32> -> vector<8x384xf32>
    %131 = vector.extract_strided_slice %128 {offsets = [0, 0], sizes = [8, 256], strides = [1, 1]} : vector<8x384xf32> to vector<8x256xf32>
    %132 = vector.extract_strided_slice %130 {offsets = [0, 0], sizes = [8, 256], strides = [1, 1]} : vector<8x384xf32> to vector<8x256xf32>
    %133 = arith.addf %131, %132 : vector<8x256xf32>
    %134 = arith.negf %133 : vector<8x256xf32>
    %135 = math.exp %134 : vector<8x256xf32>
    %cst_39 = arith.constant 1.000000e+00 : f32
    %136 = vector.broadcast %cst_39 : f32 to vector<8x256xf32>
    %137 = arith.addf %136, %135 : vector<8x256xf32>
    %138 = arith.divf %136, %137 : vector<8x256xf32>
    %139 = vector.extract_strided_slice %138 {offsets = [0, 0], sizes = [8, 128], strides = [1, 1]} : vector<8x256xf32> to vector<8x128xf32>
    %140 = vector.extract_strided_slice %138 {offsets = [0, 128], sizes = [8, 128], strides = [1, 1]} : vector<8x256xf32> to vector<8x128xf32>
    %141 = vector.extract_strided_slice %128 {offsets = [0, 256], sizes = [8, 128], strides = [1, 1]} : vector<8x384xf32> to vector<8x128xf32>
    %142 = vector.extract_strided_slice %130 {offsets = [0, 256], sizes = [8, 128], strides = [1, 1]} : vector<8x384xf32> to vector<8x128xf32>
    %143 = arith.addf %142, %61 : vector<8x128xf32>
    %144 = arith.mulf %139, %143 : vector<8x128xf32>
    %145 = arith.addf %141, %144 : vector<8x128xf32>
    %146 = math.tanh %145 : vector<8x128xf32>
    %cst_40 = arith.constant 1.000000e+00 : f32
    %147 = vector.broadcast %cst_40 : f32 to vector<8x128xf32>
    %148 = arith.subf %147, %140 : vector<8x128xf32>
    %149 = arith.mulf %148, %146 : vector<8x128xf32>
    %150 = arith.mulf %140, %126 : vector<8x128xf32>
    %151 = arith.addf %149, %150 : vector<8x128xf32>
    %c16_41 = arith.constant 16 : index
    %c0_42 = arith.constant 0 : index
    %152 = vector.load %arg19[%c16_41, %c0_42] : memref<64x1xf32, #tpu.memory_space<vmem>>, vector<8x1xf32>
    %153 = vector.broadcast %152 : vector<8x1xf32> to vector<8x128xf32>
    %154 = arith.mulf %153, %151 : vector<8x128xf32>
    %cst_43 = arith.constant 1.000000e+00 : f32
    %155 = vector.broadcast %cst_43 : f32 to vector<8x1xf32>
    %156 = arith.subf %155, %152 : vector<8x1xf32>
    %157 = vector.broadcast %156 : vector<8x1xf32> to vector<8x128xf32>
    %158 = arith.mulf %157, %126 : vector<8x128xf32>
    %159 = arith.addf %154, %158 : vector<8x128xf32>
    %c16_44 = arith.constant 16 : index
    %c0_45 = arith.constant 0 : index
    %160 = vector.load %arg15[%c16_44, %c0_45] : memref<64x128xf32, #tpu.memory_space<vmem>>, vector<8x128xf32>
    tpu.vector_store %arg15[%c16_44, %c0_45], %159 {strides = array<i32>} : memref<64x128xf32, #tpu.memory_space<vmem>>, vector<8x128xf32>,
    %c24 = arith.constant 24 : index
    %c0_46 = arith.constant 0 : index
    %161 = vector.load %arg17[%c24, %c0_46] : memref<64x384xf32, #tpu.memory_space<vmem>>, vector<8x384xf32>
    %162 = arith.truncf %159 : vector<8x128xf32> to vector<8x128xbf16>
    %cst_47 = arith.constant dense<0.000000e+00> : vector<8x384xf32>
    %163 = tpu.matmul %162, %58, %cst_47 {dimension_numbers = #tpu.dot_dimension_numbers<[1], [0], [0], [1], [0, 0, 1, 1], [], []>} : vector<8x128xbf16>, vector<128x384xbf16>, vector<8x384xf32> -> vector<8x384xf32>
    %164 = vector.extract_strided_slice %161 {offsets = [0, 0], sizes = [8, 256], strides = [1, 1]} : vector<8x384xf32> to vector<8x256xf32>
    %165 = vector.extract_strided_slice %163 {offsets = [0, 0], sizes = [8, 256], strides = [1, 1]} : vector<8x384xf32> to vector<8x256xf32>
    %166 = arith.addf %164, %165 : vector<8x256xf32>
    %167 = arith.negf %166 : vector<8x256xf32>
    %168 = math.exp %167 : vector<8x256xf32>
    %cst_48 = arith.constant 1.000000e+00 : f32
    %169 = vector.broadcast %cst_48 : f32 to vector<8x256xf32>
    %170 = arith.addf %169, %168 : vector<8x256xf32>
    %171 = arith.divf %169, %170 : vector<8x256xf32>
    %172 = vector.extract_strided_slice %171 {offsets = [0, 0], sizes = [8, 128], strides = [1, 1]} : vector<8x256xf32> to vector<8x128xf32>
    %173 = vector.extract_strided_slice %171 {offsets = [0, 128], sizes = [8, 128], strides = [1, 1]} : vector<8x256xf32> to vector<8x128xf32>
    %174 = vector.extract_strided_slice %161 {offsets = [0, 256], sizes = [8, 128], strides = [1, 1]} : vector<8x384xf32> to vector<8x128xf32>
    %175 = vector.extract_strided_slice %163 {offsets = [0, 256], sizes = [8, 128], strides = [1, 1]} : vector<8x384xf32> to vector<8x128xf32>
    %176 = arith.addf %175, %61 : vector<8x128xf32>
    %177 = arith.mulf %172, %176 : vector<8x128xf32>
    %178 = arith.addf %174, %177 : vector<8x128xf32>
    %179 = math.tanh %178 : vector<8x128xf32>
    %cst_49 = arith.constant 1.000000e+00 : f32
    %180 = vector.broadcast %cst_49 : f32 to vector<8x128xf32>
    %181 = arith.subf %180, %173 : vector<8x128xf32>
    %182 = arith.mulf %181, %179 : vector<8x128xf32>
    %183 = arith.mulf %173, %159 : vector<8x128xf32>
    %184 = arith.addf %182, %183 : vector<8x128xf32>
    %c24_50 = arith.constant 24 : index
    %c0_51 = arith.constant 0 : index
    %185 = vector.load %arg19[%c24_50, %c0_51] : memref<64x1xf32, #tpu.memory_space<vmem>>, vector<8x1xf32>
    %186 = vector.broadcast %185 : vector<8x1xf32> to vector<8x128xf32>
    %187 = arith.mulf %186, %184 : vector<8x128xf32>
    %cst_52 = arith.constant 1.000000e+00 : f32
    %188 = vector.broadcast %cst_52 : f32 to vector<8x1xf32>
    %189 = arith.subf %188, %185 : vector<8x1xf32>
    %190 = vector.broadcast %189 : vector<8x1xf32> to vector<8x128xf32>
    %191 = arith.mulf %190, %159 : vector<8x128xf32>
    %192 = arith.addf %187, %191 : vector<8x128xf32>
    %c24_53 = arith.constant 24 : index
    %c0_54 = arith.constant 0 : index
    %193 = vector.load %arg15[%c24_53, %c0_54] : memref<64x128xf32, #tpu.memory_space<vmem>>, vector<8x128xf32>
    tpu.vector_store %arg15[%c24_53, %c0_54], %192 {strides = array<i32>} : memref<64x128xf32, #tpu.memory_space<vmem>>, vector<8x128xf32>,
    %c32 = arith.constant 32 : index
    %c0_55 = arith.constant 0 : index
    %194 = vector.load %arg17[%c32, %c0_55] : memref<64x384xf32, #tpu.memory_space<vmem>>, vector<8x384xf32>
    %195 = arith.truncf %192 : vector<8x128xf32> to vector<8x128xbf16>
    %cst_56 = arith.constant dense<0.000000e+00> : vector<8x384xf32>
    %196 = tpu.matmul %195, %58, %cst_56 {dimension_numbers = #tpu.dot_dimension_numbers<[1], [0], [0], [1], [0, 0, 1, 1], [], []>} : vector<8x128xbf16>, vector<128x384xbf16>, vector<8x384xf32> -> vector<8x384xf32>
    %197 = vector.extract_strided_slice %194 {offsets = [0, 0], sizes = [8, 256], strides = [1, 1]} : vector<8x384xf32> to vector<8x256xf32>
    %198 = vector.extract_strided_slice %196 {offsets = [0, 0], sizes = [8, 256], strides = [1, 1]} : vector<8x384xf32> to vector<8x256xf32>
    %199 = arith.addf %197, %198 : vector<8x256xf32>
    %200 = arith.negf %199 : vector<8x256xf32>
    %201 = math.exp %200 : vector<8x256xf32>
    %cst_57 = arith.constant 1.000000e+00 : f32
    %202 = vector.broadcast %cst_57 : f32 to vector<8x256xf32>
    %203 = arith.addf %202, %201 : vector<8x256xf32>
    %204 = arith.divf %202, %203 : vector<8x256xf32>
    %205 = vector.extract_strided_slice %204 {offsets = [0, 0], sizes = [8, 128], strides = [1, 1]} : vector<8x256xf32> to vector<8x128xf32>
    %206 = vector.extract_strided_slice %204 {offsets = [0, 128], sizes = [8, 128], strides = [1, 1]} : vector<8x256xf32> to vector<8x128xf32>
    %207 = vector.extract_strided_slice %194 {offsets = [0, 256], sizes = [8, 128], strides = [1, 1]} : vector<8x384xf32> to vector<8x128xf32>
    %208 = vector.extract_strided_slice %196 {offsets = [0, 256], sizes = [8, 128], strides = [1, 1]} : vector<8x384xf32> to vector<8x128xf32>
    %209 = arith.addf %208, %61 : vector<8x128xf32>
    %210 = arith.mulf %205, %209 : vector<8x128xf32>
    %211 = arith.addf %207, %210 : vector<8x128xf32>
    %212 = math.tanh %211 : vector<8x128xf32>
    %cst_58 = arith.constant 1.000000e+00 : f32
    %213 = vector.broadcast %cst_58 : f32 to vector<8x128xf32>
    %214 = arith.subf %213, %206 : vector<8x128xf32>
    %215 = arith.mulf %214, %212 : vector<8x128xf32>
    %216 = arith.mulf %206, %192 : vector<8x128xf32>
    %217 = arith.addf %215, %216 : vector<8x128xf32>
    %c32_59 = arith.constant 32 : index
    %c0_60 = arith.constant 0 : index
    %218 = vector.load %arg19[%c32_59, %c0_60] : memref<64x1xf32, #tpu.memory_space<vmem>>, vector<8x1xf32>
    %219 = vector.broadcast %218 : vector<8x1xf32> to vector<8x128xf32>
    %220 = arith.mulf %219, %217 : vector<8x128xf32>
    %cst_61 = arith.constant 1.000000e+00 : f32
    %221 = vector.broadcast %cst_61 : f32 to vector<8x1xf32>
    %222 = arith.subf %221, %218 : vector<8x1xf32>
    %223 = vector.broadcast %222 : vector<8x1xf32> to vector<8x128xf32>
    %224 = arith.mulf %223, %192 : vector<8x128xf32>
    %225 = arith.addf %220, %224 : vector<8x128xf32>
    %c32_62 = arith.constant 32 : index
    %c0_63 = arith.constant 0 : index
    %226 = vector.load %arg15[%c32_62, %c0_63] : memref<64x128xf32, #tpu.memory_space<vmem>>, vector<8x128xf32>
    tpu.vector_store %arg15[%c32_62, %c0_63], %225 {strides = array<i32>} : memref<64x128xf32, #tpu.memory_space<vmem>>, vector<8x128xf32>,
    %c40 = arith.constant 40 : index
    %c0_64 = arith.constant 0 : index
    %227 = vector.load %arg17[%c40, %c0_64] : memref<64x384xf32, #tpu.memory_space<vmem>>, vector<8x384xf32>
    %228 = arith.truncf %225 : vector<8x128xf32> to vector<8x128xbf16>
    %cst_65 = arith.constant dense<0.000000e+00> : vector<8x384xf32>
    %229 = tpu.matmul %228, %58, %cst_65 {dimension_numbers = #tpu.dot_dimension_numbers<[1], [0], [0], [1], [0, 0, 1, 1], [], []>} : vector<8x128xbf16>, vector<128x384xbf16>, vector<8x384xf32> -> vector<8x384xf32>
    %230 = vector.extract_strided_slice %227 {offsets = [0, 0], sizes = [8, 256], strides = [1, 1]} : vector<8x384xf32> to vector<8x256xf32>
    %231 = vector.extract_strided_slice %229 {offsets = [0, 0], sizes = [8, 256], strides = [1, 1]} : vector<8x384xf32> to vector<8x256xf32>
    %232 = arith.addf %230, %231 : vector<8x256xf32>
    %233 = arith.negf %232 : vector<8x256xf32>
    %234 = math.exp %233 : vector<8x256xf32>
    %cst_66 = arith.constant 1.000000e+00 : f32
    %235 = vector.broadcast %cst_66 : f32 to vector<8x256xf32>
    %236 = arith.addf %235, %234 : vector<8x256xf32>
    %237 = arith.divf %235, %236 : vector<8x256xf32>
    %238 = vector.extract_strided_slice %237 {offsets = [0, 0], sizes = [8, 128], strides = [1, 1]} : vector<8x256xf32> to vector<8x128xf32>
    %239 = vector.extract_strided_slice %237 {offsets = [0, 128], sizes = [8, 128], strides = [1, 1]} : vector<8x256xf32> to vector<8x128xf32>
    %240 = vector.extract_strided_slice %227 {offsets = [0, 256], sizes = [8, 128], strides = [1, 1]} : vector<8x384xf32> to vector<8x128xf32>
    %241 = vector.extract_strided_slice %229 {offsets = [0, 256], sizes = [8, 128], strides = [1, 1]} : vector<8x384xf32> to vector<8x128xf32>
    %242 = arith.addf %241, %61 : vector<8x128xf32>
    %243 = arith.mulf %238, %242 : vector<8x128xf32>
    %244 = arith.addf %240, %243 : vector<8x128xf32>
    %245 = math.tanh %244 : vector<8x128xf32>
    %cst_67 = arith.constant 1.000000e+00 : f32
    %246 = vector.broadcast %cst_67 : f32 to vector<8x128xf32>
    %247 = arith.subf %246, %239 : vector<8x128xf32>
    %248 = arith.mulf %247, %245 : vector<8x128xf32>
    %249 = arith.mulf %239, %225 : vector<8x128xf32>
    %250 = arith.addf %248, %249 : vector<8x128xf32>
    %c40_68 = arith.constant 40 : index
    %c0_69 = arith.constant 0 : index
    %251 = vector.load %arg19[%c40_68, %c0_69] : memref<64x1xf32, #tpu.memory_space<vmem>>, vector<8x1xf32>
    %252 = vector.broadcast %251 : vector<8x1xf32> to vector<8x128xf32>
    %253 = arith.mulf %252, %250 : vector<8x128xf32>
    %cst_70 = arith.constant 1.000000e+00 : f32
    %254 = vector.broadcast %cst_70 : f32 to vector<8x1xf32>
    %255 = arith.subf %254, %251 : vector<8x1xf32>
    %256 = vector.broadcast %255 : vector<8x1xf32> to vector<8x128xf32>
    %257 = arith.mulf %256, %225 : vector<8x128xf32>
    %258 = arith.addf %253, %257 : vector<8x128xf32>
    %c40_71 = arith.constant 40 : index
    %c0_72 = arith.constant 0 : index
    %259 = vector.load %arg15[%c40_71, %c0_72] : memref<64x128xf32, #tpu.memory_space<vmem>>, vector<8x128xf32>
    tpu.vector_store %arg15[%c40_71, %c0_72], %258 {strides = array<i32>} : memref<64x128xf32, #tpu.memory_space<vmem>>, vector<8x128xf32>,
    %c48 = arith.constant 48 : index
    %c0_73 = arith.constant 0 : index
    %260 = vector.load %arg17[%c48, %c0_73] : memref<64x384xf32, #tpu.memory_space<vmem>>, vector<8x384xf32>
    %261 = arith.truncf %258 : vector<8x128xf32> to vector<8x128xbf16>
    %cst_74 = arith.constant dense<0.000000e+00> : vector<8x384xf32>
    %262 = tpu.matmul %261, %58, %cst_74 {dimension_numbers = #tpu.dot_dimension_numbers<[1], [0], [0], [1], [0, 0, 1, 1], [], []>} : vector<8x128xbf16>, vector<128x384xbf16>, vector<8x384xf32> -> vector<8x384xf32>
    %263 = vector.extract_strided_slice %260 {offsets = [0, 0], sizes = [8, 256], strides = [1, 1]} : vector<8x384xf32> to vector<8x256xf32>
    %264 = vector.extract_strided_slice %262 {offsets = [0, 0], sizes = [8, 256], strides = [1, 1]} : vector<8x384xf32> to vector<8x256xf32>
    %265 = arith.addf %263, %264 : vector<8x256xf32>
    %266 = arith.negf %265 : vector<8x256xf32>
    %267 = math.exp %266 : vector<8x256xf32>
    %cst_75 = arith.constant 1.000000e+00 : f32
    %268 = vector.broadcast %cst_75 : f32 to vector<8x256xf32>
    %269 = arith.addf %268, %267 : vector<8x256xf32>
    %270 = arith.divf %268, %269 : vector<8x256xf32>
    %271 = vector.extract_strided_slice %270 {offsets = [0, 0], sizes = [8, 128], strides = [1, 1]} : vector<8x256xf32> to vector<8x128xf32>
    %272 = vector.extract_strided_slice %270 {offsets = [0, 128], sizes = [8, 128], strides = [1, 1]} : vector<8x256xf32> to vector<8x128xf32>
    %273 = vector.extract_strided_slice %260 {offsets = [0, 256], sizes = [8, 128], strides = [1, 1]} : vector<8x384xf32> to vector<8x128xf32>
    %274 = vector.extract_strided_slice %262 {offsets = [0, 256], sizes = [8, 128], strides = [1, 1]} : vector<8x384xf32> to vector<8x128xf32>
    %275 = arith.addf %274, %61 : vector<8x128xf32>
    %276 = arith.mulf %271, %275 : vector<8x128xf32>
    %277 = arith.addf %273, %276 : vector<8x128xf32>
    %278 = math.tanh %277 : vector<8x128xf32>
    %cst_76 = arith.constant 1.000000e+00 : f32
    %279 = vector.broadcast %cst_76 : f32 to vector<8x128xf32>
    %280 = arith.subf %279, %272 : vector<8x128xf32>
    %281 = arith.mulf %280, %278 : vector<8x128xf32>
    %282 = arith.mulf %272, %258 : vector<8x128xf32>
    %283 = arith.addf %281, %282 : vector<8x128xf32>
    %c48_77 = arith.constant 48 : index
    %c0_78 = arith.constant 0 : index
    %284 = vector.load %arg19[%c48_77, %c0_78] : memref<64x1xf32, #tpu.memory_space<vmem>>, vector<8x1xf32>
    %285 = vector.broadcast %284 : vector<8x1xf32> to vector<8x128xf32>
    %286 = arith.mulf %285, %283 : vector<8x128xf32>
    %cst_79 = arith.constant 1.000000e+00 : f32
    %287 = vector.broadcast %cst_79 : f32 to vector<8x1xf32>
    %288 = arith.subf %287, %284 : vector<8x1xf32>
    %289 = vector.broadcast %288 : vector<8x1xf32> to vector<8x128xf32>
    %290 = arith.mulf %289, %258 : vector<8x128xf32>
    %291 = arith.addf %286, %290 : vector<8x128xf32>
    %c48_80 = arith.constant 48 : index
    %c0_81 = arith.constant 0 : index
    %292 = vector.load %arg15[%c48_80, %c0_81] : memref<64x128xf32, #tpu.memory_space<vmem>>, vector<8x128xf32>
    tpu.vector_store %arg15[%c48_80, %c0_81], %291 {strides = array<i32>} : memref<64x128xf32, #tpu.memory_space<vmem>>, vector<8x128xf32>,
    %c56 = arith.constant 56 : index
    %c0_82 = arith.constant 0 : index
    %293 = vector.load %arg17[%c56, %c0_82] : memref<64x384xf32, #tpu.memory_space<vmem>>, vector<8x384xf32>
    %294 = arith.truncf %291 : vector<8x128xf32> to vector<8x128xbf16>
    %cst_83 = arith.constant dense<0.000000e+00> : vector<8x384xf32>
    %295 = tpu.matmul %294, %58, %cst_83 {dimension_numbers = #tpu.dot_dimension_numbers<[1], [0], [0], [1], [0, 0, 1, 1], [], []>} : vector<8x128xbf16>, vector<128x384xbf16>, vector<8x384xf32> -> vector<8x384xf32>
    %296 = vector.extract_strided_slice %293 {offsets = [0, 0], sizes = [8, 256], strides = [1, 1]} : vector<8x384xf32> to vector<8x256xf32>
    %297 = vector.extract_strided_slice %295 {offsets = [0, 0], sizes = [8, 256], strides = [1, 1]} : vector<8x384xf32> to vector<8x256xf32>
    %298 = arith.addf %296, %297 : vector<8x256xf32>
    %299 = arith.negf %298 : vector<8x256xf32>
    %300 = math.exp %299 : vector<8x256xf32>
    %cst_84 = arith.constant 1.000000e+00 : f32
    %301 = vector.broadcast %cst_84 : f32 to vector<8x256xf32>
    %302 = arith.addf %301, %300 : vector<8x256xf32>
    %303 = arith.divf %301, %302 : vector<8x256xf32>
    %304 = vector.extract_strided_slice %303 {offsets = [0, 0], sizes = [8, 128], strides = [1, 1]} : vector<8x256xf32> to vector<8x128xf32>
    %305 = vector.extract_strided_slice %303 {offsets = [0, 128], sizes = [8, 128], strides = [1, 1]} : vector<8x256xf32> to vector<8x128xf32>
    %306 = vector.extract_strided_slice %293 {offsets = [0, 256], sizes = [8, 128], strides = [1, 1]} : vector<8x384xf32> to vector<8x128xf32>
    %307 = vector.extract_strided_slice %295 {offsets = [0, 256], sizes = [8, 128], strides = [1, 1]} : vector<8x384xf32> to vector<8x128xf32>
    %308 = arith.addf %307, %61 : vector<8x128xf32>
    %309 = arith.mulf %304, %308 : vector<8x128xf32>
    %310 = arith.addf %306, %309 : vector<8x128xf32>
    %311 = math.tanh %310 : vector<8x128xf32>
    %cst_85 = arith.constant 1.000000e+00 : f32
    %312 = vector.broadcast %cst_85 : f32 to vector<8x128xf32>
    %313 = arith.subf %312, %305 : vector<8x128xf32>
    %314 = arith.mulf %313, %311 : vector<8x128xf32>
    %315 = arith.mulf %305, %291 : vector<8x128xf32>
    %316 = arith.addf %314, %315 : vector<8x128xf32>
    %c56_86 = arith.constant 56 : index
    %c0_87 = arith.constant 0 : index
    %317 = vector.load %arg19[%c56_86, %c0_87] : memref<64x1xf32, #tpu.memory_space<vmem>>, vector<8x1xf32>
    %318 = vector.broadcast %317 : vector<8x1xf32> to vector<8x128xf32>
    %319 = arith.mulf %318, %316 : vector<8x128xf32>
    %cst_88 = arith.constant 1.000000e+00 : f32
    %320 = vector.broadcast %cst_88 : f32 to vector<8x1xf32>
    %321 = arith.subf %320, %317 : vector<8x1xf32>
    %322 = vector.broadcast %321 : vector<8x1xf32> to vector<8x128xf32>
    %323 = arith.mulf %322, %291 : vector<8x128xf32>
    %324 = arith.addf %319, %323 : vector<8x128xf32>
    %c56_89 = arith.constant 56 : index
    %c0_90 = arith.constant 0 : index
    %325 = vector.load %arg15[%c56_89, %c0_90] : memref<64x128xf32, #tpu.memory_space<vmem>>, vector<8x128xf32>
    tpu.vector_store %arg15[%c56_89, %c0_90], %324 {strides = array<i32>} : memref<64x128xf32, #tpu.memory_space<vmem>>, vector<8x128xf32>,
    %c0_91 = arith.constant 0 : index
    %c0_92 = arith.constant 0 : index
    %326 = vector.load %arg2[%c0_91, %c0_92] : memref<64x128xbf16, #tpu.memory_space<vmem>>, vector<64x128xbf16>
    %c0_93 = arith.constant 0 : index
    %c0_94 = arith.constant 0 : index
    %327 = vector.load %arg7[%c0_93, %c0_94] : memref<128x384xbf16, #tpu.memory_space<vmem>>, vector<128x384xbf16>
    %cst_95 = arith.constant dense<0.000000e+00> : vector<64x384xf32>
    %328 = tpu.matmul %326, %327, %cst_95 {dimension_numbers = #tpu.dot_dimension_numbers<[1], [0], [0], [1], [0, 0, 1, 1], [], []>} : vector<64x128xbf16>, vector<128x384xbf16>, vector<64x384xf32> -> vector<64x384xf32>
    %c0_96 = arith.constant 0 : index
    %c0_97 = arith.constant 0 : index
    %329 = vector.load %arg9[%c0_96, %c0_97] : memref<1x384xf32, #tpu.memory_space<vmem>>, vector<1x384xf32>
    %330 = vector.broadcast %329 : vector<1x384xf32> to vector<64x384xf32>
    %331 = arith.addf %328, %330 : vector<64x384xf32>
    %c0_98 = arith.constant 0 : index
    %c0_99 = arith.constant 0 : index
    %332 = vector.load %arg18[%c0_98, %c0_99] : memref<64x384xf32, #tpu.memory_space<vmem>>, vector<64x384xf32>
    tpu.vector_store %arg18[%c0_98, %c0_99], %331 {strides = array<i32>} : memref<64x384xf32, #tpu.memory_space<vmem>>, vector<64x384xf32>,
    %c0_100 = arith.constant 0 : index
    %c0_101 = arith.constant 0 : index
    %333 = vector.load %arg8[%c0_100, %c0_101] : memref<128x384xbf16, #tpu.memory_space<vmem>>, vector<128x384xbf16>
    %c0_102 = arith.constant 0 : index
    %c0_103 = arith.constant 0 : index
    %334 = vector.load %arg10[%c0_102, %c0_103] : memref<1x128xf32, #tpu.memory_space<vmem>>, vector<1x128xf32>
    %335 = vector.shape_cast %334 : vector<1x128xf32> to vector<1x128xf32>
    %336 = vector.broadcast %335 : vector<1x128xf32> to vector<8x128xf32>
    %c0_104 = arith.constant 0 : index
    %c0_105 = arith.constant 0 : index
    %337 = vector.load %arg18[%c0_104, %c0_105] : memref<64x384xf32, #tpu.memory_space<vmem>>, vector<8x384xf32>
    %338 = arith.truncf %324 : vector<8x128xf32> to vector<8x128xbf16>
    %cst_106 = arith.constant dense<0.000000e+00> : vector<8x384xf32>
    %339 = tpu.matmul %338, %333, %cst_106 {dimension_numbers = #tpu.dot_dimension_numbers<[1], [0], [0], [1], [0, 0, 1, 1], [], []>} : vector<8x128xbf16>, vector<128x384xbf16>, vector<8x384xf32> -> vector<8x384xf32>
    %340 = vector.extract_strided_slice %337 {offsets = [0, 0], sizes = [8, 256], strides = [1, 1]} : vector<8x384xf32> to vector<8x256xf32>
    %341 = vector.extract_strided_slice %339 {offsets = [0, 0], sizes = [8, 256], strides = [1, 1]} : vector<8x384xf32> to vector<8x256xf32>
    %342 = arith.addf %340, %341 : vector<8x256xf32>
    %343 = arith.negf %342 : vector<8x256xf32>
    %344 = math.exp %343 : vector<8x256xf32>
    %cst_107 = arith.constant 1.000000e+00 : f32
    %345 = vector.broadcast %cst_107 : f32 to vector<8x256xf32>
    %346 = arith.addf %345, %344 : vector<8x256xf32>
    %347 = arith.divf %345, %346 : vector<8x256xf32>
    %348 = vector.extract_strided_slice %347 {offsets = [0, 0], sizes = [8, 128], strides = [1, 1]} : vector<8x256xf32> to vector<8x128xf32>
    %349 = vector.extract_strided_slice %347 {offsets = [0, 128], sizes = [8, 128], strides = [1, 1]} : vector<8x256xf32> to vector<8x128xf32>
    %350 = vector.extract_strided_slice %337 {offsets = [0, 256], sizes = [8, 128], strides = [1, 1]} : vector<8x384xf32> to vector<8x128xf32>
    %351 = vector.extract_strided_slice %339 {offsets = [0, 256], sizes = [8, 128], strides = [1, 1]} : vector<8x384xf32> to vector<8x128xf32>
    %352 = arith.addf %351, %336 : vector<8x128xf32>
    %353 = arith.mulf %348, %352 : vector<8x128xf32>
    %354 = arith.addf %350, %353 : vector<8x128xf32>
    %355 = math.tanh %354 : vector<8x128xf32>
    %cst_108 = arith.constant 1.000000e+00 : f32
    %356 = vector.broadcast %cst_108 : f32 to vector<8x128xf32>
    %357 = arith.subf %356, %349 : vector<8x128xf32>
    %358 = arith.mulf %357, %355 : vector<8x128xf32>
    %359 = arith.mulf %349, %324 : vector<8x128xf32>
    %360 = arith.addf %358, %359 : vector<8x128xf32>
    %c0_109 = arith.constant 0 : index
    %c0_110 = arith.constant 0 : index
    %361 = vector.load %arg16[%c0_109, %c0_110] : memref<64x128xf32, #tpu.memory_space<vmem>>, vector<8x128xf32>
    tpu.vector_store %arg16[%c0_109, %c0_110], %360 {strides = array<i32>} : memref<64x128xf32, #tpu.memory_space<vmem>>, vector<8x128xf32>,
    %c8_111 = arith.constant 8 : index
    %c0_112 = arith.constant 0 : index
    %362 = vector.load %arg18[%c8_111, %c0_112] : memref<64x384xf32, #tpu.memory_space<vmem>>, vector<8x384xf32>
    %363 = arith.truncf %360 : vector<8x128xf32> to vector<8x128xbf16>
    %cst_113 = arith.constant dense<0.000000e+00> : vector<8x384xf32>
    %364 = tpu.matmul %363, %333, %cst_113 {dimension_numbers = #tpu.dot_dimension_numbers<[1], [0], [0], [1], [0, 0, 1, 1], [], []>} : vector<8x128xbf16>, vector<128x384xbf16>, vector<8x384xf32> -> vector<8x384xf32>
    %365 = vector.extract_strided_slice %362 {offsets = [0, 0], sizes = [8, 256], strides = [1, 1]} : vector<8x384xf32> to vector<8x256xf32>
    %366 = vector.extract_strided_slice %364 {offsets = [0, 0], sizes = [8, 256], strides = [1, 1]} : vector<8x384xf32> to vector<8x256xf32>
    %367 = arith.addf %365, %366 : vector<8x256xf32>
    %368 = arith.negf %367 : vector<8x256xf32>
    %369 = math.exp %368 : vector<8x256xf32>
    %cst_114 = arith.constant 1.000000e+00 : f32
    %370 = vector.broadcast %cst_114 : f32 to vector<8x256xf32>
    %371 = arith.addf %370, %369 : vector<8x256xf32>
    %372 = arith.divf %370, %371 : vector<8x256xf32>
    %373 = vector.extract_strided_slice %372 {offsets = [0, 0], sizes = [8, 128], strides = [1, 1]} : vector<8x256xf32> to vector<8x128xf32>
    %374 = vector.extract_strided_slice %372 {offsets = [0, 128], sizes = [8, 128], strides = [1, 1]} : vector<8x256xf32> to vector<8x128xf32>
    %375 = vector.extract_strided_slice %362 {offsets = [0, 256], sizes = [8, 128], strides = [1, 1]} : vector<8x384xf32> to vector<8x128xf32>
    %376 = vector.extract_strided_slice %364 {offsets = [0, 256], sizes = [8, 128], strides = [1, 1]} : vector<8x384xf32> to vector<8x128xf32>
    %377 = arith.addf %376, %336 : vector<8x128xf32>
    %378 = arith.mulf %373, %377 : vector<8x128xf32>
    %379 = arith.addf %375, %378 : vector<8x128xf32>
    %380 = math.tanh %379 : vector<8x128xf32>
    %cst_115 = arith.constant 1.000000e+00 : f32
    %381 = vector.broadcast %cst_115 : f32 to vector<8x128xf32>
    %382 = arith.subf %381, %374 : vector<8x128xf32>
    %383 = arith.mulf %382, %380 : vector<8x128xf32>
    %384 = arith.mulf %374, %360 : vector<8x128xf32>
    %385 = arith.addf %383, %384 : vector<8x128xf32>
    %c8_116 = arith.constant 8 : index
    %c0_117 = arith.constant 0 : index
    %386 = vector.load %arg16[%c8_116, %c0_117] : memref<64x128xf32, #tpu.memory_space<vmem>>, vector<8x128xf32>
    tpu.vector_store %arg16[%c8_116, %c0_117], %385 {strides = array<i32>} : memref<64x128xf32, #tpu.memory_space<vmem>>, vector<8x128xf32>,
    %c16_118 = arith.constant 16 : index
    %c0_119 = arith.constant 0 : index
    %387 = vector.load %arg18[%c16_118, %c0_119] : memref<64x384xf32, #tpu.memory_space<vmem>>, vector<8x384xf32>
    %388 = arith.truncf %385 : vector<8x128xf32> to vector<8x128xbf16>
    %cst_120 = arith.constant dense<0.000000e+00> : vector<8x384xf32>
    %389 = tpu.matmul %388, %333, %cst_120 {dimension_numbers = #tpu.dot_dimension_numbers<[1], [0], [0], [1], [0, 0, 1, 1], [], []>} : vector<8x128xbf16>, vector<128x384xbf16>, vector<8x384xf32> -> vector<8x384xf32>
    %390 = vector.extract_strided_slice %387 {offsets = [0, 0], sizes = [8, 256], strides = [1, 1]} : vector<8x384xf32> to vector<8x256xf32>
    %391 = vector.extract_strided_slice %389 {offsets = [0, 0], sizes = [8, 256], strides = [1, 1]} : vector<8x384xf32> to vector<8x256xf32>
    %392 = arith.addf %390, %391 : vector<8x256xf32>
    %393 = arith.negf %392 : vector<8x256xf32>
    %394 = math.exp %393 : vector<8x256xf32>
    %cst_121 = arith.constant 1.000000e+00 : f32
    %395 = vector.broadcast %cst_121 : f32 to vector<8x256xf32>
    %396 = arith.addf %395, %394 : vector<8x256xf32>
    %397 = arith.divf %395, %396 : vector<8x256xf32>
    %398 = vector.extract_strided_slice %397 {offsets = [0, 0], sizes = [8, 128], strides = [1, 1]} : vector<8x256xf32> to vector<8x128xf32>
    %399 = vector.extract_strided_slice %397 {offsets = [0, 128], sizes = [8, 128], strides = [1, 1]} : vector<8x256xf32> to vector<8x128xf32>
    %400 = vector.extract_strided_slice %387 {offsets = [0, 256], sizes = [8, 128], strides = [1, 1]} : vector<8x384xf32> to vector<8x128xf32>
    %401 = vector.extract_strided_slice %389 {offsets = [0, 256], sizes = [8, 128], strides = [1, 1]} : vector<8x384xf32> to vector<8x128xf32>
    %402 = arith.addf %401, %336 : vector<8x128xf32>
    %403 = arith.mulf %398, %402 : vector<8x128xf32>
    %404 = arith.addf %400, %403 : vector<8x128xf32>
    %405 = math.tanh %404 : vector<8x128xf32>
    %cst_122 = arith.constant 1.000000e+00 : f32
    %406 = vector.broadcast %cst_122 : f32 to vector<8x128xf32>
    %407 = arith.subf %406, %399 : vector<8x128xf32>
    %408 = arith.mulf %407, %405 : vector<8x128xf32>
    %409 = arith.mulf %399, %385 : vector<8x128xf32>
    %410 = arith.addf %408, %409 : vector<8x128xf32>
    %c16_123 = arith.constant 16 : index
    %c0_124 = arith.constant 0 : index
    %411 = vector.load %arg16[%c16_123, %c0_124] : memref<64x128xf32, #tpu.memory_space<vmem>>, vector<8x128xf32>
    tpu.vector_store %arg16[%c16_123, %c0_124], %410 {strides = array<i32>} : memref<64x128xf32, #tpu.memory_space<vmem>>, vector<8x128xf32>,
    %c24_125 = arith.constant 24 : index
    %c0_126 = arith.constant 0 : index
    %412 = vector.load %arg18[%c24_125, %c0_126] : memref<64x384xf32, #tpu.memory_space<vmem>>, vector<8x384xf32>
    %413 = arith.truncf %410 : vector<8x128xf32> to vector<8x128xbf16>
    %cst_127 = arith.constant dense<0.000000e+00> : vector<8x384xf32>
    %414 = tpu.matmul %413, %333, %cst_127 {dimension_numbers = #tpu.dot_dimension_numbers<[1], [0], [0], [1], [0, 0, 1, 1], [], []>} : vector<8x128xbf16>, vector<128x384xbf16>, vector<8x384xf32> -> vector<8x384xf32>
    %415 = vector.extract_strided_slice %412 {offsets = [0, 0], sizes = [8, 256], strides = [1, 1]} : vector<8x384xf32> to vector<8x256xf32>
    %416 = vector.extract_strided_slice %414 {offsets = [0, 0], sizes = [8, 256], strides = [1, 1]} : vector<8x384xf32> to vector<8x256xf32>
    %417 = arith.addf %415, %416 : vector<8x256xf32>
    %418 = arith.negf %417 : vector<8x256xf32>
    %419 = math.exp %418 : vector<8x256xf32>
    %cst_128 = arith.constant 1.000000e+00 : f32
    %420 = vector.broadcast %cst_128 : f32 to vector<8x256xf32>
    %421 = arith.addf %420, %419 : vector<8x256xf32>
    %422 = arith.divf %420, %421 : vector<8x256xf32>
    %423 = vector.extract_strided_slice %422 {offsets = [0, 0], sizes = [8, 128], strides = [1, 1]} : vector<8x256xf32> to vector<8x128xf32>
    %424 = vector.extract_strided_slice %422 {offsets = [0, 128], sizes = [8, 128], strides = [1, 1]} : vector<8x256xf32> to vector<8x128xf32>
    %425 = vector.extract_strided_slice %412 {offsets = [0, 256], sizes = [8, 128], strides = [1, 1]} : vector<8x384xf32> to vector<8x128xf32>
    %426 = vector.extract_strided_slice %414 {offsets = [0, 256], sizes = [8, 128], strides = [1, 1]} : vector<8x384xf32> to vector<8x128xf32>
    %427 = arith.addf %426, %336 : vector<8x128xf32>
    %428 = arith.mulf %423, %427 : vector<8x128xf32>
    %429 = arith.addf %425, %428 : vector<8x128xf32>
    %430 = math.tanh %429 : vector<8x128xf32>
    %cst_129 = arith.constant 1.000000e+00 : f32
    %431 = vector.broadcast %cst_129 : f32 to vector<8x128xf32>
    %432 = arith.subf %431, %424 : vector<8x128xf32>
    %433 = arith.mulf %432, %430 : vector<8x128xf32>
    %434 = arith.mulf %424, %410 : vector<8x128xf32>
    %435 = arith.addf %433, %434 : vector<8x128xf32>
    %c24_130 = arith.constant 24 : index
    %c0_131 = arith.constant 0 : index
    %436 = vector.load %arg16[%c24_130, %c0_131] : memref<64x128xf32, #tpu.memory_space<vmem>>, vector<8x128xf32>
    tpu.vector_store %arg16[%c24_130, %c0_131], %435 {strides = array<i32>} : memref<64x128xf32, #tpu.memory_space<vmem>>, vector<8x128xf32>,
    %c32_132 = arith.constant 32 : index
    %c0_133 = arith.constant 0 : index
    %437 = vector.load %arg18[%c32_132, %c0_133] : memref<64x384xf32, #tpu.memory_space<vmem>>, vector<8x384xf32>
    %438 = arith.truncf %435 : vector<8x128xf32> to vector<8x128xbf16>
    %cst_134 = arith.constant dense<0.000000e+00> : vector<8x384xf32>
    %439 = tpu.matmul %438, %333, %cst_134 {dimension_numbers = #tpu.dot_dimension_numbers<[1], [0], [0], [1], [0, 0, 1, 1], [], []>} : vector<8x128xbf16>, vector<128x384xbf16>, vector<8x384xf32> -> vector<8x384xf32>
    %440 = vector.extract_strided_slice %437 {offsets = [0, 0], sizes = [8, 256], strides = [1, 1]} : vector<8x384xf32> to vector<8x256xf32>
    %441 = vector.extract_strided_slice %439 {offsets = [0, 0], sizes = [8, 256], strides = [1, 1]} : vector<8x384xf32> to vector<8x256xf32>
    %442 = arith.addf %440, %441 : vector<8x256xf32>
    %443 = arith.negf %442 : vector<8x256xf32>
    %444 = math.exp %443 : vector<8x256xf32>
    %cst_135 = arith.constant 1.000000e+00 : f32
    %445 = vector.broadcast %cst_135 : f32 to vector<8x256xf32>
    %446 = arith.addf %445, %444 : vector<8x256xf32>
    %447 = arith.divf %445, %446 : vector<8x256xf32>
    %448 = vector.extract_strided_slice %447 {offsets = [0, 0], sizes = [8, 128], strides = [1, 1]} : vector<8x256xf32> to vector<8x128xf32>
    %449 = vector.extract_strided_slice %447 {offsets = [0, 128], sizes = [8, 128], strides = [1, 1]} : vector<8x256xf32> to vector<8x128xf32>
    %450 = vector.extract_strided_slice %437 {offsets = [0, 256], sizes = [8, 128], strides = [1, 1]} : vector<8x384xf32> to vector<8x128xf32>
    %451 = vector.extract_strided_slice %439 {offsets = [0, 256], sizes = [8, 128], strides = [1, 1]} : vector<8x384xf32> to vector<8x128xf32>
    %452 = arith.addf %451, %336 : vector<8x128xf32>
    %453 = arith.mulf %448, %452 : vector<8x128xf32>
    %454 = arith.addf %450, %453 : vector<8x128xf32>
    %455 = math.tanh %454 : vector<8x128xf32>
    %cst_136 = arith.constant 1.000000e+00 : f32
    %456 = vector.broadcast %cst_136 : f32 to vector<8x128xf32>
    %457 = arith.subf %456, %449 : vector<8x128xf32>
    %458 = arith.mulf %457, %455 : vector<8x128xf32>
    %459 = arith.mulf %449, %435 : vector<8x128xf32>
    %460 = arith.addf %458, %459 : vector<8x128xf32>
    %c32_137 = arith.constant 32 : index
    %c0_138 = arith.constant 0 : index
    %461 = vector.load %arg16[%c32_137, %c0_138] : memref<64x128xf32, #tpu.memory_space<vmem>>, vector<8x128xf32>
    tpu.vector_store %arg16[%c32_137, %c0_138], %460 {strides = array<i32>} : memref<64x128xf32, #tpu.memory_space<vmem>>, vector<8x128xf32>,
    %c40_139 = arith.constant 40 : index
    %c0_140 = arith.constant 0 : index
    %462 = vector.load %arg18[%c40_139, %c0_140] : memref<64x384xf32, #tpu.memory_space<vmem>>, vector<8x384xf32>
    %463 = arith.truncf %460 : vector<8x128xf32> to vector<8x128xbf16>
    %cst_141 = arith.constant dense<0.000000e+00> : vector<8x384xf32>
    %464 = tpu.matmul %463, %333, %cst_141 {dimension_numbers = #tpu.dot_dimension_numbers<[1], [0], [0], [1], [0, 0, 1, 1], [], []>} : vector<8x128xbf16>, vector<128x384xbf16>, vector<8x384xf32> -> vector<8x384xf32>
    %465 = vector.extract_strided_slice %462 {offsets = [0, 0], sizes = [8, 256], strides = [1, 1]} : vector<8x384xf32> to vector<8x256xf32>
    %466 = vector.extract_strided_slice %464 {offsets = [0, 0], sizes = [8, 256], strides = [1, 1]} : vector<8x384xf32> to vector<8x256xf32>
    %467 = arith.addf %465, %466 : vector<8x256xf32>
    %468 = arith.negf %467 : vector<8x256xf32>
    %469 = math.exp %468 : vector<8x256xf32>
    %cst_142 = arith.constant 1.000000e+00 : f32
    %470 = vector.broadcast %cst_142 : f32 to vector<8x256xf32>
    %471 = arith.addf %470, %469 : vector<8x256xf32>
    %472 = arith.divf %470, %471 : vector<8x256xf32>
    %473 = vector.extract_strided_slice %472 {offsets = [0, 0], sizes = [8, 128], strides = [1, 1]} : vector<8x256xf32> to vector<8x128xf32>
    %474 = vector.extract_strided_slice %472 {offsets = [0, 128], sizes = [8, 128], strides = [1, 1]} : vector<8x256xf32> to vector<8x128xf32>
    %475 = vector.extract_strided_slice %462 {offsets = [0, 256], sizes = [8, 128], strides = [1, 1]} : vector<8x384xf32> to vector<8x128xf32>
    %476 = vector.extract_strided_slice %464 {offsets = [0, 256], sizes = [8, 128], strides = [1, 1]} : vector<8x384xf32> to vector<8x128xf32>
    %477 = arith.addf %476, %336 : vector<8x128xf32>
    %478 = arith.mulf %473, %477 : vector<8x128xf32>
    %479 = arith.addf %475, %478 : vector<8x128xf32>
    %480 = math.tanh %479 : vector<8x128xf32>
    %cst_143 = arith.constant 1.000000e+00 : f32
    %481 = vector.broadcast %cst_143 : f32 to vector<8x128xf32>
    %482 = arith.subf %481, %474 : vector<8x128xf32>
    %483 = arith.mulf %482, %480 : vector<8x128xf32>
    %484 = arith.mulf %474, %460 : vector<8x128xf32>
    %485 = arith.addf %483, %484 : vector<8x128xf32>
    %c40_144 = arith.constant 40 : index
    %c0_145 = arith.constant 0 : index
    %486 = vector.load %arg16[%c40_144, %c0_145] : memref<64x128xf32, #tpu.memory_space<vmem>>, vector<8x128xf32>
    tpu.vector_store %arg16[%c40_144, %c0_145], %485 {strides = array<i32>} : memref<64x128xf32, #tpu.memory_space<vmem>>, vector<8x128xf32>,
    %c48_146 = arith.constant 48 : index
    %c0_147 = arith.constant 0 : index
    %487 = vector.load %arg18[%c48_146, %c0_147] : memref<64x384xf32, #tpu.memory_space<vmem>>, vector<8x384xf32>
    %488 = arith.truncf %485 : vector<8x128xf32> to vector<8x128xbf16>
    %cst_148 = arith.constant dense<0.000000e+00> : vector<8x384xf32>
    %489 = tpu.matmul %488, %333, %cst_148 {dimension_numbers = #tpu.dot_dimension_numbers<[1], [0], [0], [1], [0, 0, 1, 1], [], []>} : vector<8x128xbf16>, vector<128x384xbf16>, vector<8x384xf32> -> vector<8x384xf32>
    %490 = vector.extract_strided_slice %487 {offsets = [0, 0], sizes = [8, 256], strides = [1, 1]} : vector<8x384xf32> to vector<8x256xf32>
    %491 = vector.extract_strided_slice %489 {offsets = [0, 0], sizes = [8, 256], strides = [1, 1]} : vector<8x384xf32> to vector<8x256xf32>
    %492 = arith.addf %490, %491 : vector<8x256xf32>
    %493 = arith.negf %492 : vector<8x256xf32>
    %494 = math.exp %493 : vector<8x256xf32>
    %cst_149 = arith.constant 1.000000e+00 : f32
    %495 = vector.broadcast %cst_149 : f32 to vector<8x256xf32>
    %496 = arith.addf %495, %494 : vector<8x256xf32>
    %497 = arith.divf %495, %496 : vector<8x256xf32>
    %498 = vector.extract_strided_slice %497 {offsets = [0, 0], sizes = [8, 128], strides = [1, 1]} : vector<8x256xf32> to vector<8x128xf32>
    %499 = vector.extract_strided_slice %497 {offsets = [0, 128], sizes = [8, 128], strides = [1, 1]} : vector<8x256xf32> to vector<8x128xf32>
    %500 = vector.extract_strided_slice %487 {offsets = [0, 256], sizes = [8, 128], strides = [1, 1]} : vector<8x384xf32> to vector<8x128xf32>
    %501 = vector.extract_strided_slice %489 {offsets = [0, 256], sizes = [8, 128], strides = [1, 1]} : vector<8x384xf32> to vector<8x128xf32>
    %502 = arith.addf %501, %336 : vector<8x128xf32>
    %503 = arith.mulf %498, %502 : vector<8x128xf32>
    %504 = arith.addf %500, %503 : vector<8x128xf32>
    %505 = math.tanh %504 : vector<8x128xf32>
    %cst_150 = arith.constant 1.000000e+00 : f32
    %506 = vector.broadcast %cst_150 : f32 to vector<8x128xf32>
    %507 = arith.subf %506, %499 : vector<8x128xf32>
    %508 = arith.mulf %507, %505 : vector<8x128xf32>
    %509 = arith.mulf %499, %485 : vector<8x128xf32>
    %510 = arith.addf %508, %509 : vector<8x128xf32>
    %c48_151 = arith.constant 48 : index
    %c0_152 = arith.constant 0 : index
    %511 = vector.load %arg16[%c48_151, %c0_152] : memref<64x128xf32, #tpu.memory_space<vmem>>, vector<8x128xf32>
    tpu.vector_store %arg16[%c48_151, %c0_152], %510 {strides = array<i32>} : memref<64x128xf32, #tpu.memory_space<vmem>>, vector<8x128xf32>,
    %c56_153 = arith.constant 56 : index
    %c0_154 = arith.constant 0 : index
    %512 = vector.load %arg18[%c56_153, %c0_154] : memref<64x384xf32, #tpu.memory_space<vmem>>, vector<8x384xf32>
    %513 = arith.truncf %510 : vector<8x128xf32> to vector<8x128xbf16>
    %cst_155 = arith.constant dense<0.000000e+00> : vector<8x384xf32>
    %514 = tpu.matmul %513, %333, %cst_155 {dimension_numbers = #tpu.dot_dimension_numbers<[1], [0], [0], [1], [0, 0, 1, 1], [], []>} : vector<8x128xbf16>, vector<128x384xbf16>, vector<8x384xf32> -> vector<8x384xf32>
    %515 = vector.extract_strided_slice %512 {offsets = [0, 0], sizes = [8, 256], strides = [1, 1]} : vector<8x384xf32> to vector<8x256xf32>
    %516 = vector.extract_strided_slice %514 {offsets = [0, 0], sizes = [8, 256], strides = [1, 1]} : vector<8x384xf32> to vector<8x256xf32>
    %517 = arith.addf %515, %516 : vector<8x256xf32>
    %518 = arith.negf %517 : vector<8x256xf32>
    %519 = math.exp %518 : vector<8x256xf32>
    %cst_156 = arith.constant 1.000000e+00 : f32
    %520 = vector.broadcast %cst_156 : f32 to vector<8x256xf32>
    %521 = arith.addf %520, %519 : vector<8x256xf32>
    %522 = arith.divf %520, %521 : vector<8x256xf32>
    %523 = vector.extract_strided_slice %522 {offsets = [0, 0], sizes = [8, 128], strides = [1, 1]} : vector<8x256xf32> to vector<8x128xf32>
    %524 = vector.extract_strided_slice %522 {offsets = [0, 128], sizes = [8, 128], strides = [1, 1]} : vector<8x256xf32> to vector<8x128xf32>
    %525 = vector.extract_strided_slice %512 {offsets = [0, 256], sizes = [8, 128], strides = [1, 1]} : vector<8x384xf32> to vector<8x128xf32>
    %526 = vector.extract_strided_slice %514 {offsets = [0, 256], sizes = [8, 128], strides = [1, 1]} : vector<8x384xf32> to vector<8x128xf32>
    %527 = arith.addf %526, %336 : vector<8x128xf32>
    %528 = arith.mulf %523, %527 : vector<8x128xf32>
    %529 = arith.addf %525, %528 : vector<8x128xf32>
    %530 = math.tanh %529 : vector<8x128xf32>
    %cst_157 = arith.constant 1.000000e+00 : f32
    %531 = vector.broadcast %cst_157 : f32 to vector<8x128xf32>
    %532 = arith.subf %531, %524 : vector<8x128xf32>
    %533 = arith.mulf %532, %530 : vector<8x128xf32>
    %534 = arith.mulf %524, %510 : vector<8x128xf32>
    %535 = arith.addf %533, %534 : vector<8x128xf32>
    %c56_158 = arith.constant 56 : index
    %c0_159 = arith.constant 0 : index
    %536 = vector.load %arg16[%c56_158, %c0_159] : memref<64x128xf32, #tpu.memory_space<vmem>>, vector<8x128xf32>
    tpu.vector_store %arg16[%c56_158, %c0_159], %535 {strides = array<i32>} : memref<64x128xf32, #tpu.memory_space<vmem>>, vector<8x128xf32>,
    %537 = tpu.iota {dimensions = array<i32: 0>} : vector<64x64xi32>
    %538 = tpu.iota {dimensions = array<i32: 1>} : vector<64x64xi32>
    %c7_i32_160 = arith.constant 7 : i32
    %539 = vector.broadcast %c7_i32_160 : i32 to vector<64x64xi32>
    %540 = arith.andi %537, %539 : vector<64x64xi32>
    %c7_i32_161 = arith.constant 7 : i32
    %541 = vector.broadcast %c7_i32_161 : i32 to vector<64x64xi32>
    %542 = arith.andi %538, %541 : vector<64x64xi32>
    %543 = arith.cmpi eq, %540, %542 : vector<64x64xi32>
    %544 = tpu.iota {dimensions = array<i32: 1>} : vector<1x64xi32>
    %c7_i32_162 = arith.constant 7 : i32
    %545 = vector.broadcast %c7_i32_162 : i32 to vector<1x64xi32>
    %546 = arith.andi %544, %545 : vector<1x64xi32>
    %c3_i32_163 = arith.constant 3 : i32
    %547 = vector.broadcast %c3_i32_163 : i32 to vector<1x64xi32>
    %548 = arith.shrsi %544, %547 : vector<1x64xi32>
    %c0_i32_164 = arith.constant 0 : i32
    %549 = vector.broadcast %c0_i32_164 : i32 to vector<1x64xi32>
    %c0_i32_165 = arith.constant 0 : i32
    %550 = vector.broadcast %c0_i32_165 : i32 to vector<1x64xi32>
    %551 = arith.cmpi eq, %546, %550 : vector<1x64xi32>
    %c0_166 = arith.constant 0 : index
    %552 = memref.load %arg0[%c0_166] : memref<8xi32, #tpu.memory_space<smem>>
    %553 = vector.broadcast %552 : i32 to vector<1x64xi32>
    %554 = arith.select %551, %553, %549 : vector<1x64xi1>, vector<1x64xi32>
    %c1_i32_167 = arith.constant 1 : i32
    %555 = vector.broadcast %c1_i32_167 : i32 to vector<1x64xi32>
    %556 = arith.cmpi eq, %546, %555 : vector<1x64xi32>
    %c1_168 = arith.constant 1 : index
    %557 = memref.load %arg0[%c1_168] : memref<8xi32, #tpu.memory_space<smem>>
    %558 = vector.broadcast %557 : i32 to vector<1x64xi32>
    %559 = arith.select %556, %558, %554 : vector<1x64xi1>, vector<1x64xi32>
    %c2_i32_169 = arith.constant 2 : i32
    %560 = vector.broadcast %c2_i32_169 : i32 to vector<1x64xi32>
    %561 = arith.cmpi eq, %546, %560 : vector<1x64xi32>
    %c2_170 = arith.constant 2 : index
    %562 = memref.load %arg0[%c2_170] : memref<8xi32, #tpu.memory_space<smem>>
    %563 = vector.broadcast %562 : i32 to vector<1x64xi32>
    %564 = arith.select %561, %563, %559 : vector<1x64xi1>, vector<1x64xi32>
    %c3_i32_171 = arith.constant 3 : i32
    %565 = vector.broadcast %c3_i32_171 : i32 to vector<1x64xi32>
    %566 = arith.cmpi eq, %546, %565 : vector<1x64xi32>
    %c3_172 = arith.constant 3 : index
    %567 = memref.load %arg0[%c3_172] : memref<8xi32, #tpu.memory_space<smem>>
    %568 = vector.broadcast %567 : i32 to vector<1x64xi32>
    %569 = arith.select %566, %568, %564 : vector<1x64xi1>, vector<1x64xi32>
    %c4_i32_173 = arith.constant 4 : i32
    %570 = vector.broadcast %c4_i32_173 : i32 to vector<1x64xi32>
    %571 = arith.cmpi eq, %546, %570 : vector<1x64xi32>
    %c4_174 = arith.constant 4 : index
    %572 = memref.load %arg0[%c4_174] : memref<8xi32, #tpu.memory_space<smem>>
    %573 = vector.broadcast %572 : i32 to vector<1x64xi32>
    %574 = arith.select %571, %573, %569 : vector<1x64xi1>, vector<1x64xi32>
    %c5_i32_175 = arith.constant 5 : i32
    %575 = vector.broadcast %c5_i32_175 : i32 to vector<1x64xi32>
    %576 = arith.cmpi eq, %546, %575 : vector<1x64xi32>
    %c5_176 = arith.constant 5 : index
    %577 = memref.load %arg0[%c5_176] : memref<8xi32, #tpu.memory_space<smem>>
    %578 = vector.broadcast %577 : i32 to vector<1x64xi32>
    %579 = arith.select %576, %578, %574 : vector<1x64xi1>, vector<1x64xi32>
    %c6_i32_177 = arith.constant 6 : i32
    %580 = vector.broadcast %c6_i32_177 : i32 to vector<1x64xi32>
    %581 = arith.cmpi eq, %546, %580 : vector<1x64xi32>
    %c6_178 = arith.constant 6 : index
    %582 = memref.load %arg0[%c6_178] : memref<8xi32, #tpu.memory_space<smem>>
    %583 = vector.broadcast %582 : i32 to vector<1x64xi32>
    %584 = arith.select %581, %583, %579 : vector<1x64xi1>, vector<1x64xi32>
    %c7_i32_179 = arith.constant 7 : i32
    %585 = vector.broadcast %c7_i32_179 : i32 to vector<1x64xi32>
    %586 = arith.cmpi eq, %546, %585 : vector<1x64xi32>
    %c7_180 = arith.constant 7 : index
    %587 = memref.load %arg0[%c7_180] : memref<8xi32, #tpu.memory_space<smem>>
    %588 = vector.broadcast %587 : i32 to vector<1x64xi32>
    %589 = arith.select %586, %588, %584 : vector<1x64xi1>, vector<1x64xi32>
    %590 = arith.cmpi slt, %548, %589 : vector<1x64xi32>
    %591 = vector.broadcast %590 : vector<1x64xi1> to vector<64x64xi1>
    %592 = arith.andi %543, %591 : vector<64x64xi1>
    %cst_181 = arith.constant 0.000000e+00 : f32
    %cst_182 = arith.constant -1.000000e+30 : f32
    %593 = vector.broadcast %cst_181 : f32 to vector<64x64xf32>
    %594 = vector.broadcast %cst_182 : f32 to vector<64x64xf32>
    %595 = arith.select %592, %593, %594 : vector<64x64xi1>, vector<64x64xf32>
    %c0_183 = arith.constant 0 : index
    %c0_184 = arith.constant 0 : index
    %596 = vector.load %arg15[%c0_183, %c0_184] : memref<64x128xf32, #tpu.memory_space<vmem>>, vector<64x128xf32>
    %597 = arith.truncf %596 : vector<64x128xf32> to vector<64x128xbf16>
    %c0_185 = arith.constant 0 : index
    %c0_186 = arith.constant 0 : index
    %598 = vector.load %arg16[%c0_185, %c0_186] : memref<64x128xf32, #tpu.memory_space<vmem>>, vector<64x128xf32>
    %599 = arith.truncf %598 : vector<64x128xf32> to vector<64x128xbf16>
    %cst_187 = arith.constant dense<0.000000e+00> : vector<64x64xf32>
    %600 = tpu.matmul %599, %597, %cst_187 {dimension_numbers = #tpu.dot_dimension_numbers<[1], [1], [0], [0], [0, 0, 1, 0], [], []>} : vector<64x128xbf16>, vector<64x128xbf16>, vector<64x64xf32> -> vector<64x64xf32>
    %601 = arith.addf %600, %595 : vector<64x64xf32>
    %cst_188 = arith.constant dense<0xFF800000> : vector<64xf32>
    %602 = vector.multi_reduction <maximumf>, %601, %cst_188 [1] : vector<64x64xf32> to vector<64xf32>
    %603 = vector.shape_cast %602 : vector<64xf32> to vector<64x1xf32>
    %604 = vector.broadcast %603 : vector<64x1xf32> to vector<64x64xf32>
    %605 = arith.subf %601, %604 : vector<64x64xf32>
    %606 = math.exp %605 : vector<64x64xf32>
    %cst_189 = arith.constant dense<0.000000e+00> : vector<64xf32>
    %607 = vector.multi_reduction <add>, %606, %cst_189 [1] : vector<64x64xf32> to vector<64xf32>
    %608 = vector.shape_cast %607 : vector<64xf32> to vector<64x1xf32>
    %609 = vector.broadcast %608 : vector<64x1xf32> to vector<64x64xf32>
    %610 = arith.divf %606, %609 : vector<64x64xf32>
    %611 = arith.truncf %610 : vector<64x64xf32> to vector<64x64xbf16>
    %cst_190 = arith.constant dense<0.000000e+00> : vector<64x128xf32>
    %612 = tpu.matmul %611, %597, %cst_190 {dimension_numbers = #tpu.dot_dimension_numbers<[1], [0], [0], [1], [0, 0, 1, 1], [], []>} : vector<64x64xbf16>, vector<64x128xbf16>, vector<64x128xf32> -> vector<64x128xf32>
    %613 = arith.truncf %612 : vector<64x128xf32> to vector<64x128xbf16>
    %614 = tpu.concatenate %599, %613 in 1 : vector<64x128xbf16>, vector<64x128xbf16> -> vector<64x256xbf16>
    %c0_191 = arith.constant 0 : index
    %c0_192 = arith.constant 0 : index
    %615 = vector.load %arg11[%c0_191, %c0_192] : memref<256x128xbf16, #tpu.memory_space<vmem>>, vector<256x128xbf16>
    %cst_193 = arith.constant dense<0.000000e+00> : vector<64x128xf32>
    %616 = tpu.matmul %614, %615, %cst_193 {dimension_numbers = #tpu.dot_dimension_numbers<[1], [0], [0], [1], [0, 0, 1, 1], [], []>} : vector<64x256xbf16>, vector<256x128xbf16>, vector<64x128xf32> -> vector<64x128xf32>
    %617 = math.tanh %616 : vector<64x128xf32>
    %618 = arith.truncf %617 : vector<64x128xf32> to vector<64x128xbf16>
    %c0_194 = arith.constant 0 : index
    %c0_195 = arith.constant 0 : index
    %619 = vector.load %arg12[%c0_194, %c0_195] : memref<128x128xbf16, #tpu.memory_space<vmem>>, vector<128x128xbf16>
    %cst_196 = arith.constant dense<0.000000e+00> : vector<64x128xf32>
    %620 = tpu.matmul %618, %619, %cst_196 {dimension_numbers = #tpu.dot_dimension_numbers<[1], [0], [0], [1], [0, 0, 1, 1], [], []>} : vector<64x128xbf16>, vector<128x128xbf16>, vector<64x128xf32> -> vector<64x128xf32>
    %c0_197 = arith.constant 0 : index
    %c0_198 = arith.constant 0 : index
    %621 = vector.load %arg13[%c0_197, %c0_198] : memref<1x128xf32, #tpu.memory_space<vmem>>, vector<1x128xf32>
    %622 = vector.broadcast %621 : vector<1x128xf32> to vector<64x128xf32>
    %623 = arith.addf %620, %622 : vector<64x128xf32>
    %c0_199 = arith.constant 0 : index
    %c0_200 = arith.constant 0 : index
    %624 = vector.load %arg14[%c0_199, %c0_200] : memref<64x128xf32, #tpu.memory_space<vmem>>, vector<64x128xf32>
    tpu.vector_store %arg14[%c0_199, %c0_200], %623 {strides = array<i32>} : memref<64x128xf32, #tpu.memory_space<vmem>>, vector<64x128xf32>,
    return
  }
}

</mosaic_0001>

<llo_original>
// kernel: seq2set_forward.1
$region0: #{seq2set_forward.1}
  #allocation0 [shape = 'u32[]', space=smem, size = 0x4, offset = 0x4, fixed_abs, tag = 'smem constant byte address 0x4 - core index']
  #allocation1 [shape = 'u32[72,128]{1,0:T(1,128)}', space=vmem, size = 0x9000, scoped, tag = 'internal scratch']
  #allocation2 [shape = 'f32[64,128]{1,0:T(8,128)}', space=vmem, size = 0x8000, scoped, tag = 'scratch operand']
  #allocation3 [shape = 'f32[64,128]{1,0:T(8,128)}', space=vmem, size = 0x8000, scoped, tag = 'scratch operand']
  #allocation4 [shape = 'f32[64,384]{1,0:T(8,128)}', space=vmem, size = 0x18000, scoped, tag = 'scratch operand']
  #allocation5 [shape = 'f32[64,384]{1,0:T(8,128)}', space=vmem, size = 0x18000, scoped, tag = 'scratch operand']
  #allocation6 [shape = 'f32[64,1]{1,0:T(8,128)}', space=vmem, size = 0x8000, scoped, tag = 'scratch operand']
  %s0 = inlined_call_operand.vmem [shape: s32[8], index: 0, kind: input, shape index: {}]
  %s1 = inlined_call_operand.vmem [shape: bf16[64,128], index: 1, kind: input, shape index: {}]
  %s2 = inlined_call_operand.vmem [shape: bf16[64,128], index: 2, kind: input, shape index: {}]
  %s3 = inlined_call_operand.vmem [shape: bf16[128,384], index: 3, kind: input, shape index: {}]
  %s4 = inlined_call_operand.vmem [shape: bf16[128,384], index: 4, kind: input, shape index: {}]
  %s5 = inlined_call_operand.vmem [shape: f32[1,384], index: 5, kind: input, shape index: {}]
  %s6 = inlined_call_operand.vmem [shape: f32[1,128], index: 6, kind: input, shape index: {}]
  %s7 = inlined_call_operand.vmem [shape: bf16[128,384], index: 7, kind: input, shape index: {}]
  %s8 = inlined_call_operand.vmem [shape: bf16[128,384], index: 8, kind: input, shape index: {}]
  %s9 = inlined_call_operand.vmem [shape: f32[1,384], index: 9, kind: input, shape index: {}]
  %s10 = inlined_call_operand.vmem [shape: f32[1,128], index: 10, kind: input, shape index: {}]
  %s11 = inlined_call_operand.hbm [shape: bf16[256,128], index: 11, kind: input, shape index: {}]
  %s12 = inlined_call_operand.hbm [shape: bf16[128,128], index: 12, kind: input, shape index: {}]
  %s13 = inlined_call_operand.vmem [shape: f32[1,128], index: 13, kind: input, shape index: {}]
  %s14 = inlined_call_operand.hbm [shape: f32[64,128], index: 14, kind: output, shape index: {}]
  %s15 = sld [smem:[#allocation0]]
  $region78: #{seq2set_forward.1} parent=0
    _
  %s17 = ssub.s32 1, %s15
  %s18 = scalar_select 0, %s17, %s15
  $region1: #{seq2set_forward.1} parent=0
    #allocation7 [shape = 'u8[512]{0}', space=smem, size = 0x200, scoped, tag = 'input window, operand 0, single buffered']
    #allocation8 [shape = 's32[1]{0}', space=sflag, size = 0x4, scoped, tag = 'scoped memory for seq2set_forward.1']
    #allocation9 [shape = 's32[1]{0}', space=sflag, size = 0x4, scoped, tag = 'scoped memory for seq2set_forward.1']
    #allocation10 [shape = 's32[1]{0}', space=sflag, size = 0x4, scoped, tag = 'scoped memory for seq2set_forward.1']
    #allocation11 [shape = 'u8[65536]{0}', space=vmem, size = 0x10000, scoped, tag = 'input window, operand 11, single buffered']
    #allocation12 [shape = 'u8[32768]{0}', space=vmem, size = 0x8000, scoped, tag = 'input window, operand 12, single buffered']
    #allocation13 [shape = 's32[1]{0}', space=sflag, size = 0x4, scoped, tag = 'scoped memory for seq2set_forward.1']
    #allocation14 [shape = 'u8[32768]{0}', space=vmem, size = 0x8000, scoped, tag = 'output window, operand 0, single buffered']
    %19 = vsyncpa [#allocation10], 0
    %20 = vsyncpa [#allocation8], 0
    %21 = vsyncpa [#allocation13], 0
    %22 = vsyncpa [#allocation9], 0
    // Predicated region
    $region2: #{seq2set_forward.1} parent=1 // pred_check
      _
    $region3: #{seq2set_forward.1} parent=1 // pred_check_branch
      %24 = sbr.rel (0) target = $region5
    $region4: #{seq2set_forward.1} parent=1 // pred_region
      %26 = vsyncadd [#allocation10], 0
      %s28 = sshll.u32 %s0, 4
      %s29 = int_to_ptr.vmem [resolvable:$true] %s28
      %31 = dma.vmem_to_smem %s29, 16, [#allocation7], [#allocation10]
    $region5: #{seq2set_forward.1} parent=1 // pred_fallthru
      _
    // Predicated region
    $region6: #{seq2set_forward.1} parent=1 // pred_check
      _
    $region7: #{seq2set_forward.1} parent=1 // pred_check_branch
      %33 = sbr.rel (0) target = $region9
    $region8: #{seq2set_forward.1} parent=1 // pred_region
      _
    $region9: #{seq2set_forward.1} parent=1 // pred_fallthru
      _
    // Predicated region
    $region10: #{seq2set_forward.1} parent=1 // pred_check
      _
    $region11: #{seq2set_forward.1} parent=1 // pred_check_branch
      %35 = sbr.rel (0) target = $region13
    $region12: #{seq2set_forward.1} parent=1 // pred_region
      _
    $region13: #{seq2set_forward.1} parent=1 // pred_fallthru
      _
    // Predicated region
    $region14: #{seq2set_forward.1} parent=1 // pred_check
      _
    $region15: #{seq2set_forward.1} parent=1 // pred_check_branch
      %37 = sbr.rel (0) target = $region17
    $region16: #{seq2set_forward.1} parent=1 // pred_region
      _
    $region17: #{seq2set_forward.1} parent=1 // pred_fallthru
      _
    // Predicated region
    $region18: #{seq2set_forward.1} parent=1 // pred_check
      _
    $region19: #{seq2set_forward.1} parent=1 // pred_check_branch
      %39 = sbr.rel (0) target = $region21
    $region20: #{seq2set_forward.1} parent=1 // pred_region
      _
    $region21: #{seq2set_forward.1} parent=1 // pred_fallthru
      _
    // Predicated region
    $region22: #{seq2set_forward.1} parent=1 // pred_check
      _
    $region23: #{seq2set_forward.1} parent=1 // pred_check_branch
      %41 = sbr.rel (0) target = $region25
    $region24: #{seq2set_forward.1} parent=1 // pred_region
      _
    $region25: #{seq2set_forward.1} parent=1 // pred_fallthru
      _
    // Predicated region
    $region26: #{seq2set_forward.1} parent=1 // pred_check
      _
    $region27: #{seq2set_forward.1} parent=1 // pred_check_branch
      %43 = sbr.rel (0) target = $region29
    $region28: #{seq2set_forward.1} parent=1 // pred_region
      _
    $region29: #{seq2set_forward.1} parent=1 // pred_fallthru
      _
    // Predicated region
    $region30: #{seq2set_forward.1} parent=1 // pred_check
      _
    $region31: #{seq2set_forward.1} parent=1 // pred_check_branch
      %45 = sbr.rel (0) target = $region33
    $region32: #{seq2set_forward.1} parent=1 // pred_region
      _
    $region33: #{seq2set_forward.1} parent=1 // pred_fallthru
      _
    // Predicated region
    $region34: #{seq2set_forward.1} parent=1 // pred_check
      _
    $region35: #{seq2set_forward.1} parent=1 // pred_check_branch
      %47 = sbr.rel (0) target = $region37
    $region36: #{seq2set_forward.1} parent=1 // pred_region
      _
    $region37: #{seq2set_forward.1} parent=1 // pred_fallthru
      _
    // Predicated region
    $region38: #{seq2set_forward.1} parent=1 // pred_check
      _
    $region39: #{seq2set_forward.1} parent=1 // pred_check_branch
      %49 = sbr.rel (0) target = $region41
    $region40: #{seq2set_forward.1} parent=1 // pred_region
      _
    $region41: #{seq2set_forward.1} parent=1 // pred_fallthru
      _
    // Predicated region
    $region42: #{seq2set_forward.1} parent=1 // pred_check
      _
    $region43: #{seq2set_forward.1} parent=1 // pred_check_branch
      %51 = sbr.rel (0) target = $region45
    $region44: #{seq2set_forward.1} parent=1 // pred_region
      _
    $region45: #{seq2set_forward.1} parent=1 // pred_fallthru
      _
    // Predicated region
    $region46: #{seq2set_forward.1} parent=1 // pred_check
      _
    $region47: #{seq2set_forward.1} parent=1 // pred_check_branch
      %53 = sbr.rel (0) target = $region49
    $region48: #{seq2set_forward.1} parent=1 // pred_region
      %55 = vsyncadd [#allocation8], 0
      %s56 = sshll.u32 %s11, 4
      %s57 = int_to_ptr.hbm [resolvable:$true] %s56
      %s58 = sshll.u32 [#allocation11], 4
      %s59 = int_to_ptr.vmem [resolvable:$true] %s58
      %64 = dma.hbm_to_vmem [thread:$0]  %s57, 2048, %s59, [#allocation8], 64, 64, 4
    $region49: #{seq2set_forward.1} parent=1 // pred_fallthru
      _
    // Predicated region
    $region50: #{seq2set_forward.1} parent=1 // pred_check
      _
    $region51: #{seq2set_forward.1} parent=1 // pred_check_branch
      %66 = sbr.rel (0) target = $region53
    $region52: #{seq2set_forward.1} parent=1 // pred_region
      %68 = vsyncadd [#allocation13], 0
      %s69 = sshll.u32 %s12, 4
      %s70 = int_to_ptr.hbm [resolvable:$true] %s69
      %s71 = sshll.u32 [#allocation12], 4
      %s72 = int_to_ptr.vmem [resolvable:$true] %s71
      %77 = dma.hbm_to_vmem [thread:$0]  %s70, 1024, %s72, [#allocation13], 64, 64, 4
    $region53: #{seq2set_forward.1} parent=1 // pred_fallthru
      _
    // Predicated region
    $region54: #{seq2set_forward.1} parent=1 // pred_check
      _
    $region55: #{seq2set_forward.1} parent=1 // pred_check_branch
      %79 = sbr.rel (0) target = $region57
    $region56: #{seq2set_forward.1} parent=1 // pred_region
      _
    $region57: #{seq2set_forward.1} parent=1 // pred_fallthru
      _
    // Predicated region
    $region58: #{seq2set_forward.1} parent=1 // pred_check
      _
    $region59: #{seq2set_forward.1} parent=1 // pred_check_branch
      %81 = sbr.rel (0) target = $region61
    $region60: #{seq2set_forward.1} parent=1 // pred_region
      %83 = dma.done [#allocation10], 16
    $region61: #{seq2set_forward.1} parent=1 // pred_fallthru
      _
    // Predicated region
    $region62: #{seq2set_forward.1} parent=1 // pred_check
      _
    $region63: #{seq2set_forward.1} parent=1 // pred_check_branch
      %85 = sbr.rel (0) target = $region65
    $region64: #{seq2set_forward.1} parent=1 // pred_region
      %87 = dma.done [#allocation8], 2048
    $region65: #{seq2set_forward.1} parent=1 // pred_fallthru
      _
    // Predicated region
    $region66: #{seq2set_forward.1} parent=1 // pred_check
      _
    $region67: #{seq2set_forward.1} parent=1 // pred_check_branch
      %89 = sbr.rel (0) target = $region69
    $region68: #{seq2set_forward.1} parent=1 // pred_region
      %91 = dma.done [#allocation13], 1024
    $region69: #{seq2set_forward.1} parent=1 // pred_fallthru
      _
    %92 = sfence
    %v94 = vlaneseq
    %v95 = vshrl.u32 %v94, 7
    %v96 = vadd.s32 %v95, 8
    %v97 = vadd.s32 %v95, 16
    %v98 = vadd.s32 %v95, 24
    %v99 = vadd.s32 %v95, 32
    %v100 = vadd.s32 %v95, 40
    %v101 = vadd.s32 %v95, 48
    %v102 = vadd.s32 %v95, 56
    %v103 = vand.u32 %v95, 7
    %v104 = vand.u32 %v96, 7
    %v105 = vand.u32 %v97, 7
    %v106 = vand.u32 %v98, 7
    %v107 = vand.u32 %v99, 7
    %v108 = vand.u32 %v100, 7
    %v109 = vand.u32 %v101, 7
    %v110 = vand.u32 %v102, 7
    %v111 = vshra.s32 %v95, 3
    %v112 = vshra.s32 %v96, 3
    %v113 = vshra.s32 %v97, 3
    %v114 = vshra.s32 %v98, 3
    %v115 = vshra.s32 %v99, 3
    %v116 = vshra.s32 %v100, 3
    %v117 = vshra.s32 %v101, 3
    %v118 = vshra.s32 %v102, 3
    %vm119 = vcmp.eq.s32.totalorder %v103, 0
    %vm120 = vcmp.eq.s32.totalorder %v104, 0
    %vm121 = vcmp.eq.s32.totalorder %v105, 0
    %vm122 = vcmp.eq.s32.totalorder %v106, 0
    %vm123 = vcmp.eq.s32.totalorder %v107, 0
    %vm124 = vcmp.eq.s32.totalorder %v108, 0
    %vm125 = vcmp.eq.s32.totalorder %v109, 0
    %vm126 = vcmp.eq.s32.totalorder %v110, 0
    %s127 = sld [smem:[#allocation7]]
    %v128 = vstv %s127
    %v129 = vsel %vm119, %v128, 0
    %v130 = vsel %vm120, %v128, 0
    %v131 = vsel %vm121, %v128, 0
    %v132 = vsel %vm122, %v128, 0
    %v133 = vsel %vm123, %v128, 0
    %v134 = vsel %vm124, %v128, 0
    %v135 = vsel %vm125, %v128, 0
    %v136 = vsel %vm126, %v128, 0
    %vm137 = vcmp.eq.s32.totalorder %v103, 1
    %vm138 = vcmp.eq.s32.totalorder %v104, 1
    %vm139 = vcmp.eq.s32.totalorder %v105, 1
    %vm140 = vcmp.eq.s32.totalorder %v106, 1
    %vm141 = vcmp.eq.s32.totalorder %v107, 1
    %vm142 = vcmp.eq.s32.totalorder %v108, 1
    %vm143 = vcmp.eq.s32.totalorder %v109, 1
    %vm144 = vcmp.eq.s32.totalorder %v110, 1
    %s145 = sld [smem:[#allocation7 + $0x1]]
    %v146 = vstv %s145
    %v147 = vsel %vm137, %v146, %v129
    %v148 = vsel %vm138, %v146, %v130
    %v149 = vsel %vm139, %v146, %v131
    %v150 = vsel %vm140, %v146, %v132
    %v151 = vsel %vm141, %v146, %v133
    %v152 = vsel %vm142, %v146, %v134
    %v153 = vsel %vm143, %v146, %v135
    %v154 = vsel %vm144, %v146, %v136
    %vm155 = vcmp.eq.s32.totalorder %v103, 2
    %vm156 = vcmp.eq.s32.totalorder %v104, 2
    %vm157 = vcmp.eq.s32.totalorder %v105, 2
    %vm158 = vcmp.eq.s32.totalorder %v106, 2
    %vm159 = vcmp.eq.s32.totalorder %v107, 2
    %vm160 = vcmp.eq.s32.totalorder %v108, 2
    %vm161 = vcmp.eq.s32.totalorder %v109, 2
    %vm162 = vcmp.eq.s32.totalorder %v110, 2
    %s163 = sld [smem:[#allocation7 + $0x2]]
    %v164 = vstv %s163
    %v165 = vsel %vm155, %v164, %v147
    %v166 = vsel %vm156, %v164, %v148
    %v167 = vsel %vm157, %v164, %v149
    %v168 = vsel %vm158, %v164, %v150
    %v169 = vsel %vm159, %v164, %v151
    %v170 = vsel %vm160, %v164, %v152
    %v171 = vsel %vm161, %v164, %v153
    %v172 = vsel %vm162, %v164, %v154
    %vm173 = vcmp.eq.s32.totalorder %v103, 3
    %vm174 = vcmp.eq.s32.totalorder %v104, 3
    %vm175 = vcmp.eq.s32.totalorder %v105, 3
    %vm176 = vcmp.eq.s32.totalorder %v106, 3
    %vm177 = vcmp.eq.s32.totalorder %v107, 3
    %vm178 = vcmp.eq.s32.totalorder %v108, 3
    %vm179 = vcmp.eq.s32.totalorder %v109, 3
    %vm180 = vcmp.eq.s32.totalorder %v110, 3
    %s181 = sld [smem:[#allocation7 + $0x3]]
    %v182 = vstv %s181
    %v183 = vsel %vm173, %v182, %v165
    %v184 = vsel %vm174, %v182, %v166
    %v185 = vsel %vm175, %v182, %v167
    %v186 = vsel %vm176, %v182, %v168
    %v187 = vsel %vm177, %v182, %v169
    %v188 = vsel %vm178, %v182, %v170
    %v189 = vsel %vm179, %v182, %v171
    %v190 = vsel %vm180, %v182, %v172
    %vm191 = vcmp.eq.s32.totalorder %v103, 4
    %vm192 = vcmp.eq.s32.totalorder %v104, 4
    %vm193 = vcmp.eq.s32.totalorder %v105, 4
    %vm194 = vcmp.eq.s32.totalorder %v106, 4
    %vm195 = vcmp.eq.s32.totalorder %v107, 4
    %vm196 = vcmp.eq.s32.totalorder %v108, 4
    %vm197 = vcmp.eq.s32.totalorder %v109, 4
    %vm198 = vcmp.eq.s32.totalorder %v110, 4
    %s199 = sld [smem:[#allocation7 + $0x4]]
    %v200 = vstv %s199
    %v201 = vsel %vm191, %v200, %v183
    %v202 = vsel %vm192, %v200, %v184
    %v203 = vsel %vm193, %v200, %v185
    %v204 = vsel %vm194, %v200, %v186
    %v205 = vsel %vm195, %v200, %v187
    %v206 = vsel %vm196, %v200, %v188
    %v207 = vsel %vm197, %v200, %v189
    %v208 = vsel %vm198, %v200, %v190
    %vm209 = vcmp.eq.s32.totalorder %v103, 5
    %vm210 = vcmp.eq.s32.totalorder %v104, 5
    %vm211 = vcmp.eq.s32.totalorder %v105, 5
    %vm212 = vcmp.eq.s32.totalorder %v106, 5
    %vm213 = vcmp.eq.s32.totalorder %v107, 5
    %vm214 = vcmp.eq.s32.totalorder %v108, 5
    %vm215 = vcmp.eq.s32.totalorder %v109, 5
    %vm216 = vcmp.eq.s32.totalorder %v110, 5
    %s217 = sld [smem:[#allocation7 + $0x5]]
    %v218 = vstv %s217
    %v219 = vsel %vm209, %v218, %v201
    %v220 = vsel %vm210, %v218, %v202
    %v221 = vsel %vm211, %v218, %v203
    %v222 = vsel %vm212, %v218, %v204
    %v223 = vsel %vm213, %v218, %v205
    %v224 = vsel %vm214, %v218, %v206
    %v225 = vsel %vm215, %v218, %v207
    %v226 = vsel %vm216, %v218, %v208
    %vm227 = vcmp.eq.s32.totalorder %v103, 6
    %vm228 = vcmp.eq.s32.totalorder %v104, 6
    %vm229 = vcmp.eq.s32.totalorder %v105, 6
    %vm230 = vcmp.eq.s32.totalorder %v106, 6
    %vm231 = vcmp.eq.s32.totalorder %v107, 6
    %vm232 = vcmp.eq.s32.totalorder %v108, 6
    %vm233 = vcmp.eq.s32.totalorder %v109, 6
    %vm234 = vcmp.eq.s32.totalorder %v110, 6
    %s235 = sld [smem:[#allocation7 + $0x6]]
    %v236 = vstv %s235
    %v237 = vsel %vm227, %v236, %v219
    %v238 = vsel %vm228, %v236, %v220
    %v239 = vsel %vm229, %v236, %v221
    %v240 = vsel %vm230, %v236, %v222
    %v241 = vsel %vm231, %v236, %v223
    %v242 = vsel %vm232, %v236, %v224
    %v243 = vsel %vm233, %v236, %v225
    %v244 = vsel %vm234, %v236, %v226
    %vm245 = vcmp.eq.s32.totalorder %v103, 7
    %vm246 = vcmp.eq.s32.totalorder %v104, 7
    %vm247 = vcmp.eq.s32.totalorder %v105, 7
    %vm248 = vcmp.eq.s32.totalorder %v106, 7
    %vm249 = vcmp.eq.s32.totalorder %v107, 7
    %vm250 = vcmp.eq.s32.totalorder %v108, 7
    %vm251 = vcmp.eq.s32.totalorder %v109, 7
    %vm252 = vcmp.eq.s32.totalorder %v110, 7
    %s253 = sld [smem:[#allocation7 + $0x7]]
    %v254 = vstv %s253
    %v255 = vsel %vm245, %v254, %v237
    %v256 = vsel %vm246, %v254, %v238
    %v257 = vsel %vm247, %v254, %v239
    %v258 = vsel %vm248, %v254, %v240
    %v259 = vsel %vm249, %v254, %v241
    %v260 = vsel %vm250, %v254, %v242
    %v261 = vsel %vm251, %v254, %v243
    %v262 = vsel %vm252, %v254, %v244
    %vm263 = vcmp.lt.s32.totalorder %v111, %v255
    %vm264 = vcmp.lt.s32.totalorder %v112, %v256
    %vm265 = vcmp.lt.s32.totalorder %v113, %v257
    %vm266 = vcmp.lt.s32.totalorder %v114, %v258
    %vm267 = vcmp.lt.s32.totalorder %v115, %v259
    %vm268 = vcmp.lt.s32.totalorder %v116, %v260
    %vm269 = vcmp.lt.s32.totalorder %v117, %v261
    %vm270 = vcmp.lt.s32.totalorder %v118, %v262
    %v271 = vsel %vm263, 1, 0
    %v272 = vsel %vm264, 1, 0
    %v273 = vsel %vm265, 1, 0
    %v274 = vsel %vm266, 1, 0
    %v275 = vsel %vm267, 1, 0
    %v276 = vsel %vm268, 1, 0
    %v277 = vsel %vm269, 1, 0
    %v278 = vsel %vm270, 1, 0
    %v279 = vcvt.s32.f32 %v271
    %v280 = vcvt.s32.f32 %v272
    %v281 = vcvt.s32.f32 %v273
    %v282 = vcvt.s32.f32 %v274
    %v283 = vcvt.s32.f32 %v275
    %v284 = vcvt.s32.f32 %v276
    %v285 = vcvt.s32.f32 %v277
    %v286 = vcvt.s32.f32 %v278
    %vm287 = vcmask 7168
    %288 = vst.msk [vmem:[#allocation6] sm:$0xff] %vm287, %v279
    %289 = vst.msk [vmem:[#allocation6 + $0x8] sm:$0xff] %vm287, %v280
    %290 = vst.msk [vmem:[#allocation6 + $0x10] sm:$0xff] %vm287, %v281
    %291 = vst.msk [vmem:[#allocation6 + $0x18] sm:$0xff] %vm287, %v282
    %292 = vst.msk [vmem:[#allocation6 + $0x20] sm:$0xff] %vm287, %v283
    %293 = vst.msk [vmem:[#allocation6 + $0x28] sm:$0xff] %vm287, %v284
    %294 = vst.msk [vmem:[#allocation6 + $0x30] sm:$0xff] %vm287, %v285
    %295 = vst.msk [vmem:[#allocation6 + $0x38] sm:$0xff] %vm287, %v286
    %v296 = vld [vmem:[%s1] sm:$0xf]
    %v297 = vld [vmem:[%s1 + $0x4] sm:$0xf]
    %v298 = vld [vmem:[%s1 + $0x8] sm:$0xf]
    %v299 = vld [vmem:[%s1 + $0xc] sm:$0xf]
    %v300 = vld [vmem:[%s1 + $0x10] sm:$0xf]
    %v301 = vld [vmem:[%s1 + $0x14] sm:$0xf]
    %v302 = vld [vmem:[%s1 + $0x18] sm:$0xf]
    %v303 = vld [vmem:[%s1 + $0x1c] sm:$0xf]
    %v304 = vld [vmem:[%s3] sm:$0xff]
    %v305 = vld [vmem:[%s3 + $0x8] sm:$0xf]
    %v306 = vld [vmem:[%s3 + $0xc] sm:$0xff]
    %v307 = vld [vmem:[%s3 + $0x14] sm:$0xf]
    %v308 = vld [vmem:[%s3 + $0x18] sm:$0xff]
    %v309 = vld [vmem:[%s3 + $0x20] sm:$0xf]
    %v310 = vld [vmem:[%s3 + $0x24] sm:$0xff]
    %v311 = vld [vmem:[%s3 + $0x2c] sm:$0xf]
    %v312 = vld [vmem:[%s3 + $0x30] sm:$0xff]
    %v313 = vld [vmem:[%s3 + $0x38] sm:$0xf]
    %v314 = vld [vmem:[%s3 + $0x3c] sm:$0xff]
    %v315 = vld [vmem:[%s3 + $0x44] sm:$0xf]
    %v316 = vld [vmem:[%s3 + $0x48] sm:$0xff]
    %v317 = vld [vmem:[%s3 + $0x50] sm:$0xf]
    %v318 = vld [vmem:[%s3 + $0x54] sm:$0xff]
    %v319 = vld [vmem:[%s3 + $0x5c] sm:$0xf]
    %v320 = vld [vmem:[%s3 + $0x60] sm:$0xff]
    %v321 = vld [vmem:[%s3 + $0x68] sm:$0xf]
    %v322 = vld [vmem:[%s3 + $0x6c] sm:$0xff]
    %v323 = vld [vmem:[%s3 + $0x74] sm:$0xf]
    %v324 = vld [vmem:[%s3 + $0x78] sm:$0xff]
    %v325 = vld [vmem:[%s3 + $0x80] sm:$0xf]
    %v326 = vld [vmem:[%s3 + $0x84] sm:$0xff]
    %v327 = vld [vmem:[%s3 + $0x8c] sm:$0xf]
    %v328 = vld [vmem:[%s3 + $0x90] sm:$0xff]
    %v329 = vld [vmem:[%s3 + $0x98] sm:$0xf]
    %v330 = vld [vmem:[%s3 + $0x9c] sm:$0xff]
    %v331 = vld [vmem:[%s3 + $0xa4] sm:$0xf]
    %v332 = vld [vmem:[%s3 + $0xa8] sm:$0xff]
    %v333 = vld [vmem:[%s3 + $0xb0] sm:$0xf]
    %v334 = vld [vmem:[%s3 + $0xb4] sm:$0xff]
    %v335 = vld [vmem:[%s3 + $0xbc] sm:$0xf]
    %v336 = vld [vmem:[%s5] sm:$0x7]
    %v338 = vperm.slane %v336, 0
    %v339 = vperm.slane %v336, 1
    %v340 = vperm.slane %v336, 2
    %v352 = vunpack.c.l.b16 %v296
    %v353 = vunpack.c.l.b16 %v297
    %v354 = vunpack.c.l.b16 %v298
    %v355 = vunpack.c.l.b16 %v299
    %v356 = vunpack.c.l.b16 %v300
    %v357 = vunpack.c.l.b16 %v301
    %v358 = vunpack.c.l.b16 %v302
    %v359 = vunpack.c.l.b16 %v303
    %v360 = vpack.c.b16 %v353, %v352
    %v361 = vpack.c.b16 %v355, %v354
    %v362 = vpack.c.b16 %v357, %v356
    %v363 = vpack.c.b16 %v359, %v358
    %v400 = vunpack.c.l.b16 %v304
    %v401 = vunpack.c.h.b16 %v304
    %v402 = vunpack.c.l.b16 %v305
    %v403 = vunpack.c.l.b16 %v306
    %v404 = vunpack.c.h.b16 %v306
    %v405 = vunpack.c.l.b16 %v307
    %v406 = vunpack.c.l.b16 %v308
    %v407 = vunpack.c.h.b16 %v308
    %v408 = vunpack.c.l.b16 %v309
    %v409 = vunpack.c.l.b16 %v310
    %v410 = vunpack.c.h.b16 %v310
    %v411 = vunpack.c.l.b16 %v311
    %v412 = vunpack.c.l.b16 %v312
    %v413 = vunpack.c.h.b16 %v312
    %v414 = vunpack.c.l.b16 %v313
    %v415 = vunpack.c.l.b16 %v314
    %v416 = vunpack.c.h.b16 %v314
    %v417 = vunpack.c.l.b16 %v315
    %v418 = vunpack.c.l.b16 %v316
    %v419 = vunpack.c.h.b16 %v316
    %v420 = vunpack.c.l.b16 %v317
    %v421 = vunpack.c.l.b16 %v318
    %v422 = vunpack.c.h.b16 %v318
    %v423 = vunpack.c.l.b16 %v319
    %v424 = vunpack.c.l.b16 %v320
    %v425 = vunpack.c.h.b16 %v320
    %v426 = vunpack.c.l.b16 %v321
    %v427 = vunpack.c.l.b16 %v322
    %v428 = vunpack.c.h.b16 %v322
    %v429 = vunpack.c.l.b16 %v323
    %v430 = vunpack.c.l.b16 %v324
    %v431 = vunpack.c.h.b16 %v324
    %v432 = vunpack.c.l.b16 %v325
    %v433 = vunpack.c.l.b16 %v326
    %v434 = vunpack.c.h.b16 %v326
    %v435 = vunpack.c.l.b16 %v327
    %v436 = vunpack.c.l.b16 %v328
    %v437 = vunpack.c.h.b16 %v328
    %v438 = vunpack.c.l.b16 %v329
    %v439 = vunpack.c.l.b16 %v330
    %v440 = vunpack.c.h.b16 %v330
    %v441 = vunpack.c.l.b16 %v331
    %v442 = vunpack.c.l.b16 %v332
    %v443 = vunpack.c.h.b16 %v332
    %v444 = vunpack.c.l.b16 %v333
    %v445 = vunpack.c.l.b16 %v334
    %v446 = vunpack.c.h.b16 %v334
    %v447 = vunpack.c.l.b16 %v335
    %v448 = vpack.c.b16 %v403, %v400
    %v449 = vpack.c.b16 %v404, %v401
    %v450 = vpack.c.b16 %v405, %v402
    %v451 = vpack.c.b16 %v409, %v406
    %v452 = vpack.c.b16 %v410, %v407
    %v453 = vpack.c.b16 %v411, %v408
    %v454 = vpack.c.b16 %v415, %v412
    %v455 = vpack.c.b16 %v416, %v413
    %v456 = vpack.c.b16 %v417, %v414
    %v457 = vpack.c.b16 %v421, %v418
    %v458 = vpack.c.b16 %v422, %v419
    %v459 = vpack.c.b16 %v423, %v420
    %v460 = vpack.c.b16 %v427, %v424
    %v461 = vpack.c.b16 %v428, %v425
    %v462 = vpack.c.b16 %v429, %v426
    %v463 = vpack.c.b16 %v433, %v430
    %v464 = vpack.c.b16 %v434, %v431
    %v465 = vpack.c.b16 %v435, %v432
    %v466 = vpack.c.b16 %v439, %v436
    %v467 = vpack.c.b16 %v440, %v437
    %v468 = vpack.c.b16 %v441, %v438
    %v469 = vpack.c.b16 %v445, %v442
    %v470 = vpack.c.b16 %v446, %v443
    %v471 = vpack.c.b16 %v447, %v444
    %496 = vmatpush.bf16.msra.mxu0 %v469
    %497 = vmatpush.bf16.msra.mxu0 %v466
    %498 = vmatpush.bf16.msra.mxu0 %v463
    %499 = vmatpush.bf16.msra.mxu0 %v460
    %500 = vmatpush.bf16.msra.mxu0 %v457
    %501 = vmatpush.bf16.msra.mxu0 %v454
    %502 = vmatpush.bf16.msra.mxu0 %v451
    %503 = vmatpush.bf16.msra.mxu0 %v448
    %504 = vmatmul.bf16.gmra.mxu0 %v360
    %v505 = vpop.f32.mrf.mxu0
    %v506 = vadd.f32 %v338, %v505
    %v507 = vpop.f32.mrf.mxu0
    %v508 = vadd.f32 %v338, %v507
    %509 = vmatmul.bf16.gmra.mxu0 %v361
    %v510 = vpop.f32.mrf.mxu0
    %v511 = vadd.f32 %v338, %v510
    %v512 = vpop.f32.mrf.mxu0
    %v513 = vadd.f32 %v338, %v512
    %514 = vmatmul.bf16.gmra.mxu0 %v362
    %v515 = vpop.f32.mrf.mxu0
    %v516 = vadd.f32 %v338, %v515
    %v517 = vpop.f32.mrf.mxu0
    %v518 = vadd.f32 %v338, %v517
    %519 = vmatmul.bf16.gmra.mxu0 %v363
    %v520 = vpop.f32.mrf.mxu0
    %v521 = vadd.f32 %v338, %v520
    %v522 = vpop.f32.mrf.mxu0
    %v523 = vadd.f32 %v338, %v522
    %524 = vdwg.mxu0
    %525 = vmatpush.bf16.msra.mxu0 %v470
    %526 = vmatpush.bf16.msra.mxu0 %v467
    %527 = vmatpush.bf16.msra.mxu0 %v464
    %528 = vmatpush.bf16.msra.mxu0 %v461
    %529 = vmatpush.bf16.msra.mxu0 %v458
    %530 = vmatpush.bf16.msra.mxu0 %v455
    %531 = vmatpush.bf16.msra.mxu0 %v452
    %532 = vmatpush.bf16.msra.mxu0 %v449
    %533 = vmatmul.bf16.gmra.mxu0 %v360
    %v534 = vpop.f32.mrf.mxu0
    %v535 = vadd.f32 %v339, %v534
    %v536 = vpop.f32.mrf.mxu0
    %v537 = vadd.f32 %v339, %v536
    %538 = vmatmul.bf16.gmra.mxu0 %v361
    %v539 = vpop.f32.mrf.mxu0
    %v540 = vadd.f32 %v339, %v539
    %v541 = vpop.f32.mrf.mxu0
    %v542 = vadd.f32 %v339, %v541
    %543 = vmatmul.bf16.gmra.mxu0 %v362
    %v544 = vpop.f32.mrf.mxu0
    %v545 = vadd.f32 %v339, %v544
    %v546 = vpop.f32.mrf.mxu0
    %v547 = vadd.f32 %v339, %v546
    %548 = vmatmul.bf16.gmra.mxu0 %v363
    %v549 = vpop.f32.mrf.mxu0
    %v550 = vadd.f32 %v339, %v549
    %v551 = vpop.f32.mrf.mxu0
    %v552 = vadd.f32 %v339, %v551
    %553 = vdwg.mxu0
    %554 = vmatpush.bf16.msra.mxu0 %v471
    %555 = vmatpush.bf16.msra.mxu0 %v468
    %556 = vmatpush.bf16.msra.mxu0 %v465
    %557 = vmatpush.bf16.msra.mxu0 %v462
    %558 = vmatpush.bf16.msra.mxu0 %v459
    %559 = vmatpush.bf16.msra.mxu0 %v456
    %560 = vmatpush.bf16.msra.mxu0 %v453
    %561 = vmatpush.bf16.msra.mxu0 %v450
    %562 = vmatmul.bf16.gmra.mxu0 %v360
    %v563 = vpop.f32.mrf.mxu0
    %v564 = vadd.f32 %v340, %v563
    %v565 = vpop.f32.mrf.mxu0
    %v566 = vadd.f32 %v340, %v565
    %567 = vmatmul.bf16.gmra.mxu0 %v361
    %v568 = vpop.f32.mrf.mxu0
    %v569 = vadd.f32 %v340, %v568
    %v570 = vpop.f32.mrf.mxu0
    %v571 = vadd.f32 %v340, %v570
    %572 = vmatmul.bf16.gmra.mxu0 %v362
    %v573 = vpop.f32.mrf.mxu0
    %v574 = vadd.f32 %v340, %v573
    %v575 = vpop.f32.mrf.mxu0
    %v576 = vadd.f32 %v340, %v575
    %577 = vmatmul.bf16.gmra.mxu0 %v363
    %v578 = vpop.f32.mrf.mxu0
    %v579 = vadd.f32 %v340, %v578
    %v580 = vpop.f32.mrf.mxu0
    %v581 = vadd.f32 %v340, %v580
    %582 = vdwg.mxu0
    %583 = vst [vmem:[#allocation4] sm:$0xff] %v506
    %584 = vst [vmem:[#allocation4 + $0x8] sm:$0xff] %v535
    %585 = vst [vmem:[#allocation4 + $0x10] sm:$0xff] %v564
    %586 = vst [vmem:[#allocation4 + $0x18] sm:$0xff] %v508
    %587 = vst [vmem:[#allocation4 + $0x20] sm:$0xff] %v537
    %588 = vst [vmem:[#allocation4 + $0x28] sm:$0xff] %v566
    %589 = vst [vmem:[#allocation4 + $0x30] sm:$0xff] %v511
    %590 = vst [vmem:[#allocation4 + $0x38] sm:$0xff] %v540
    %591 = vst [vmem:[#allocation4 + $0x40] sm:$0xff] %v569
    %592 = vst [vmem:[#allocation4 + $0x48] sm:$0xff] %v513
    %593 = vst [vmem:[#allocation4 + $0x50] sm:$0xff] %v542
    %594 = vst [vmem:[#allocation4 + $0x58] sm:$0xff] %v571
    %595 = vst [vmem:[#allocation4 + $0x60] sm:$0xff] %v516
    %596 = vst [vmem:[#allocation4 + $0x68] sm:$0xff] %v545
    %597 = vst [vmem:[#allocation4 + $0x70] sm:$0xff] %v574
    %598 = vst [vmem:[#allocation4 + $0x78] sm:$0xff] %v518
    %599 = vst [vmem:[#allocation4 + $0x80] sm:$0xff] %v547
    %600 = vst [vmem:[#allocation4 + $0x88] sm:$0xff] %v576
    %601 = vst [vmem:[#allocation4 + $0x90] sm:$0xff] %v521
    %602 = vst [vmem:[#allocation4 + $0x98] sm:$0xff] %v550
    %603 = vst [vmem:[#allocation4 + $0xa0] sm:$0xff] %v579
    %604 = vst [vmem:[#allocation4 + $0xa8] sm:$0xff] %v523
    %605 = vst [vmem:[#allocation4 + $0xb0] sm:$0xff] %v552
    %606 = vst [vmem:[#allocation4 + $0xb8] sm:$0xff] %v581
    %v607 = vld [vmem:[%s4] sm:$0xff]
    %v608 = vld [vmem:[%s4 + $0x8] sm:$0xf]
    %v609 = vld [vmem:[%s4 + $0xc] sm:$0xff]
    %v610 = vld [vmem:[%s4 + $0x14] sm:$0xf]
    %v611 = vld [vmem:[%s4 + $0x18] sm:$0xff]
    %v612 = vld [vmem:[%s4 + $0x20] sm:$0xf]
    %v613 = vld [vmem:[%s4 + $0x24] sm:$0xff]
    %v614 = vld [vmem:[%s4 + $0x2c] sm:$0xf]
    %v615 = vld [vmem:[%s4 + $0x30] sm:$0xff]
    %v616 = vld [vmem:[%s4 + $0x38] sm:$0xf]
    %v617 = vld [vmem:[%s4 + $0x3c] sm:$0xff]
    %v618 = vld [vmem:[%s4 + $0x44] sm:$0xf]
    %v619 = vld [vmem:[%s4 + $0x48] sm:$0xff]
    %v620 = vld [vmem:[%s4 + $0x50] sm:$0xf]
    %v621 = vld [vmem:[%s4 + $0x54] sm:$0xff]
    %v622 = vld [vmem:[%s4 + $0x5c] sm:$0xf]
    %v623 = vld [vmem:[%s4 + $0x60] sm:$0xff]
    %v624 = vld [vmem:[%s4 + $0x68] sm:$0xf]
    %v625 = vld [vmem:[%s4 + $0x6c] sm:$0xff]
    %v626 = vld [vmem:[%s4 + $0x74] sm:$0xf]
    %v627 = vld [vmem:[%s4 + $0x78] sm:$0xff]
    %v628 = vld [vmem:[%s4 + $0x80] sm:$0xf]
    %v629 = vld [vmem:[%s4 + $0x84] sm:$0xff]
    %v630 = vld [vmem:[%s4 + $0x8c] sm:$0xf]
    %v631 = vld [vmem:[%s4 + $0x90] sm:$0xff]
    %v632 = vld [vmem:[%s4 + $0x98] sm:$0xf]
    %v633 = vld [vmem:[%s4 + $0x9c] sm:$0xff]
    %v634 = vld [vmem:[%s4 + $0xa4] sm:$0xf]
    %v635 = vld [vmem:[%s4 + $0xa8] sm:$0xff]
    %v636 = vld [vmem:[%s4 + $0xb0] sm:$0xf]
    %v637 = vld [vmem:[%s4 + $0xb4] sm:$0xff]
    %v638 = vld [vmem:[%s4 + $0xbc] sm:$0xf]
    %v639 = vld [vmem:[%s6] sm:$0x1]
    %v641 = vperm.slane %v639, 0
    %v643 = vld [vmem:[#allocation4] sm:$0xff]
    %v644 = vld [vmem:[#allocation4 + $0x8] sm:$0xff]
    %v645 = vld [vmem:[#allocation4 + $0x10] sm:$0xff]
    %v678 = vunpack.c.l.b16 %v607
    %v679 = vunpack.c.h.b16 %v607
    %v680 = vunpack.c.l.b16 %v608
    %v681 = vunpack.c.l.b16 %v609
    %v682 = vunpack.c.h.b16 %v609
    %v683 = vunpack.c.l.b16 %v610
    %v684 = vunpack.c.l.b16 %v611
    %v685 = vunpack.c.h.b16 %v611
    %v686 = vunpack.c.l.b16 %v612
    %v687 = vunpack.c.l.b16 %v613
    %v688 = vunpack.c.h.b16 %v613
    %v689 = vunpack.c.l.b16 %v614
    %v690 = vunpack.c.l.b16 %v615
    %v691 = vunpack.c.h.b16 %v615
    %v692 = vunpack.c.l.b16 %v616
    %v693 = vunpack.c.l.b16 %v617
    %v694 = vunpack.c.h.b16 %v617
    %v695 = vunpack.c.l.b16 %v618
    %v696 = vunpack.c.l.b16 %v619
    %v697 = vunpack.c.h.b16 %v619
    %v698 = vunpack.c.l.b16 %v620
    %v699 = vunpack.c.l.b16 %v621
    %v700 = vunpack.c.h.b16 %v621
    %v701 = vunpack.c.l.b16 %v622
    %v702 = vunpack.c.l.b16 %v623
    %v703 = vunpack.c.h.b16 %v623
    %v704 = vunpack.c.l.b16 %v624
    %v705 = vunpack.c.l.b16 %v625
    %v706 = vunpack.c.h.b16 %v625
    %v707 = vunpack.c.l.b16 %v626
    %v708 = vunpack.c.l.b16 %v627
    %v709 = vunpack.c.h.b16 %v627
    %v710 = vunpack.c.l.b16 %v628
    %v711 = vunpack.c.l.b16 %v629
    %v712 = vunpack.c.h.b16 %v629
    %v713 = vunpack.c.l.b16 %v630
    %v714 = vunpack.c.l.b16 %v631
    %v715 = vunpack.c.h.b16 %v631
    %v716 = vunpack.c.l.b16 %v632
    %v717 = vunpack.c.l.b16 %v633
    %v718 = vunpack.c.h.b16 %v633
    %v719 = vunpack.c.l.b16 %v634
    %v720 = vunpack.c.l.b16 %v635
    %v721 = vunpack.c.h.b16 %v635
    %v722 = vunpack.c.l.b16 %v636
    %v723 = vunpack.c.l.b16 %v637
    %v724 = vunpack.c.h.b16 %v637
    %v725 = vunpack.c.l.b16 %v638
    %v726 = vpack.c.b16 %v681, %v678
    %v727 = vpack.c.b16 %v682, %v679
    %v728 = vpack.c.b16 %v683, %v680
    %v729 = vpack.c.b16 %v687, %v684
    %v730 = vpack.c.b16 %v688, %v685
    %v731 = vpack.c.b16 %v689, %v686
    %v732 = vpack.c.b16 %v693, %v690
    %v733 = vpack.c.b16 %v694, %v691
    %v734 = vpack.c.b16 %v695, %v692
    %v735 = vpack.c.b16 %v699, %v696
    %v736 = vpack.c.b16 %v700, %v697
    %v737 = vpack.c.b16 %v701, %v698
    %v738 = vpack.c.b16 %v705, %v702
    %v739 = vpack.c.b16 %v706, %v703
    %v740 = vpack.c.b16 %v707, %v704
    %v741 = vpack.c.b16 %v711, %v708
    %v742 = vpack.c.b16 %v712, %v709
    %v743 = vpack.c.b16 %v713, %v710
    %v744 = vpack.c.b16 %v717, %v714
    %v745 = vpack.c.b16 %v718, %v715
    %v746 = vpack.c.b16 %v719, %v716
    %v747 = vpack.c.b16 %v723, %v720
    %v748 = vpack.c.b16 %v724, %v721
    %v749 = vpack.c.b16 %v725, %v722
    %774 = vmatpush.bf16.msra.mxu0 %v747
    %775 = vmatpush.bf16.msra.mxu0 %v744
    %776 = vmatpush.bf16.msra.mxu0 %v741
    %777 = vmatpush.bf16.msra.mxu0 %v738
    %778 = vmatpush.bf16.msra.mxu0 %v735
    %779 = vmatpush.bf16.msra.mxu0 %v732
    %780 = vmatpush.bf16.msra.mxu0 %v729
    %781 = vmatpush.bf16.msra.mxu0 %v726
    %782 = vmatmul.bf16.gmra.mxu0 0
    %v783 = vpop.f32.mrf.mxu0
    %v784 = vadd.f32 0.0, %v783
    %v785 = vpop.f32.mrf.mxu0
    %786 = vdwg.mxu0
    %787 = vmatpush.bf16.msra.mxu0 %v748
    %788 = vmatpush.bf16.msra.mxu0 %v745
    %789 = vmatpush.bf16.msra.mxu0 %v742
    %790 = vmatpush.bf16.msra.mxu0 %v739
    %791 = vmatpush.bf16.msra.mxu0 %v736
    %792 = vmatpush.bf16.msra.mxu0 %v733
    %793 = vmatpush.bf16.msra.mxu0 %v730
    %794 = vmatpush.bf16.msra.mxu0 %v727
    %795 = vmatmul.bf16.gmra.mxu0 0
    %v796 = vpop.f32.mrf.mxu0
    %v797 = vadd.f32 0.0, %v796
    %v798 = vpop.f32.mrf.mxu0
    %799 = vdwg.mxu0
    %800 = vmatpush.bf16.msra.mxu0 %v749
    %801 = vmatpush.bf16.msra.mxu0 %v746
    %802 = vmatpush.bf16.msra.mxu0 %v743
    %803 = vmatpush.bf16.msra.mxu0 %v740
    %804 = vmatpush.bf16.msra.mxu0 %v737
    %805 = vmatpush.bf16.msra.mxu0 %v734
    %806 = vmatpush.bf16.msra.mxu0 %v731
    %807 = vmatpush.bf16.msra.mxu0 %v728
    %808 = vmatmul.bf16.gmra.mxu0 0
    %v809 = vpop.f32.mrf.mxu0
    %v810 = vadd.f32 0.0, %v809
    %v811 = vpop.f32.mrf.mxu0
    %812 = vdwg.mxu0
    %v813 = vadd.f32 %v643, %v784
    %v814 = vadd.f32 %v644, %v797
    %v815 = vxor.u32 %v813, 2147483648
    %v816 = vxor.u32 %v814, 2147483648
    %v817 = vmul.f32 %v815, 1.442695
    %v818 = vpow.pop %v817
    %v819 = vmul.f32 %v816, 1.442695
    %v820 = vpow.pop %v819
    %v821 = vadd.f32 %v818, 1.0
    %v822 = vadd.f32 %v820, 1.0
    %v823 = vrcp.pop %v821
    %v824 = vmul.f32 %v821, %v823
    %v825 = vsub.f32 1.0, %v824
    %v826 = vmul.f32 %v823, %v825
    %v827 = vadd.f32 %v823, %v826
    %vm828 = vweird.f32 %v821
    %vm829 = vweird.f32 %v823
    %vm830 = vmor %vm828, %vm829
    %v831 = vsel %vm830, %v823, %v827
    %v832 = vand.u32 2147483647, %v821
    %vm833 = vcmp.eq.f32.partialorder %v832, 8.507059e+37
    %v834 = vand.u32 %v821, 2147483648
    %v835 = vor.u32 1.1754944e-38, %v834
    %v836 = vsel %vm833, %v835, %v831
    %v837 = vmul.f32 1.0, %v836
    %v838 = vrcp.pop %v822
    %v839 = vmul.f32 %v822, %v838
    %v840 = vsub.f32 1.0, %v839
    %v841 = vmul.f32 %v838, %v840
    %v842 = vadd.f32 %v838, %v841
    %vm843 = vweird.f32 %v822
    %vm844 = vweird.f32 %v838
    %vm845 = vmor %vm843, %vm844
    %v846 = vsel %vm845, %v838, %v842
    %v847 = vand.u32 2147483647, %v822
    %vm848 = vcmp.eq.f32.partialorder %v847, 8.507059e+37
    %v849 = vand.u32 %v822, 2147483648
    %v850 = vor.u32 1.1754944e-38, %v849
    %v851 = vsel %vm848, %v850, %v846
    %v852 = vmul.f32 1.0, %v851
    %v853 = vadd.f32 %v810, %v641
    %v854 = vmul.f32 %v837, %v853
    %v855 = vadd.f32 %v645, %v854
    %v856 = vtanh.pop %v855
    %v857 = vsub.f32 1.0, %v852
    %v858 = vmul.f32 %v857, %v856
    %v859 = vmul.f32 %v852, 0.0
    %v860 = vadd.f32 %v858, %v859
    %v861 = vld [vmem:[#allocation6] sm:$0xff]
    %863 = vset.pattern.permute.xlu0 0
    %864 = vperm.xlu0 %863, %v861
    %v865 = vpop.permute.xlu0 %864
    %v867 = vmul.f32 %v865, %v860
    %v868 = vsub.f32 1.0, %v861
    %870 = vset.pattern.permute.xlu0 0
    %871 = vperm.xlu0 %870, %v868
    %v872 = vpop.permute.xlu0 %871
    %v874 = vmul.f32 %v872, 0.0
    %v875 = vadd.f32 %v867, %v874
    %876 = vst [vmem:[#allocation2] sm:$0xff] %v875
    %v877 = vld [vmem:[#allocation4 + $0x18] sm:$0xff]
    %v878 = vld [vmem:[#allocation4 + $0x20] sm:$0xff]
    %v879 = vld [vmem:[#allocation4 + $0x28] sm:$0xff]
    %v880 = vpack.c.bf16 %v875, %v875
    %881 = vmatpush.bf16.msra.mxu0 %v747
    %882 = vmatpush.bf16.msra.mxu0 %v744
    %883 = vmatpush.bf16.msra.mxu0 %v741
    %884 = vmatpush.bf16.msra.mxu0 %v738
    %885 = vmatpush.bf16.msra.mxu0 %v735
    %886 = vmatpush.bf16.msra.mxu0 %v732
    %887 = vmatpush.bf16.msra.mxu0 %v729
    %888 = vmatpush.bf16.msra.mxu0 %v726
    %889 = vmatmul.bf16.gmra.mxu0 %v880
    %v890 = vpop.f32.mrf.mxu0
    %v891 = vadd.f32 0.0, %v890
    %v892 = vpop.f32.mrf.mxu0
    %893 = vdwg.mxu0
    %894 = vmatpush.bf16.msra.mxu0 %v748
    %895 = vmatpush.bf16.msra.mxu0 %v745
    %896 = vmatpush.bf16.msra.mxu0 %v742
    %897 = vmatpush.bf16.msra.mxu0 %v739
    %898 = vmatpush.bf16.msra.mxu0 %v736
    %899 = vmatpush.bf16.msra.mxu0 %v733
    %900 = vmatpush.bf16.msra.mxu0 %v730
    %901 = vmatpush.bf16.msra.mxu0 %v727
    %902 = vmatmul.bf16.gmra.mxu0 %v880
    %v903 = vpop.f32.mrf.mxu0
    %v904 = vadd.f32 0.0, %v903
    %v905 = vpop.f32.mrf.mxu0
    %906 = vdwg.mxu0
    %907 = vmatpush.bf16.msra.mxu0 %v749
    %908 = vmatpush.bf16.msra.mxu0 %v746
    %909 = vmatpush.bf16.msra.mxu0 %v743
    %910 = vmatpush.bf16.msra.mxu0 %v740
    %911 = vmatpush.bf16.msra.mxu0 %v737
    %912 = vmatpush.bf16.msra.mxu0 %v734
    %913 = vmatpush.bf16.msra.mxu0 %v731
    %914 = vmatpush.bf16.msra.mxu0 %v728
    %915 = vmatmul.bf16.gmra.mxu0 %v880
    %v916 = vpop.f32.mrf.mxu0
    %v917 = vadd.f32 0.0, %v916
    %v918 = vpop.f32.mrf.mxu0
    %919 = vdwg.mxu0
    %v920 = vadd.f32 %v877, %v891
    %v921 = vadd.f32 %v878, %v904
    %v922 = vxor.u32 %v920, 2147483648
    %v923 = vxor.u32 %v921, 2147483648
    %v924 = vmul.f32 %v922, 1.442695
    %v925 = vpow.pop %v924
    %v926 = vmul.f32 %v923, 1.442695
    %v927 = vpow.pop %v926
    %v928 = vadd.f32 %v925, 1.0
    %v929 = vadd.f32 %v927, 1.0
    %v930 = vrcp.pop %v928
    %v931 = vmul.f32 %v928, %v930
    %v932 = vsub.f32 1.0, %v931
    %v933 = vmul.f32 %v930, %v932
    %v934 = vadd.f32 %v930, %v933
    %vm935 = vweird.f32 %v928
    %vm936 = vweird.f32 %v930
    %vm937 = vmor %vm935, %vm936
    %v938 = vsel %vm937, %v930, %v934
    %v939 = vand.u32 2147483647, %v928
    %vm940 = vcmp.eq.f32.partialorder %v939, 8.507059e+37
    %v941 = vand.u32 %v928, 2147483648
    %v942 = vor.u32 1.1754944e-38, %v941
    %v943 = vsel %vm940, %v942, %v938
    %v944 = vmul.f32 1.0, %v943
    %v945 = vrcp.pop %v929
    %v946 = vmul.f32 %v929, %v945
    %v947 = vsub.f32 1.0, %v946
    %v948 = vmul.f32 %v945, %v947
    %v949 = vadd.f32 %v945, %v948
    %vm950 = vweird.f32 %v929
    %vm951 = vweird.f32 %v945
    %vm952 = vmor %vm950, %vm951
    %v953 = vsel %vm952, %v945, %v949
    %v954 = vand.u32 2147483647, %v929
    %vm955 = vcmp.eq.f32.partialorder %v954, 8.507059e+37
    %v956 = vand.u32 %v929, 2147483648
    %v957 = vor.u32 1.1754944e-38, %v956
    %v958 = vsel %vm955, %v957, %v953
    %v959 = vmul.f32 1.0, %v958
    %v960 = vadd.f32 %v917, %v641
    %v961 = vmul.f32 %v944, %v960
    %v962 = vadd.f32 %v879, %v961
    %v963 = vtanh.pop %v962
    %v964 = vsub.f32 1.0, %v959
    %v965 = vmul.f32 %v964, %v963
    %v966 = vmul.f32 %v959, %v875
    %v967 = vadd.f32 %v965, %v966
    %v968 = vld [vmem:[#allocation6 + $0x8] sm:$0xff]
    %970 = vset.pattern.permute.xlu0 0
    %971 = vperm.xlu0 %970, %v968
    %v972 = vpop.permute.xlu0 %971
    %v974 = vmul.f32 %v972, %v967
    %v975 = vsub.f32 1.0, %v968
    %977 = vset.pattern.permute.xlu0 0
    %978 = vperm.xlu0 %977, %v975
    %v979 = vpop.permute.xlu0 %978
    %v981 = vmul.f32 %v979, %v875
    %v982 = vadd.f32 %v974, %v981
    %983 = vst [vmem:[#allocation2 + $0x8] sm:$0xff] %v982
    %v984 = vld [vmem:[#allocation4 + $0x30] sm:$0xff]
    %v985 = vld [vmem:[#allocation4 + $0x38] sm:$0xff]
    %v986 = vld [vmem:[#allocation4 + $0x40] sm:$0xff]
    %v987 = vpack.c.bf16 %v982, %v982
    %988 = vmatpush.bf16.msra.mxu0 %v747
    %989 = vmatpush.bf16.msra.mxu0 %v744
    %990 = vmatpush.bf16.msra.mxu0 %v741
    %991 = vmatpush.bf16.msra.mxu0 %v738
    %992 = vmatpush.bf16.msra.mxu0 %v735
    %993 = vmatpush.bf16.msra.mxu0 %v732
    %994 = vmatpush.bf16.msra.mxu0 %v729
    %995 = vmatpush.bf16.msra.mxu0 %v726
    %996 = vmatmul.bf16.gmra.mxu0 %v987
    %v997 = vpop.f32.mrf.mxu0
    %v998 = vadd.f32 0.0, %v997
    %v999 = vpop.f32.mrf.mxu0
    %1000 = vdwg.mxu0
    %1001 = vmatpush.bf16.msra.mxu0 %v748
    %1002 = vmatpush.bf16.msra.mxu0 %v745
    %1003 = vmatpush.bf16.msra.mxu0 %v742
    %1004 = vmatpush.bf16.msra.mxu0 %v739
    %1005 = vmatpush.bf16.msra.mxu0 %v736
    %1006 = vmatpush.bf16.msra.mxu0 %v733
    %1007 = vmatpush.bf16.msra.mxu0 %v730
    %1008 = vmatpush.bf16.msra.mxu0 %v727
    %1009 = vmatmul.bf16.gmra.mxu0 %v987
    %v1010 = vpop.f32.mrf.mxu0
    %v1011 = vadd.f32 0.0, %v1010
    %v1012 = vpop.f32.mrf.mxu0
    %1013 = vdwg.mxu0
    %1014 = vmatpush.bf16.msra.mxu0 %v749
    %1015 = vmatpush.bf16.msra.mxu0 %v746
    %1016 = vmatpush.bf16.msra.mxu0 %v743
    %1017 = vmatpush.bf16.msra.mxu0 %v740
    %1018 = vmatpush.bf16.msra.mxu0 %v737
    %1019 = vmatpush.bf16.msra.mxu0 %v734
    %1020 = vmatpush.bf16.msra.mxu0 %v731
    %1021 = vmatpush.bf16.msra.mxu0 %v728
    %1022 = vmatmul.bf16.gmra.mxu0 %v987
    %v1023 = vpop.f32.mrf.mxu0
    %v1024 = vadd.f32 0.0, %v1023
    %v1025 = vpop.f32.mrf.mxu0
    %1026 = vdwg.mxu0
    %v1027 = vadd.f32 %v984, %v998
    %v1028 = vadd.f32 %v985, %v1011
    %v1029 = vxor.u32 %v1027, 2147483648
    %v1030 = vxor.u32 %v1028, 2147483648
    %v1031 = vmul.f32 %v1029, 1.442695
    %v1032 = vpow.pop %v1031
    %v1033 = vmul.f32 %v1030, 1.442695
    %v1034 = vpow.pop %v1033
    %v1035 = vadd.f32 %v1032, 1.0
    %v1036 = vadd.f32 %v1034, 1.0
    %v1037 = vrcp.pop %v1035
    %v1038 = vmul.f32 %v1035, %v1037
    %v1039 = vsub.f32 1.0, %v1038
    %v1040 = vmul.f32 %v1037, %v1039
    %v1041 = vadd.f32 %v1037, %v1040
    %vm1042 = vweird.f32 %v1035
    %vm1043 = vweird.f32 %v1037
    %vm1044 = vmor %vm1042, %vm1043
    %v1045 = vsel %vm1044, %v1037, %v1041
    %v1046 = vand.u32 2147483647, %v1035
    %vm1047 = vcmp.eq.f32.partialorder %v1046, 8.507059e+37
    %v1048 = vand.u32 %v1035, 2147483648
    %v1049 = vor.u32 1.1754944e-38, %v1048
    %v1050 = vsel %vm1047, %v1049, %v1045
    %v1051 = vmul.f32 1.0, %v1050
    %v1052 = vrcp.pop %v1036
    %v1053 = vmul.f32 %v1036, %v1052
    %v1054 = vsub.f32 1.0, %v1053
    %v1055 = vmul.f32 %v1052, %v1054
    %v1056 = vadd.f32 %v1052, %v1055
    %vm1057 = vweird.f32 %v1036
    %vm1058 = vweird.f32 %v1052
    %vm1059 = vmor %vm1057, %vm1058
    %v1060 = vsel %vm1059, %v1052, %v1056
    %v1061 = vand.u32 2147483647, %v1036
    %vm1062 = vcmp.eq.f32.partialorder %v1061, 8.507059e+37
    %v1063 = vand.u32 %v1036, 2147483648
    %v1064 = vor.u32 1.1754944e-38, %v1063
    %v1065 = vsel %vm1062, %v1064, %v1060
    %v1066 = vmul.f32 1.0, %v1065
    %v1067 = vadd.f32 %v1024, %v641
    %v1068 = vmul.f32 %v1051, %v1067
    %v1069 = vadd.f32 %v986, %v1068
    %v1070 = vtanh.pop %v1069
    %v1071 = vsub.f32 1.0, %v1066
    %v1072 = vmul.f32 %v1071, %v1070
    %v1073 = vmul.f32 %v1066, %v982
    %v1074 = vadd.f32 %v1072, %v1073
    %v1075 = vld [vmem:[#allocation6 + $0x10] sm:$0xff]
    %1077 = vset.pattern.permute.xlu0 0
    %1078 = vperm.xlu0 %1077, %v1075
    %v1079 = vpop.permute.xlu0 %1078
    %v1081 = vmul.f32 %v1079, %v1074
    %v1082 = vsub.f32 1.0, %v1075
    %1084 = vset.pattern.permute.xlu0 0
    %1085 = vperm.xlu0 %1084, %v1082
    %v1086 = vpop.permute.xlu0 %1085
    %v1088 = vmul.f32 %v1086, %v982
    %v1089 = vadd.f32 %v1081, %v1088
    %1090 = vst [vmem:[#allocation2 + $0x10] sm:$0xff] %v1089
    %v1091 = vld [vmem:[#allocation4 + $0x48] sm:$0xff]
    %v1092 = vld [vmem:[#allocation4 + $0x50] sm:$0xff]
    %v1093 = vld [vmem:[#allocation4 + $0x58] sm:$0xff]
    %v1094 = vpack.c.bf16 %v1089, %v1089
    %1095 = vmatpush.bf16.msra.mxu0 %v747
    %1096 = vmatpush.bf16.msra.mxu0 %v744
    %1097 = vmatpush.bf16.msra.mxu0 %v741
    %1098 = vmatpush.bf16.msra.mxu0 %v738
    %1099 = vmatpush.bf16.msra.mxu0 %v735
    %1100 = vmatpush.bf16.msra.mxu0 %v732
    %1101 = vmatpush.bf16.msra.mxu0 %v729
    %1102 = vmatpush.bf16.msra.mxu0 %v726
    %1103 = vmatmul.bf16.gmra.mxu0 %v1094
    %v1104 = vpop.f32.mrf.mxu0
    %v1105 = vadd.f32 0.0, %v1104
    %v1106 = vpop.f32.mrf.mxu0
    %1107 = vdwg.mxu0
    %1108 = vmatpush.bf16.msra.mxu0 %v748
    %1109 = vmatpush.bf16.msra.mxu0 %v745
    %1110 = vmatpush.bf16.msra.mxu0 %v742
    %1111 = vmatpush.bf16.msra.mxu0 %v739
    %1112 = vmatpush.bf16.msra.mxu0 %v736
    %1113 = vmatpush.bf16.msra.mxu0 %v733
    %1114 = vmatpush.bf16.msra.mxu0 %v730
    %1115 = vmatpush.bf16.msra.mxu0 %v727
    %1116 = vmatmul.bf16.gmra.mxu0 %v1094
    %v1117 = vpop.f32.mrf.mxu0
    %v1118 = vadd.f32 0.0, %v1117
    %v1119 = vpop.f32.mrf.mxu0
    %1120 = vdwg.mxu0
    %1121 = vmatpush.bf16.msra.mxu0 %v749
    %1122 = vmatpush.bf16.msra.mxu0 %v746
    %1123 = vmatpush.bf16.msra.mxu0 %v743
    %1124 = vmatpush.bf16.msra.mxu0 %v740
    %1125 = vmatpush.bf16.msra.mxu0 %v737
    %1126 = vmatpush.bf16.msra.mxu0 %v734
    %1127 = vmatpush.bf16.msra.mxu0 %v731
    %1128 = vmatpush.bf16.msra.mxu0 %v728
    %1129 = vmatmul.bf16.gmra.mxu0 %v1094
    %v1130 = vpop.f32.mrf.mxu0
    %v1131 = vadd.f32 0.0, %v1130
    %v1132 = vpop.f32.mrf.mxu0
    %1133 = vdwg.mxu0
    %v1134 = vadd.f32 %v1091, %v1105
    %v1135 = vadd.f32 %v1092, %v1118
    %v1136 = vxor.u32 %v1134, 2147483648
    %v1137 = vxor.u32 %v1135, 2147483648
    %v1138 = vmul.f32 %v1136, 1.442695
    %v1139 = vpow.pop %v1138
    %v1140 = vmul.f32 %v1137, 1.442695
    %v1141 = vpow.pop %v1140
    %v1142 = vadd.f32 %v1139, 1.0
    %v1143 = vadd.f32 %v1141, 1.0
    %v1144 = vrcp.pop %v1142
    %v1145 = vmul.f32 %v1142, %v1144
    %v1146 = vsub.f32 1.0, %v1145
    %v1147 = vmul.f32 %v1144, %v1146
    %v1148 = vadd.f32 %v1144, %v1147
    %vm1149 = vweird.f32 %v1142
    %vm1150 = vweird.f32 %v1144
    %vm1151 = vmor %vm1149, %vm1150
    %v1152 = vsel %vm1151, %v1144, %v1148
    %v1153 = vand.u32 2147483647, %v1142
    %vm1154 = vcmp.eq.f32.partialorder %v1153, 8.507059e+37
    %v1155 = vand.u32 %v1142, 2147483648
    %v1156 = vor.u32 1.1754944e-38, %v1155
    %v1157 = vsel %vm1154, %v1156, %v1152
    %v1158 = vmul.f32 1.0, %v1157
    %v1159 = vrcp.pop %v1143
    %v1160 = vmul.f32 %v1143, %v1159
    %v1161 = vsub.f32 1.0, %v1160
    %v1162 = vmul.f32 %v1159, %v1161
    %v1163 = vadd.f32 %v1159, %v1162
    %vm1164 = vweird.f32 %v1143
    %vm1165 = vweird.f32 %v1159
    %vm1166 = vmor %vm1164, %vm1165
    %v1167 = vsel %vm1166, %v1159, %v1163
    %v1168 = vand.u32 2147483647, %v1143
    %vm1169 = vcmp.eq.f32.partialorder %v1168, 8.507059e+37
    %v1170 = vand.u32 %v1143, 2147483648
    %v1171 = vor.u32 1.1754944e-38, %v1170
    %v1172 = vsel %vm1169, %v1171, %v1167
    %v1173 = vmul.f32 1.0, %v1172
    %v1174 = vadd.f32 %v1131, %v641
    %v1175 = vmul.f32 %v1158, %v1174
    %v1176 = vadd.f32 %v1093, %v1175
    %v1177 = vtanh.pop %v1176
    %v1178 = vsub.f32 1.0, %v1173
    %v1179 = vmul.f32 %v1178, %v1177
    %v1180 = vmul.f32 %v1173, %v1089
    %v1181 = vadd.f32 %v1179, %v1180
    %v1182 = vld [vmem:[#allocation6 + $0x18] sm:$0xff]
    %1184 = vset.pattern.permute.xlu0 0
    %1185 = vperm.xlu0 %1184, %v1182
    %v1186 = vpop.permute.xlu0 %1185
    %v1188 = vmul.f32 %v1186, %v1181
    %v1189 = vsub.f32 1.0, %v1182
    %1191 = vset.pattern.permute.xlu0 0
    %1192 = vperm.xlu0 %1191, %v1189
    %v1193 = vpop.permute.xlu0 %1192
    %v1195 = vmul.f32 %v1193, %v1089
    %v1196 = vadd.f32 %v1188, %v1195
    %1197 = vst [vmem:[#allocation2 + $0x18] sm:$0xff] %v1196
    %v1198 = vld [vmem:[#allocation4 + $0x60] sm:$0xff]
    %v1199 = vld [vmem:[#allocation4 + $0x68] sm:$0xff]
    %v1200 = vld [vmem:[#allocation4 + $0x70] sm:$0xff]
    %v1201 = vpack.c.bf16 %v1196, %v1196
    %1202 = vmatpush.bf16.msra.mxu0 %v747
    %1203 = vmatpush.bf16.msra.mxu0 %v744
    %1204 = vmatpush.bf16.msra.mxu0 %v741
    %1205 = vmatpush.bf16.msra.mxu0 %v738
    %1206 = vmatpush.bf16.msra.mxu0 %v735
    %1207 = vmatpush.bf16.msra.mxu0 %v732
    %1208 = vmatpush.bf16.msra.mxu0 %v729
    %1209 = vmatpush.bf16.msra.mxu0 %v726
    %1210 = vmatmul.bf16.gmra.mxu0 %v1201
    %v1211 = vpop.f32.mrf.mxu0
    %v1212 = vadd.f32 0.0, %v1211
    %v1213 = vpop.f32.mrf.mxu0
    %1214 = vdwg.mxu0
    %1215 = vmatpush.bf16.msra.mxu0 %v748
    %1216 = vmatpush.bf16.msra.mxu0 %v745
    %1217 = vmatpush.bf16.msra.mxu0 %v742
    %1218 = vmatpush.bf16.msra.mxu0 %v739
    %1219 = vmatpush.bf16.msra.mxu0 %v736
    %1220 = vmatpush.bf16.msra.mxu0 %v733
    %1221 = vmatpush.bf16.msra.mxu0 %v730
    %1222 = vmatpush.bf16.msra.mxu0 %v727
    %1223 = vmatmul.bf16.gmra.mxu0 %v1201
    %v1224 = vpop.f32.mrf.mxu0
    %v1225 = vadd.f32 0.0, %v1224
    %v1226 = vpop.f32.mrf.mxu0
    %1227 = vdwg.mxu0
    %1228 = vmatpush.bf16.msra.mxu0 %v749
    %1229 = vmatpush.bf16.msra.mxu0 %v746
    %1230 = vmatpush.bf16.msra.mxu0 %v743
    %1231 = vmatpush.bf16.msra.mxu0 %v740
    %1232 = vmatpush.bf16.msra.mxu0 %v737
    %1233 = vmatpush.bf16.msra.mxu0 %v734
    %1234 = vmatpush.bf16.msra.mxu0 %v731
    %1235 = vmatpush.bf16.msra.mxu0 %v728
    %1236 = vmatmul.bf16.gmra.mxu0 %v1201
    %v1237 = vpop.f32.mrf.mxu0
    %v1238 = vadd.f32 0.0, %v1237
    %v1239 = vpop.f32.mrf.mxu0
    %1240 = vdwg.mxu0
    %v1241 = vadd.f32 %v1198, %v1212
    %v1242 = vadd.f32 %v1199, %v1225
    %v1243 = vxor.u32 %v1241, 2147483648
    %v1244 = vxor.u32 %v1242, 2147483648
    %v1245 = vmul.f32 %v1243, 1.442695
    %v1246 = vpow.pop %v1245
    %v1247 = vmul.f32 %v1244, 1.442695
    %v1248 = vpow.pop %v1247
    %v1249 = vadd.f32 %v1246, 1.0
    %v1250 = vadd.f32 %v1248, 1.0
    %v1251 = vrcp.pop %v1249
    %v1252 = vmul.f32 %v1249, %v1251
    %v1253 = vsub.f32 1.0, %v1252
    %v1254 = vmul.f32 %v1251, %v1253
    %v1255 = vadd.f32 %v1251, %v1254
    %vm1256 = vweird.f32 %v1249
    %vm1257 = vweird.f32 %v1251
    %vm1258 = vmor %vm1256, %vm1257
    %v1259 = vsel %vm1258, %v1251, %v1255
    %v1260 = vand.u32 2147483647, %v1249
    %vm1261 = vcmp.eq.f32.partialorder %v1260, 8.507059e+37
    %v1262 = vand.u32 %v1249, 2147483648
    %v1263 = vor.u32 1.1754944e-38, %v1262
    %v1264 = vsel %vm1261, %v1263, %v1259
    %v1265 = vmul.f32 1.0, %v1264
    %v1266 = vrcp.pop %v1250
    %v1267 = vmul.f32 %v1250, %v1266
    %v1268 = vsub.f32 1.0, %v1267
    %v1269 = vmul.f32 %v1266, %v1268
    %v1270 = vadd.f32 %v1266, %v1269
    %vm1271 = vweird.f32 %v1250
    %vm1272 = vweird.f32 %v1266
    %vm1273 = vmor %vm1271, %vm1272
    %v1274 = vsel %vm1273, %v1266, %v1270
    %v1275 = vand.u32 2147483647, %v1250
    %vm1276 = vcmp.eq.f32.partialorder %v1275, 8.507059e+37
    %v1277 = vand.u32 %v1250, 2147483648
    %v1278 = vor.u32 1.1754944e-38, %v1277
    %v1279 = vsel %vm1276, %v1278, %v1274
    %v1280 = vmul.f32 1.0, %v1279
    %v1281 = vadd.f32 %v1238, %v641
    %v1282 = vmul.f32 %v1265, %v1281
    %v1283 = vadd.f32 %v1200, %v1282
    %v1284 = vtanh.pop %v1283
    %v1285 = vsub.f32 1.0, %v1280
    %v1286 = vmul.f32 %v1285, %v1284
    %v1287 = vmul.f32 %v1280, %v1196
    %v1288 = vadd.f32 %v1286, %v1287
    %v1289 = vld [vmem:[#allocation6 + $0x20] sm:$0xff]
    %1291 = vset.pattern.permute.xlu0 0
    %1292 = vperm.xlu0 %1291, %v1289
    %v1293 = vpop.permute.xlu0 %1292
    %v1295 = vmul.f32 %v1293, %v1288
    %v1296 = vsub.f32 1.0, %v1289
    %1298 = vset.pattern.permute.xlu0 0
    %1299 = vperm.xlu0 %1298, %v1296
    %v1300 = vpop.permute.xlu0 %1299
    %v1302 = vmul.f32 %v1300, %v1196
    %v1303 = vadd.f32 %v1295, %v1302
    %1304 = vst [vmem:[#allocation2 + $0x20] sm:$0xff] %v1303
    %v1305 = vld [vmem:[#allocation4 + $0x78] sm:$0xff]
    %v1306 = vld [vmem:[#allocation4 + $0x80] sm:$0xff]
    %v1307 = vld [vmem:[#allocation4 + $0x88] sm:$0xff]
    %v1308 = vpack.c.bf16 %v1303, %v1303
    %1309 = vmatpush.bf16.msra.mxu0 %v747
    %1310 = vmatpush.bf16.msra.mxu0 %v744
    %1311 = vmatpush.bf16.msra.mxu0 %v741
    %1312 = vmatpush.bf16.msra.mxu0 %v738
    %1313 = vmatpush.bf16.msra.mxu0 %v735
    %1314 = vmatpush.bf16.msra.mxu0 %v732
    %1315 = vmatpush.bf16.msra.mxu0 %v729
    %1316 = vmatpush.bf16.msra.mxu0 %v726
    %1317 = vmatmul.bf16.gmra.mxu0 %v1308
    %v1318 = vpop.f32.mrf.mxu0
    %v1319 = vadd.f32 0.0, %v1318
    %v1320 = vpop.f32.mrf.mxu0
    %1321 = vdwg.mxu0
    %1322 = vmatpush.bf16.msra.mxu0 %v748
    %1323 = vmatpush.bf16.msra.mxu0 %v745
    %1324 = vmatpush.bf16.msra.mxu0 %v742
    %1325 = vmatpush.bf16.msra.mxu0 %v739
    %1326 = vmatpush.bf16.msra.mxu0 %v736
    %1327 = vmatpush.bf16.msra.mxu0 %v733
    %1328 = vmatpush.bf16.msra.mxu0 %v730
    %1329 = vmatpush.bf16.msra.mxu0 %v727
    %1330 = vmatmul.bf16.gmra.mxu0 %v1308
    %v1331 = vpop.f32.mrf.mxu0
    %v1332 = vadd.f32 0.0, %v1331
    %v1333 = vpop.f32.mrf.mxu0
    %1334 = vdwg.mxu0
    %1335 = vmatpush.bf16.msra.mxu0 %v749
    %1336 = vmatpush.bf16.msra.mxu0 %v746
    %1337 = vmatpush.bf16.msra.mxu0 %v743
    %1338 = vmatpush.bf16.msra.mxu0 %v740
    %1339 = vmatpush.bf16.msra.mxu0 %v737
    %1340 = vmatpush.bf16.msra.mxu0 %v734
    %1341 = vmatpush.bf16.msra.mxu0 %v731
    %1342 = vmatpush.bf16.msra.mxu0 %v728
    %1343 = vmatmul.bf16.gmra.mxu0 %v1308
    %v1344 = vpop.f32.mrf.mxu0
    %v1345 = vadd.f32 0.0, %v1344
    %v1346 = vpop.f32.mrf.mxu0
    %1347 = vdwg.mxu0
    %v1348 = vadd.f32 %v1305, %v1319
    %v1349 = vadd.f32 %v1306, %v1332
    %v1350 = vxor.u32 %v1348, 2147483648
    %v1351 = vxor.u32 %v1349, 2147483648
    %v1352 = vmul.f32 %v1350, 1.442695
    %v1353 = vpow.pop %v1352
    %v1354 = vmul.f32 %v1351, 1.442695
    %v1355 = vpow.pop %v1354
    %v1356 = vadd.f32 %v1353, 1.0
    %v1357 = vadd.f32 %v1355, 1.0
    %v1358 = vrcp.pop %v1356
    %v1359 = vmul.f32 %v1356, %v1358
    %v1360 = vsub.f32 1.0, %v1359
    %v1361 = vmul.f32 %v1358, %v1360
    %v1362 = vadd.f32 %v1358, %v1361
    %vm1363 = vweird.f32 %v1356
    %vm1364 = vweird.f32 %v1358
    %vm1365 = vmor %vm1363, %vm1364
    %v1366 = vsel %vm1365, %v1358, %v1362
    %v1367 = vand.u32 2147483647, %v1356
    %vm1368 = vcmp.eq.f32.partialorder %v1367, 8.507059e+37
    %v1369 = vand.u32 %v1356, 2147483648
    %v1370 = vor.u32 1.1754944e-38, %v1369
    %v1371 = vsel %vm1368, %v1370, %v1366
    %v1372 = vmul.f32 1.0, %v1371
    %v1373 = vrcp.pop %v1357
    %v1374 = vmul.f32 %v1357, %v1373
    %v1375 = vsub.f32 1.0, %v1374
    %v1376 = vmul.f32 %v1373, %v1375
    %v1377 = vadd.f32 %v1373, %v1376
    %vm1378 = vweird.f32 %v1357
    %vm1379 = vweird.f32 %v1373
    %vm1380 = vmor %vm1378, %vm1379
    %v1381 = vsel %vm1380, %v1373, %v1377
    %v1382 = vand.u32 2147483647, %v1357
    %vm1383 = vcmp.eq.f32.partialorder %v1382, 8.507059e+37
    %v1384 = vand.u32 %v1357, 2147483648
    %v1385 = vor.u32 1.1754944e-38, %v1384
    %v1386 = vsel %vm1383, %v1385, %v1381
    %v1387 = vmul.f32 1.0, %v1386
    %v1388 = vadd.f32 %v1345, %v641
    %v1389 = vmul.f32 %v1372, %v1388
    %v1390 = vadd.f32 %v1307, %v1389
    %v1391 = vtanh.pop %v1390
    %v1392 = vsub.f32 1.0, %v1387
    %v1393 = vmul.f32 %v1392, %v1391
    %v1394 = vmul.f32 %v1387, %v1303
    %v1395 = vadd.f32 %v1393, %v1394
    %v1396 = vld [vmem:[#allocation6 + $0x28] sm:$0xff]
    %1398 = vset.pattern.permute.xlu0 0
    %1399 = vperm.xlu0 %1398, %v1396
    %v1400 = vpop.permute.xlu0 %1399
    %v1402 = vmul.f32 %v1400, %v1395
    %v1403 = vsub.f32 1.0, %v1396
    %1405 = vset.pattern.permute.xlu0 0
    %1406 = vperm.xlu0 %1405, %v1403
    %v1407 = vpop.permute.xlu0 %1406
    %v1409 = vmul.f32 %v1407, %v1303
    %v1410 = vadd.f32 %v1402, %v1409
    %1411 = vst [vmem:[#allocation2 + $0x28] sm:$0xff] %v1410
    %v1412 = vld [vmem:[#allocation4 + $0x90] sm:$0xff]
    %v1413 = vld [vmem:[#allocation4 + $0x98] sm:$0xff]
    %v1414 = vld [vmem:[#allocation4 + $0xa0] sm:$0xff]
    %v1415 = vpack.c.bf16 %v1410, %v1410
    %1416 = vmatpush.bf16.msra.mxu0 %v747
    %1417 = vmatpush.bf16.msra.mxu0 %v744
    %1418 = vmatpush.bf16.msra.mxu0 %v741
    %1419 = vmatpush.bf16.msra.mxu0 %v738
    %1420 = vmatpush.bf16.msra.mxu0 %v735
    %1421 = vmatpush.bf16.msra.mxu0 %v732
    %1422 = vmatpush.bf16.msra.mxu0 %v729
    %1423 = vmatpush.bf16.msra.mxu0 %v726
    %1424 = vmatmul.bf16.gmra.mxu0 %v1415
    %v1425 = vpop.f32.mrf.mxu0
    %v1426 = vadd.f32 0.0, %v1425
    %v1427 = vpop.f32.mrf.mxu0
    %1428 = vdwg.mxu0
    %1429 = vmatpush.bf16.msra.mxu0 %v748
    %1430 = vmatpush.bf16.msra.mxu0 %v745
    %1431 = vmatpush.bf16.msra.mxu0 %v742
    %1432 = vmatpush.bf16.msra.mxu0 %v739
    %1433 = vmatpush.bf16.msra.mxu0 %v736
    %1434 = vmatpush.bf16.msra.mxu0 %v733
    %1435 = vmatpush.bf16.msra.mxu0 %v730
    %1436 = vmatpush.bf16.msra.mxu0 %v727
    %1437 = vmatmul.bf16.gmra.mxu0 %v1415
    %v1438 = vpop.f32.mrf.mxu0
    %v1439 = vadd.f32 0.0, %v1438
    %v1440 = vpop.f32.mrf.mxu0
    %1441 = vdwg.mxu0
    %1442 = vmatpush.bf16.msra.mxu0 %v749
    %1443 = vmatpush.bf16.msra.mxu0 %v746
    %1444 = vmatpush.bf16.msra.mxu0 %v743
    %1445 = vmatpush.bf16.msra.mxu0 %v740
    %1446 = vmatpush.bf16.msra.mxu0 %v737
    %1447 = vmatpush.bf16.msra.mxu0 %v734
    %1448 = vmatpush.bf16.msra.mxu0 %v731
    %1449 = vmatpush.bf16.msra.mxu0 %v728
    %1450 = vmatmul.bf16.gmra.mxu0 %v1415
    %v1451 = vpop.f32.mrf.mxu0
    %v1452 = vadd.f32 0.0, %v1451
    %v1453 = vpop.f32.mrf.mxu0
    %1454 = vdwg.mxu0
    %v1455 = vadd.f32 %v1412, %v1426
    %v1456 = vadd.f32 %v1413, %v1439
    %v1457 = vxor.u32 %v1455, 2147483648
    %v1458 = vxor.u32 %v1456, 2147483648
    %v1459 = vmul.f32 %v1457, 1.442695
    %v1460 = vpow.pop %v1459
    %v1461 = vmul.f32 %v1458, 1.442695
    %v1462 = vpow.pop %v1461
    %v1463 = vadd.f32 %v1460, 1.0
    %v1464 = vadd.f32 %v1462, 1.0
    %v1465 = vrcp.pop %v1463
    %v1466 = vmul.f32 %v1463, %v1465
    %v1467 = vsub.f32 1.0, %v1466
    %v1468 = vmul.f32 %v1465, %v1467
    %v1469 = vadd.f32 %v1465, %v1468
    %vm1470 = vweird.f32 %v1463
    %vm1471 = vweird.f32 %v1465
    %vm1472 = vmor %vm1470, %vm1471
    %v1473 = vsel %vm1472, %v1465, %v1469
    %v1474 = vand.u32 2147483647, %v1463
    %vm1475 = vcmp.eq.f32.partialorder %v1474, 8.507059e+37
    %v1476 = vand.u32 %v1463, 2147483648
    %v1477 = vor.u32 1.1754944e-38, %v1476
    %v1478 = vsel %vm1475, %v1477, %v1473
    %v1479 = vmul.f32 1.0, %v1478
    %v1480 = vrcp.pop %v1464
    %v1481 = vmul.f32 %v1464, %v1480
    %v1482 = vsub.f32 1.0, %v1481
    %v1483 = vmul.f32 %v1480, %v1482
    %v1484 = vadd.f32 %v1480, %v1483
    %vm1485 = vweird.f32 %v1464
    %vm1486 = vweird.f32 %v1480
    %vm1487 = vmor %vm1485, %vm1486
    %v1488 = vsel %vm1487, %v1480, %v1484
    %v1489 = vand.u32 2147483647, %v1464
    %vm1490 = vcmp.eq.f32.partialorder %v1489, 8.507059e+37
    %v1491 = vand.u32 %v1464, 2147483648
    %v1492 = vor.u32 1.1754944e-38, %v1491
    %v1493 = vsel %vm1490, %v1492, %v1488
    %v1494 = vmul.f32 1.0, %v1493
    %v1495 = vadd.f32 %v1452, %v641
    %v1496 = vmul.f32 %v1479, %v1495
    %v1497 = vadd.f32 %v1414, %v1496
    %v1498 = vtanh.pop %v1497
    %v1499 = vsub.f32 1.0, %v1494
    %v1500 = vmul.f32 %v1499, %v1498
    %v1501 = vmul.f32 %v1494, %v1410
    %v1502 = vadd.f32 %v1500, %v1501
    %v1503 = vld [vmem:[#allocation6 + $0x30] sm:$0xff]
    %1505 = vset.pattern.permute.xlu0 0
    %1506 = vperm.xlu0 %1505, %v1503
    %v1507 = vpop.permute.xlu0 %1506
    %v1509 = vmul.f32 %v1507, %v1502
    %v1510 = vsub.f32 1.0, %v1503
    %1512 = vset.pattern.permute.xlu0 0
    %1513 = vperm.xlu0 %1512, %v1510
    %v1514 = vpop.permute.xlu0 %1513
    %v1516 = vmul.f32 %v1514, %v1410
    %v1517 = vadd.f32 %v1509, %v1516
    %1518 = vst [vmem:[#allocation2 + $0x30] sm:$0xff] %v1517
    %v1519 = vld [vmem:[#allocation4 + $0xa8] sm:$0xff]
    %v1520 = vld [vmem:[#allocation4 + $0xb0] sm:$0xff]
    %v1521 = vld [vmem:[#allocation4 + $0xb8] sm:$0xff]
    %v1522 = vpack.c.bf16 %v1517, %v1517
    %1523 = vmatpush.bf16.msra.mxu0 %v747
    %1524 = vmatpush.bf16.msra.mxu0 %v744
    %1525 = vmatpush.bf16.msra.mxu0 %v741
    %1526 = vmatpush.bf16.msra.mxu0 %v738
    %1527 = vmatpush.bf16.msra.mxu0 %v735
    %1528 = vmatpush.bf16.msra.mxu0 %v732
    %1529 = vmatpush.bf16.msra.mxu0 %v729
    %1530 = vmatpush.bf16.msra.mxu0 %v726
    %1531 = vmatmul.bf16.gmra.mxu0 %v1522
    %v1532 = vpop.f32.mrf.mxu0
    %v1533 = vadd.f32 0.0, %v1532
    %v1534 = vpop.f32.mrf.mxu0
    %1535 = vdwg.mxu0
    %1536 = vmatpush.bf16.msra.mxu0 %v748
    %1537 = vmatpush.bf16.msra.mxu0 %v745
    %1538 = vmatpush.bf16.msra.mxu0 %v742
    %1539 = vmatpush.bf16.msra.mxu0 %v739
    %1540 = vmatpush.bf16.msra.mxu0 %v736
    %1541 = vmatpush.bf16.msra.mxu0 %v733
    %1542 = vmatpush.bf16.msra.mxu0 %v730
    %1543 = vmatpush.bf16.msra.mxu0 %v727
    %1544 = vmatmul.bf16.gmra.mxu0 %v1522
    %v1545 = vpop.f32.mrf.mxu0
    %v1546 = vadd.f32 0.0, %v1545
    %v1547 = vpop.f32.mrf.mxu0
    %1548 = vdwg.mxu0
    %1549 = vmatpush.bf16.msra.mxu0 %v749
    %1550 = vmatpush.bf16.msra.mxu0 %v746
    %1551 = vmatpush.bf16.msra.mxu0 %v743
    %1552 = vmatpush.bf16.msra.mxu0 %v740
    %1553 = vmatpush.bf16.msra.mxu0 %v737
    %1554 = vmatpush.bf16.msra.mxu0 %v734
    %1555 = vmatpush.bf16.msra.mxu0 %v731
    %1556 = vmatpush.bf16.msra.mxu0 %v728
    %1557 = vmatmul.bf16.gmra.mxu0 %v1522
    %v1558 = vpop.f32.mrf.mxu0
    %v1559 = vadd.f32 0.0, %v1558
    %v1560 = vpop.f32.mrf.mxu0
    %1561 = vdwg.mxu0
    %v1562 = vadd.f32 %v1519, %v1533
    %v1563 = vadd.f32 %v1520, %v1546
    %v1564 = vxor.u32 %v1562, 2147483648
    %v1565 = vxor.u32 %v1563, 2147483648
    %v1566 = vmul.f32 %v1564, 1.442695
    %v1567 = vpow.pop %v1566
    %v1568 = vmul.f32 %v1565, 1.442695
    %v1569 = vpow.pop %v1568
    %v1570 = vadd.f32 %v1567, 1.0
    %v1571 = vadd.f32 %v1569, 1.0
    %v1572 = vrcp.pop %v1570
    %v1573 = vmul.f32 %v1570, %v1572
    %v1574 = vsub.f32 1.0, %v1573
    %v1575 = vmul.f32 %v1572, %v1574
    %v1576 = vadd.f32 %v1572, %v1575
    %vm1577 = vweird.f32 %v1570
    %vm1578 = vweird.f32 %v1572
    %vm1579 = vmor %vm1577, %vm1578
    %v1580 = vsel %vm1579, %v1572, %v1576
    %v1581 = vand.u32 2147483647, %v1570
    %vm1582 = vcmp.eq.f32.partialorder %v1581, 8.507059e+37
    %v1583 = vand.u32 %v1570, 2147483648
    %v1584 = vor.u32 1.1754944e-38, %v1583
    %v1585 = vsel %vm1582, %v1584, %v1580
    %v1586 = vmul.f32 1.0, %v1585
    %v1587 = vrcp.pop %v1571
    %v1588 = vmul.f32 %v1571, %v1587
    %v1589 = vsub.f32 1.0, %v1588
    %v1590 = vmul.f32 %v1587, %v1589
    %v1591 = vadd.f32 %v1587, %v1590
    %vm1592 = vweird.f32 %v1571
    %vm1593 = vweird.f32 %v1587
    %vm1594 = vmor %vm1592, %vm1593
    %v1595 = vsel %vm1594, %v1587, %v1591
    %v1596 = vand.u32 2147483647, %v1571
    %vm1597 = vcmp.eq.f32.partialorder %v1596, 8.507059e+37
    %v1598 = vand.u32 %v1571, 2147483648
    %v1599 = vor.u32 1.1754944e-38, %v1598
    %v1600 = vsel %vm1597, %v1599, %v1595
    %v1601 = vmul.f32 1.0, %v1600
    %v1602 = vadd.f32 %v1559, %v641
    %v1603 = vmul.f32 %v1586, %v1602
    %v1604 = vadd.f32 %v1521, %v1603
    %v1605 = vtanh.pop %v1604
    %v1606 = vsub.f32 1.0, %v1601
    %v1607 = vmul.f32 %v1606, %v1605
    %v1608 = vmul.f32 %v1601, %v1517
    %v1609 = vadd.f32 %v1607, %v1608
    %v1610 = vld [vmem:[#allocation6 + $0x38] sm:$0xff]
    %1612 = vset.pattern.permute.xlu0 0
    %1613 = vperm.xlu0 %1612, %v1610
    %v1614 = vpop.permute.xlu0 %1613
    %v1616 = vmul.f32 %v1614, %v1609
    %v1617 = vsub.f32 1.0, %v1610
    %1619 = vset.pattern.permute.xlu0 0
    %1620 = vperm.xlu0 %1619, %v1617
    %v1621 = vpop.permute.xlu0 %1620
    %v1623 = vmul.f32 %v1621, %v1517
    %v1624 = vadd.f32 %v1616, %v1623
    %1625 = vst [vmem:[#allocation2 + $0x38] sm:$0xff] %v1624
    %v1626 = vld [vmem:[%s2] sm:$0xf]
    %v1627 = vld [vmem:[%s2 + $0x4] sm:$0xf]
    %v1628 = vld [vmem:[%s2 + $0x8] sm:$0xf]
    %v1629 = vld [vmem:[%s2 + $0xc] sm:$0xf]
    %v1630 = vld [vmem:[%s2 + $0x10] sm:$0xf]
    %v1631 = vld [vmem:[%s2 + $0x14] sm:$0xf]
    %v1632 = vld [vmem:[%s2 + $0x18] sm:$0xf]
    %v1633 = vld [vmem:[%s2 + $0x1c] sm:$0xf]
    %v1634 = vld [vmem:[%s7] sm:$0xff]
    %v1635 = vld [vmem:[%s7 + $0x8] sm:$0xf]
    %v1636 = vld [vmem:[%s7 + $0xc] sm:$0xff]
    %v1637 = vld [vmem:[%s7 + $0x14] sm:$0xf]
    %v1638 = vld [vmem:[%s7 + $0x18] sm:$0xff]
    %v1639 = vld [vmem:[%s7 + $0x20] sm:$0xf]
    %v1640 = vld [vmem:[%s7 + $0x24] sm:$0xff]
    %v1641 = vld [vmem:[%s7 + $0x2c] sm:$0xf]
    %v1642 = vld [vmem:[%s7 + $0x30] sm:$0xff]
    %v1643 = vld [vmem:[%s7 + $0x38] sm:$0xf]
    %v1644 = vld [vmem:[%s7 + $0x3c] sm:$0xff]
    %v1645 = vld [vmem:[%s7 + $0x44] sm:$0xf]
    %v1646 = vld [vmem:[%s7 + $0x48] sm:$0xff]
    %v1647 = vld [vmem:[%s7 + $0x50] sm:$0xf]
    %v1648 = vld [vmem:[%s7 + $0x54] sm:$0xff]
    %v1649 = vld [vmem:[%s7 + $0x5c] sm:$0xf]
    %v1650 = vld [vmem:[%s7 + $0x60] sm:$0xff]
    %v1651 = vld [vmem:[%s7 + $0x68] sm:$0xf]
    %v1652 = vld [vmem:[%s7 + $0x6c] sm:$0xff]
    %v1653 = vld [vmem:[%s7 + $0x74] sm:$0xf]
    %v1654 = vld [vmem:[%s7 + $0x78] sm:$0xff]
    %v1655 = vld [vmem:[%s7 + $0x80] sm:$0xf]
    %v1656 = vld [vmem:[%s7 + $0x84] sm:$0xff]
    %v1657 = vld [vmem:[%s7 + $0x8c] sm:$0xf]
    %v1658 = vld [vmem:[%s7 + $0x90] sm:$0xff]
    %v1659 = vld [vmem:[%s7 + $0x98] sm:$0xf]
    %v1660 = vld [vmem:[%s7 + $0x9c] sm:$0xff]
    %v1661 = vld [vmem:[%s7 + $0xa4] sm:$0xf]
    %v1662 = vld [vmem:[%s7 + $0xa8] sm:$0xff]
    %v1663 = vld [vmem:[%s7 + $0xb0] sm:$0xf]
    %v1664 = vld [vmem:[%s7 + $0xb4] sm:$0xff]
    %v1665 = vld [vmem:[%s7 + $0xbc] sm:$0xf]
    %v1666 = vld [vmem:[%s9] sm:$0x7]
    %v1668 = vperm.slane %v1666, 0
    %v1669 = vperm.slane %v1666, 1
    %v1670 = vperm.slane %v1666, 2
    %v1682 = vunpack.c.l.b16 %v1626
    %v1683 = vunpack.c.l.b16 %v1627
    %v1684 = vunpack.c.l.b16 %v1628
    %v1685 = vunpack.c.l.b16 %v1629
    %v1686 = vunpack.c.l.b16 %v1630
    %v1687 = vunpack.c.l.b16 %v1631
    %v1688 = vunpack.c.l.b16 %v1632
    %v1689 = vunpack.c.l.b16 %v1633
    %v1690 = vpack.c.b16 %v1683, %v1682
    %v1691 = vpack.c.b16 %v1685, %v1684
    %v1692 = vpack.c.b16 %v1687, %v1686
    %v1693 = vpack.c.b16 %v1689, %v1688
    %v1730 = vunpack.c.l.b16 %v1634
    %v1731 = vunpack.c.h.b16 %v1634
    %v1732 = vunpack.c.l.b16 %v1635
    %v1733 = vunpack.c.l.b16 %v1636
    %v1734 = vunpack.c.h.b16 %v1636
    %v1735 = vunpack.c.l.b16 %v1637
    %v1736 = vunpack.c.l.b16 %v1638
    %v1737 = vunpack.c.h.b16 %v1638
    %v1738 = vunpack.c.l.b16 %v1639
    %v1739 = vunpack.c.l.b16 %v1640
    %v1740 = vunpack.c.h.b16 %v1640
    %v1741 = vunpack.c.l.b16 %v1641
    %v1742 = vunpack.c.l.b16 %v1642
    %v1743 = vunpack.c.h.b16 %v1642
    %v1744 = vunpack.c.l.b16 %v1643
    %v1745 = vunpack.c.l.b16 %v1644
    %v1746 = vunpack.c.h.b16 %v1644
    %v1747 = vunpack.c.l.b16 %v1645
    %v1748 = vunpack.c.l.b16 %v1646
    %v1749 = vunpack.c.h.b16 %v1646
    %v1750 = vunpack.c.l.b16 %v1647
    %v1751 = vunpack.c.l.b16 %v1648
    %v1752 = vunpack.c.h.b16 %v1648
    %v1753 = vunpack.c.l.b16 %v1649
    %v1754 = vunpack.c.l.b16 %v1650
    %v1755 = vunpack.c.h.b16 %v1650
    %v1756 = vunpack.c.l.b16 %v1651
    %v1757 = vunpack.c.l.b16 %v1652
    %v1758 = vunpack.c.h.b16 %v1652
    %v1759 = vunpack.c.l.b16 %v1653
    %v1760 = vunpack.c.l.b16 %v1654
    %v1761 = vunpack.c.h.b16 %v1654
    %v1762 = vunpack.c.l.b16 %v1655
    %v1763 = vunpack.c.l.b16 %v1656
    %v1764 = vunpack.c.h.b16 %v1656
    %v1765 = vunpack.c.l.b16 %v1657
    %v1766 = vunpack.c.l.b16 %v1658
    %v1767 = vunpack.c.h.b16 %v1658
    %v1768 = vunpack.c.l.b16 %v1659
    %v1769 = vunpack.c.l.b16 %v1660
    %v1770 = vunpack.c.h.b16 %v1660
    %v1771 = vunpack.c.l.b16 %v1661
    %v1772 = vunpack.c.l.b16 %v1662
    %v1773 = vunpack.c.h.b16 %v1662
    %v1774 = vunpack.c.l.b16 %v1663
    %v1775 = vunpack.c.l.b16 %v1664
    %v1776 = vunpack.c.h.b16 %v1664
    %v1777 = vunpack.c.l.b16 %v1665
    %v1778 = vpack.c.b16 %v1733, %v1730
    %v1779 = vpack.c.b16 %v1734, %v1731
    %v1780 = vpack.c.b16 %v1735, %v1732
    %v1781 = vpack.c.b16 %v1739, %v1736
    %v1782 = vpack.c.b16 %v1740, %v1737
    %v1783 = vpack.c.b16 %v1741, %v1738
    %v1784 = vpack.c.b16 %v1745, %v1742
    %v1785 = vpack.c.b16 %v1746, %v1743
    %v1786 = vpack.c.b16 %v1747, %v1744
    %v1787 = vpack.c.b16 %v1751, %v1748
    %v1788 = vpack.c.b16 %v1752, %v1749
    %v1789 = vpack.c.b16 %v1753, %v1750
    %v1790 = vpack.c.b16 %v1757, %v1754
    %v1791 = vpack.c.b16 %v1758, %v1755
    %v1792 = vpack.c.b16 %v1759, %v1756
    %v1793 = vpack.c.b16 %v1763, %v1760
    %v1794 = vpack.c.b16 %v1764, %v1761
    %v1795 = vpack.c.b16 %v1765, %v1762
    %v1796 = vpack.c.b16 %v1769, %v1766
    %v1797 = vpack.c.b16 %v1770, %v1767
    %v1798 = vpack.c.b16 %v1771, %v1768
    %v1799 = vpack.c.b16 %v1775, %v1772
    %v1800 = vpack.c.b16 %v1776, %v1773
    %v1801 = vpack.c.b16 %v1777, %v1774
    %1826 = vmatpush.bf16.msra.mxu0 %v1799
    %1827 = vmatpush.bf16.msra.mxu0 %v1796
    %1828 = vmatpush.bf16.msra.mxu0 %v1793
    %1829 = vmatpush.bf16.msra.mxu0 %v1790
    %1830 = vmatpush.bf16.msra.mxu0 %v1787
    %1831 = vmatpush.bf16.msra.mxu0 %v1784
    %1832 = vmatpush.bf16.msra.mxu0 %v1781
    %1833 = vmatpush.bf16.msra.mxu0 %v1778
    %1834 = vmatmul.bf16.gmra.mxu0 %v1690
    %v1835 = vpop.f32.mrf.mxu0
    %v1836 = vadd.f32 %v1668, %v1835
    %v1837 = vpop.f32.mrf.mxu0
    %v1838 = vadd.f32 %v1668, %v1837
    %1839 = vmatmul.bf16.gmra.mxu0 %v1691
    %v1840 = vpop.f32.mrf.mxu0
    %v1841 = vadd.f32 %v1668, %v1840
    %v1842 = vpop.f32.mrf.mxu0
    %v1843 = vadd.f32 %v1668, %v1842
    %1844 = vmatmul.bf16.gmra.mxu0 %v1692
    %v1845 = vpop.f32.mrf.mxu0
    %v1846 = vadd.f32 %v1668, %v1845
    %v1847 = vpop.f32.mrf.mxu0
    %v1848 = vadd.f32 %v1668, %v1847
    %1849 = vmatmul.bf16.gmra.mxu0 %v1693
    %v1850 = vpop.f32.mrf.mxu0
    %v1851 = vadd.f32 %v1668, %v1850
    %v1852 = vpop.f32.mrf.mxu0
    %v1853 = vadd.f32 %v1668, %v1852
    %1854 = vdwg.mxu0
    %1855 = vmatpush.bf16.msra.mxu0 %v1800
    %1856 = vmatpush.bf16.msra.mxu0 %v1797
    %1857 = vmatpush.bf16.msra.mxu0 %v1794
    %1858 = vmatpush.bf16.msra.mxu0 %v1791
    %1859 = vmatpush.bf16.msra.mxu0 %v1788
    %1860 = vmatpush.bf16.msra.mxu0 %v1785
    %1861 = vmatpush.bf16.msra.mxu0 %v1782
    %1862 = vmatpush.bf16.msra.mxu0 %v1779
    %1863 = vmatmul.bf16.gmra.mxu0 %v1690
    %v1864 = vpop.f32.mrf.mxu0
    %v1865 = vadd.f32 %v1669, %v1864
    %v1866 = vpop.f32.mrf.mxu0
    %v1867 = vadd.f32 %v1669, %v1866
    %1868 = vmatmul.bf16.gmra.mxu0 %v1691
    %v1869 = vpop.f32.mrf.mxu0
    %v1870 = vadd.f32 %v1669, %v1869
    %v1871 = vpop.f32.mrf.mxu0
    %v1872 = vadd.f32 %v1669, %v1871
    %1873 = vmatmul.bf16.gmra.mxu0 %v1692
    %v1874 = vpop.f32.mrf.mxu0
    %v1875 = vadd.f32 %v1669, %v1874
    %v1876 = vpop.f32.mrf.mxu0
    %v1877 = vadd.f32 %v1669, %v1876
    %1878 = vmatmul.bf16.gmra.mxu0 %v1693
    %v1879 = vpop.f32.mrf.mxu0
    %v1880 = vadd.f32 %v1669, %v1879
    %v1881 = vpop.f32.mrf.mxu0
    %v1882 = vadd.f32 %v1669, %v1881
    %1883 = vdwg.mxu0
    %1884 = vmatpush.bf16.msra.mxu0 %v1801
    %1885 = vmatpush.bf16.msra.mxu0 %v1798
    %1886 = vmatpush.bf16.msra.mxu0 %v1795
    %1887 = vmatpush.bf16.msra.mxu0 %v1792
    %1888 = vmatpush.bf16.msra.mxu0 %v1789
    %1889 = vmatpush.bf16.msra.mxu0 %v1786
    %1890 = vmatpush.bf16.msra.mxu0 %v1783
    %1891 = vmatpush.bf16.msra.mxu0 %v1780
    %1892 = vmatmul.bf16.gmra.mxu0 %v1690
    %v1893 = vpop.f32.mrf.mxu0
    %v1894 = vadd.f32 %v1670, %v1893
    %v1895 = vpop.f32.mrf.mxu0
    %v1896 = vadd.f32 %v1670, %v1895
    %1897 = vmatmul.bf16.gmra.mxu0 %v1691
    %v1898 = vpop.f32.mrf.mxu0
    %v1899 = vadd.f32 %v1670, %v1898
    %v1900 = vpop.f32.mrf.mxu0
    %v1901 = vadd.f32 %v1670, %v1900
    %1902 = vmatmul.bf16.gmra.mxu0 %v1692
    %v1903 = vpop.f32.mrf.mxu0
    %v1904 = vadd.f32 %v1670, %v1903
    %v1905 = vpop.f32.mrf.mxu0
    %v1906 = vadd.f32 %v1670, %v1905
    %1907 = vmatmul.bf16.gmra.mxu0 %v1693
    %v1908 = vpop.f32.mrf.mxu0
    %v1909 = vadd.f32 %v1670, %v1908
    %v1910 = vpop.f32.mrf.mxu0
    %v1911 = vadd.f32 %v1670, %v1910
    %1912 = vdwg.mxu0
    %1913 = vst [vmem:[#allocation5] sm:$0xff] %v1836
    %1914 = vst [vmem:[#allocation5 + $0x8] sm:$0xff] %v1865
    %1915 = vst [vmem:[#allocation5 + $0x10] sm:$0xff] %v1894
    %1916 = vst [vmem:[#allocation5 + $0x18] sm:$0xff] %v1838
    %1917 = vst [vmem:[#allocation5 + $0x20] sm:$0xff] %v1867
    %1918 = vst [vmem:[#allocation5 + $0x28] sm:$0xff] %v1896
    %1919 = vst [vmem:[#allocation5 + $0x30] sm:$0xff] %v1841
    %1920 = vst [vmem:[#allocation5 + $0x38] sm:$0xff] %v1870
    %1921 = vst [vmem:[#allocation5 + $0x40] sm:$0xff] %v1899
    %1922 = vst [vmem:[#allocation5 + $0x48] sm:$0xff] %v1843
    %1923 = vst [vmem:[#allocation5 + $0x50] sm:$0xff] %v1872
    %1924 = vst [vmem:[#allocation5 + $0x58] sm:$0xff] %v1901
    %1925 = vst [vmem:[#allocation5 + $0x60] sm:$0xff] %v1846
    %1926 = vst [vmem:[#allocation5 + $0x68] sm:$0xff] %v1875
    %1927 = vst [vmem:[#allocation5 + $0x70] sm:$0xff] %v1904
    %1928 = vst [vmem:[#allocation5 + $0x78] sm:$0xff] %v1848
    %1929 = vst [vmem:[#allocation5 + $0x80] sm:$0xff] %v1877
    %1930 = vst [vmem:[#allocation5 + $0x88] sm:$0xff] %v1906
    %1931 = vst [vmem:[#allocation5 + $0x90] sm:$0xff] %v1851
    %1932 = vst [vmem:[#allocation5 + $0x98] sm:$0xff] %v1880
    %1933 = vst [vmem:[#allocation5 + $0xa0] sm:$0xff] %v1909
    %1934 = vst [vmem:[#allocation5 + $0xa8] sm:$0xff] %v1853
    %1935 = vst [vmem:[#allocation5 + $0xb0] sm:$0xff] %v1882
    %1936 = vst [vmem:[#allocation5 + $0xb8] sm:$0xff] %v1911
    %v1937 = vld [vmem:[%s8] sm:$0xff]
    %v1938 = vld [vmem:[%s8 + $0x8] sm:$0xf]
    %v1939 = vld [vmem:[%s8 + $0xc] sm:$0xff]
    %v1940 = vld [vmem:[%s8 + $0x14] sm:$0xf]
    %v1941 = vld [vmem:[%s8 + $0x18] sm:$0xff]
    %v1942 = vld [vmem:[%s8 + $0x20] sm:$0xf]
    %v1943 = vld [vmem:[%s8 + $0x24] sm:$0xff]
    %v1944 = vld [vmem:[%s8 + $0x2c] sm:$0xf]
    %v1945 = vld [vmem:[%s8 + $0x30] sm:$0xff]
    %v1946 = vld [vmem:[%s8 + $0x38] sm:$0xf]
    %v1947 = vld [vmem:[%s8 + $0x3c] sm:$0xff]
    %v1948 = vld [vmem:[%s8 + $0x44] sm:$0xf]
    %v1949 = vld [vmem:[%s8 + $0x48] sm:$0xff]
    %v1950 = vld [vmem:[%s8 + $0x50] sm:$0xf]
    %v1951 = vld [vmem:[%s8 + $0x54] sm:$0xff]
    %v1952 = vld [vmem:[%s8 + $0x5c] sm:$0xf]
    %v1953 = vld [vmem:[%s8 + $0x60] sm:$0xff]
    %v1954 = vld [vmem:[%s8 + $0x68] sm:$0xf]
    %v1955 = vld [vmem:[%s8 + $0x6c] sm:$0xff]
    %v1956 = vld [vmem:[%s8 + $0x74] sm:$0xf]
    %v1957 = vld [vmem:[%s8 + $0x78] sm:$0xff]
    %v1958 = vld [vmem:[%s8 + $0x80] sm:$0xf]
    %v1959 = vld [vmem:[%s8 + $0x84] sm:$0xff]
    %v1960 = vld [vmem:[%s8 + $0x8c] sm:$0xf]
    %v1961 = vld [vmem:[%s8 + $0x90] sm:$0xff]
    %v1962 = vld [vmem:[%s8 + $0x98] sm:$0xf]
    %v1963 = vld [vmem:[%s8 + $0x9c] sm:$0xff]
    %v1964 = vld [vmem:[%s8 + $0xa4] sm:$0xf]
    %v1965 = vld [vmem:[%s8 + $0xa8] sm:$0xff]
    %v1966 = vld [vmem:[%s8 + $0xb0] sm:$0xf]
    %v1967 = vld [vmem:[%s8 + $0xb4] sm:$0xff]
    %v1968 = vld [vmem:[%s8 + $0xbc] sm:$0xf]
    %v1969 = vld [vmem:[%s10] sm:$0x1]
    %v1971 = vperm.slane %v1969, 0
    %v1973 = vld [vmem:[#allocation5] sm:$0xff]
    %v1974 = vld [vmem:[#allocation5 + $0x8] sm:$0xff]
    %v1975 = vld [vmem:[#allocation5 + $0x10] sm:$0xff]
    %v1976 = vpack.c.bf16 %v1624, %v1624
    %v2009 = vunpack.c.l.b16 %v1937
    %v2010 = vunpack.c.h.b16 %v1937
    %v2011 = vunpack.c.l.b16 %v1938
    %v2012 = vunpack.c.l.b16 %v1939
    %v2013 = vunpack.c.h.b16 %v1939
    %v2014 = vunpack.c.l.b16 %v1940
    %v2015 = vunpack.c.l.b16 %v1941
    %v2016 = vunpack.c.h.b16 %v1941
    %v2017 = vunpack.c.l.b16 %v1942
    %v2018 = vunpack.c.l.b16 %v1943
    %v2019 = vunpack.c.h.b16 %v1943
    %v2020 = vunpack.c.l.b16 %v1944
    %v2021 = vunpack.c.l.b16 %v1945
    %v2022 = vunpack.c.h.b16 %v1945
    %v2023 = vunpack.c.l.b16 %v1946
    %v2024 = vunpack.c.l.b16 %v1947
    %v2025 = vunpack.c.h.b16 %v1947
    %v2026 = vunpack.c.l.b16 %v1948
    %v2027 = vunpack.c.l.b16 %v1949
    %v2028 = vunpack.c.h.b16 %v1949
    %v2029 = vunpack.c.l.b16 %v1950
    %v2030 = vunpack.c.l.b16 %v1951
    %v2031 = vunpack.c.h.b16 %v1951
    %v2032 = vunpack.c.l.b16 %v1952
    %v2033 = vunpack.c.l.b16 %v1953
    %v2034 = vunpack.c.h.b16 %v1953
    %v2035 = vunpack.c.l.b16 %v1954
    %v2036 = vunpack.c.l.b16 %v1955
    %v2037 = vunpack.c.h.b16 %v1955
    %v2038 = vunpack.c.l.b16 %v1956
    %v2039 = vunpack.c.l.b16 %v1957
    %v2040 = vunpack.c.h.b16 %v1957
    %v2041 = vunpack.c.l.b16 %v1958
    %v2042 = vunpack.c.l.b16 %v1959
    %v2043 = vunpack.c.h.b16 %v1959
    %v2044 = vunpack.c.l.b16 %v1960
    %v2045 = vunpack.c.l.b16 %v1961
    %v2046 = vunpack.c.h.b16 %v1961
    %v2047 = vunpack.c.l.b16 %v1962
    %v2048 = vunpack.c.l.b16 %v1963
    %v2049 = vunpack.c.h.b16 %v1963
    %v2050 = vunpack.c.l.b16 %v1964
    %v2051 = vunpack.c.l.b16 %v1965
    %v2052 = vunpack.c.h.b16 %v1965
    %v2053 = vunpack.c.l.b16 %v1966
    %v2054 = vunpack.c.l.b16 %v1967
    %v2055 = vunpack.c.h.b16 %v1967
    %v2056 = vunpack.c.l.b16 %v1968
    %v2057 = vpack.c.b16 %v2012, %v2009
    %v2058 = vpack.c.b16 %v2013, %v2010
    %v2059 = vpack.c.b16 %v2014, %v2011
    %v2060 = vpack.c.b16 %v2018, %v2015
    %v2061 = vpack.c.b16 %v2019, %v2016
    %v2062 = vpack.c.b16 %v2020, %v2017
    %v2063 = vpack.c.b16 %v2024, %v2021
    %v2064 = vpack.c.b16 %v2025, %v2022
    %v2065 = vpack.c.b16 %v2026, %v2023
    %v2066 = vpack.c.b16 %v2030, %v2027
    %v2067 = vpack.c.b16 %v2031, %v2028
    %v2068 = vpack.c.b16 %v2032, %v2029
    %v2069 = vpack.c.b16 %v2036, %v2033
    %v2070 = vpack.c.b16 %v2037, %v2034
    %v2071 = vpack.c.b16 %v2038, %v2035
    %v2072 = vpack.c.b16 %v2042, %v2039
    %v2073 = vpack.c.b16 %v2043, %v2040
    %v2074 = vpack.c.b16 %v2044, %v2041
    %v2075 = vpack.c.b16 %v2048, %v2045
    %v2076 = vpack.c.b16 %v2049, %v2046
    %v2077 = vpack.c.b16 %v2050, %v2047
    %v2078 = vpack.c.b16 %v2054, %v2051
    %v2079 = vpack.c.b16 %v2055, %v2052
    %v2080 = vpack.c.b16 %v2056, %v2053
    %2105 = vmatpush.bf16.msra.mxu0 %v2078
    %2106 = vmatpush.bf16.msra.mxu0 %v2075
    %2107 = vmatpush.bf16.msra.mxu0 %v2072
    %2108 = vmatpush.bf16.msra.mxu0 %v2069
    %2109 = vmatpush.bf16.msra.mxu0 %v2066
    %2110 = vmatpush.bf16.msra.mxu0 %v2063
    %2111 = vmatpush.bf16.msra.mxu0 %v2060
    %2112 = vmatpush.bf16.msra.mxu0 %v2057
    %2113 = vmatmul.bf16.gmra.mxu0 %v1976
    %v2114 = vpop.f32.mrf.mxu0
    %v2115 = vadd.f32 0.0, %v2114
    %v2116 = vpop.f32.mrf.mxu0
    %2117 = vdwg.mxu0
    %2118 = vmatpush.bf16.msra.mxu0 %v2079
    %2119 = vmatpush.bf16.msra.mxu0 %v2076
    %2120 = vmatpush.bf16.msra.mxu0 %v2073
    %2121 = vmatpush.bf16.msra.mxu0 %v2070
    %2122 = vmatpush.bf16.msra.mxu0 %v2067
    %2123 = vmatpush.bf16.msra.mxu0 %v2064
    %2124 = vmatpush.bf16.msra.mxu0 %v2061
    %2125 = vmatpush.bf16.msra.mxu0 %v2058
    %2126 = vmatmul.bf16.gmra.mxu0 %v1976
    %v2127 = vpop.f32.mrf.mxu0
    %v2128 = vadd.f32 0.0, %v2127
    %v2129 = vpop.f32.mrf.mxu0
    %2130 = vdwg.mxu0
    %2131 = vmatpush.bf16.msra.mxu0 %v2080
    %2132 = vmatpush.bf16.msra.mxu0 %v2077
    %2133 = vmatpush.bf16.msra.mxu0 %v2074
    %2134 = vmatpush.bf16.msra.mxu0 %v2071
    %2135 = vmatpush.bf16.msra.mxu0 %v2068
    %2136 = vmatpush.bf16.msra.mxu0 %v2065
    %2137 = vmatpush.bf16.msra.mxu0 %v2062
    %2138 = vmatpush.bf16.msra.mxu0 %v2059
    %2139 = vmatmul.bf16.gmra.mxu0 %v1976
    %v2140 = vpop.f32.mrf.mxu0
    %v2141 = vadd.f32 0.0, %v2140
    %v2142 = vpop.f32.mrf.mxu0
    %2143 = vdwg.mxu0
    %v2144 = vadd.f32 %v1973, %v2115
    %v2145 = vadd.f32 %v1974, %v2128
    %v2146 = vxor.u32 %v2144, 2147483648
    %v2147 = vxor.u32 %v2145, 2147483648
    %v2148 = vmul.f32 %v2146, 1.442695
    %v2149 = vpow.pop %v2148
    %v2150 = vmul.f32 %v2147, 1.442695
    %v2151 = vpow.pop %v2150
    %v2152 = vadd.f32 %v2149, 1.0
    %v2153 = vadd.f32 %v2151, 1.0
    %v2154 = vrcp.pop %v2152
    %v2155 = vmul.f32 %v2152, %v2154
    %v2156 = vsub.f32 1.0, %v2155
    %v2157 = vmul.f32 %v2154, %v2156
    %v2158 = vadd.f32 %v2154, %v2157
    %vm2159 = vweird.f32 %v2152
    %vm2160 = vweird.f32 %v2154
    %vm2161 = vmor %vm2159, %vm2160
    %v2162 = vsel %vm2161, %v2154, %v2158
    %v2163 = vand.u32 2147483647, %v2152
    %vm2164 = vcmp.eq.f32.partialorder %v2163, 8.507059e+37
    %v2165 = vand.u32 %v2152, 2147483648
    %v2166 = vor.u32 1.1754944e-38, %v2165
    %v2167 = vsel %vm2164, %v2166, %v2162
    %v2168 = vmul.f32 1.0, %v2167
    %v2169 = vrcp.pop %v2153
    %v2170 = vmul.f32 %v2153, %v2169
    %v2171 = vsub.f32 1.0, %v2170
    %v2172 = vmul.f32 %v2169, %v2171
    %v2173 = vadd.f32 %v2169, %v2172
    %vm2174 = vweird.f32 %v2153
    %vm2175 = vweird.f32 %v2169
    %vm2176 = vmor %vm2174, %vm2175
    %v2177 = vsel %vm2176, %v2169, %v2173
    %v2178 = vand.u32 2147483647, %v2153
    %vm2179 = vcmp.eq.f32.partialorder %v2178, 8.507059e+37
    %v2180 = vand.u32 %v2153, 2147483648
    %v2181 = vor.u32 1.1754944e-38, %v2180
    %v2182 = vsel %vm2179, %v2181, %v2177
    %v2183 = vmul.f32 1.0, %v2182
    %v2184 = vadd.f32 %v2141, %v1971
    %v2185 = vmul.f32 %v2168, %v2184
    %v2186 = vadd.f32 %v1975, %v2185
    %v2187 = vtanh.pop %v2186
    %v2188 = vsub.f32 1.0, %v2183
    %v2189 = vmul.f32 %v2188, %v2187
    %v2190 = vmul.f32 %v2183, %v1624
    %v2191 = vadd.f32 %v2189, %v2190
    %2192 = vst [vmem:[#allocation3] sm:$0xff] %v2191
    %v2193 = vld [vmem:[#allocation5 + $0x18] sm:$0xff]
    %v2194 = vld [vmem:[#allocation5 + $0x20] sm:$0xff]
    %v2195 = vld [vmem:[#allocation5 + $0x28] sm:$0xff]
    %v2196 = vpack.c.bf16 %v2191, %v2191
    %2197 = vmatpush.bf16.msra.mxu0 %v2078
    %2198 = vmatpush.bf16.msra.mxu0 %v2075
    %2199 = vmatpush.bf16.msra.mxu0 %v2072
    %2200 = vmatpush.bf16.msra.mxu0 %v2069
    %2201 = vmatpush.bf16.msra.mxu0 %v2066
    %2202 = vmatpush.bf16.msra.mxu0 %v2063
    %2203 = vmatpush.bf16.msra.mxu0 %v2060
    %2204 = vmatpush.bf16.msra.mxu0 %v2057
    %2205 = vmatmul.bf16.gmra.mxu0 %v2196
    %v2206 = vpop.f32.mrf.mxu0
    %v2207 = vadd.f32 0.0, %v2206
    %v2208 = vpop.f32.mrf.mxu0
    %2209 = vdwg.mxu0
    %2210 = vmatpush.bf16.msra.mxu0 %v2079
    %2211 = vmatpush.bf16.msra.mxu0 %v2076
    %2212 = vmatpush.bf16.msra.mxu0 %v2073
    %2213 = vmatpush.bf16.msra.mxu0 %v2070
    %2214 = vmatpush.bf16.msra.mxu0 %v2067
    %2215 = vmatpush.bf16.msra.mxu0 %v2064
    %2216 = vmatpush.bf16.msra.mxu0 %v2061
    %2217 = vmatpush.bf16.msra.mxu0 %v2058
    %2218 = vmatmul.bf16.gmra.mxu0 %v2196
    %v2219 = vpop.f32.mrf.mxu0
    %v2220 = vadd.f32 0.0, %v2219
    %v2221 = vpop.f32.mrf.mxu0
    %2222 = vdwg.mxu0
    %2223 = vmatpush.bf16.msra.mxu0 %v2080
    %2224 = vmatpush.bf16.msra.mxu0 %v2077
    %2225 = vmatpush.bf16.msra.mxu0 %v2074
    %2226 = vmatpush.bf16.msra.mxu0 %v2071
    %2227 = vmatpush.bf16.msra.mxu0 %v2068
    %2228 = vmatpush.bf16.msra.mxu0 %v2065
    %2229 = vmatpush.bf16.msra.mxu0 %v2062
    %2230 = vmatpush.bf16.msra.mxu0 %v2059
    %2231 = vmatmul.bf16.gmra.mxu0 %v2196
    %v2232 = vpop.f32.mrf.mxu0
    %v2233 = vadd.f32 0.0, %v2232
    %v2234 = vpop.f32.mrf.mxu0
    %2235 = vdwg.mxu0
    %v2236 = vadd.f32 %v2193, %v2207
    %v2237 = vadd.f32 %v2194, %v2220
    %v2238 = vxor.u32 %v2236, 2147483648
    %v2239 = vxor.u32 %v2237, 2147483648
    %v2240 = vmul.f32 %v2238, 1.442695
    %v2241 = vpow.pop %v2240
    %v2242 = vmul.f32 %v2239, 1.442695
    %v2243 = vpow.pop %v2242
    %v2244 = vadd.f32 %v2241, 1.0
    %v2245 = vadd.f32 %v2243, 1.0
    %v2246 = vrcp.pop %v2244
    %v2247 = vmul.f32 %v2244, %v2246
    %v2248 = vsub.f32 1.0, %v2247
    %v2249 = vmul.f32 %v2246, %v2248
    %v2250 = vadd.f32 %v2246, %v2249
    %vm2251 = vweird.f32 %v2244
    %vm2252 = vweird.f32 %v2246
    %vm2253 = vmor %vm2251, %vm2252
    %v2254 = vsel %vm2253, %v2246, %v2250
    %v2255 = vand.u32 2147483647, %v2244
    %vm2256 = vcmp.eq.f32.partialorder %v2255, 8.507059e+37
    %v2257 = vand.u32 %v2244, 2147483648
    %v2258 = vor.u32 1.1754944e-38, %v2257
    %v2259 = vsel %vm2256, %v2258, %v2254
    %v2260 = vmul.f32 1.0, %v2259
    %v2261 = vrcp.pop %v2245
    %v2262 = vmul.f32 %v2245, %v2261
    %v2263 = vsub.f32 1.0, %v2262
    %v2264 = vmul.f32 %v2261, %v2263
    %v2265 = vadd.f32 %v2261, %v2264
    %vm2266 = vweird.f32 %v2245
    %vm2267 = vweird.f32 %v2261
    %vm2268 = vmor %vm2266, %vm2267
    %v2269 = vsel %vm2268, %v2261, %v2265
    %v2270 = vand.u32 2147483647, %v2245
    %vm2271 = vcmp.eq.f32.partialorder %v2270, 8.507059e+37
    %v2272 = vand.u32 %v2245, 2147483648
    %v2273 = vor.u32 1.1754944e-38, %v2272
    %v2274 = vsel %vm2271, %v2273, %v2269
    %v2275 = vmul.f32 1.0, %v2274
    %v2276 = vadd.f32 %v2233, %v1971
    %v2277 = vmul.f32 %v2260, %v2276
    %v2278 = vadd.f32 %v2195, %v2277
    %v2279 = vtanh.pop %v2278
    %v2280 = vsub.f32 1.0, %v2275
    %v2281 = vmul.f32 %v2280, %v2279
    %v2282 = vmul.f32 %v2275, %v2191
    %v2283 = vadd.f32 %v2281, %v2282
    %2284 = vst [vmem:[#allocation3 + $0x8] sm:$0xff] %v2283
    %v2285 = vld [vmem:[#allocation5 + $0x30] sm:$0xff]
    %v2286 = vld [vmem:[#allocation5 + $0x38] sm:$0xff]
    %v2287 = vld [vmem:[#allocation5 + $0x40] sm:$0xff]
    %v2288 = vpack.c.bf16 %v2283, %v2283
    %2289 = vmatpush.bf16.msra.mxu0 %v2078
    %2290 = vmatpush.bf16.msra.mxu0 %v2075
    %2291 = vmatpush.bf16.msra.mxu0 %v2072
    %2292 = vmatpush.bf16.msra.mxu0 %v2069
    %2293 = vmatpush.bf16.msra.mxu0 %v2066
    %2294 = vmatpush.bf16.msra.mxu0 %v2063
    %2295 = vmatpush.bf16.msra.mxu0 %v2060
    %2296 = vmatpush.bf16.msra.mxu0 %v2057
    %2297 = vmatmul.bf16.gmra.mxu0 %v2288
    %v2298 = vpop.f32.mrf.mxu0
    %v2299 = vadd.f32 0.0, %v2298
    %v2300 = vpop.f32.mrf.mxu0
    %2301 = vdwg.mxu0
    %2302 = vmatpush.bf16.msra.mxu0 %v2079
    %2303 = vmatpush.bf16.msra.mxu0 %v2076
    %2304 = vmatpush.bf16.msra.mxu0 %v2073
    %2305 = vmatpush.bf16.msra.mxu0 %v2070
    %2306 = vmatpush.bf16.msra.mxu0 %v2067
    %2307 = vmatpush.bf16.msra.mxu0 %v2064
    %2308 = vmatpush.bf16.msra.mxu0 %v2061
    %2309 = vmatpush.bf16.msra.mxu0 %v2058
    %2310 = vmatmul.bf16.gmra.mxu0 %v2288
    %v2311 = vpop.f32.mrf.mxu0
    %v2312 = vadd.f32 0.0, %v2311
    %v2313 = vpop.f32.mrf.mxu0
    %2314 = vdwg.mxu0
    %2315 = vmatpush.bf16.msra.mxu0 %v2080
    %2316 = vmatpush.bf16.msra.mxu0 %v2077
    %2317 = vmatpush.bf16.msra.mxu0 %v2074
    %2318 = vmatpush.bf16.msra.mxu0 %v2071
    %2319 = vmatpush.bf16.msra.mxu0 %v2068
    %2320 = vmatpush.bf16.msra.mxu0 %v2065
    %2321 = vmatpush.bf16.msra.mxu0 %v2062
    %2322 = vmatpush.bf16.msra.mxu0 %v2059
    %2323 = vmatmul.bf16.gmra.mxu0 %v2288
    %v2324 = vpop.f32.mrf.mxu0
    %v2325 = vadd.f32 0.0, %v2324
    %v2326 = vpop.f32.mrf.mxu0
    %2327 = vdwg.mxu0
    %v2328 = vadd.f32 %v2285, %v2299
    %v2329 = vadd.f32 %v2286, %v2312
    %v2330 = vxor.u32 %v2328, 2147483648
    %v2331 = vxor.u32 %v2329, 2147483648
    %v2332 = vmul.f32 %v2330, 1.442695
    %v2333 = vpow.pop %v2332
    %v2334 = vmul.f32 %v2331, 1.442695
    %v2335 = vpow.pop %v2334
    %v2336 = vadd.f32 %v2333, 1.0
    %v2337 = vadd.f32 %v2335, 1.0
    %v2338 = vrcp.pop %v2336
    %v2339 = vmul.f32 %v2336, %v2338
    %v2340 = vsub.f32 1.0, %v2339
    %v2341 = vmul.f32 %v2338, %v2340
    %v2342 = vadd.f32 %v2338, %v2341
    %vm2343 = vweird.f32 %v2336
    %vm2344 = vweird.f32 %v2338
    %vm2345 = vmor %vm2343, %vm2344
    %v2346 = vsel %vm2345, %v2338, %v2342
    %v2347 = vand.u32 2147483647, %v2336
    %vm2348 = vcmp.eq.f32.partialorder %v2347, 8.507059e+37
    %v2349 = vand.u32 %v2336, 2147483648
    %v2350 = vor.u32 1.1754944e-38, %v2349
    %v2351 = vsel %vm2348, %v2350, %v2346
    %v2352 = vmul.f32 1.0, %v2351
    %v2353 = vrcp.pop %v2337
    %v2354 = vmul.f32 %v2337, %v2353
    %v2355 = vsub.f32 1.0, %v2354
    %v2356 = vmul.f32 %v2353, %v2355
    %v2357 = vadd.f32 %v2353, %v2356
    %vm2358 = vweird.f32 %v2337
    %vm2359 = vweird.f32 %v2353
    %vm2360 = vmor %vm2358, %vm2359
    %v2361 = vsel %vm2360, %v2353, %v2357
    %v2362 = vand.u32 2147483647, %v2337
    %vm2363 = vcmp.eq.f32.partialorder %v2362, 8.507059e+37
    %v2364 = vand.u32 %v2337, 2147483648
    %v2365 = vor.u32 1.1754944e-38, %v2364
    %v2366 = vsel %vm2363, %v2365, %v2361
    %v2367 = vmul.f32 1.0, %v2366
    %v2368 = vadd.f32 %v2325, %v1971
    %v2369 = vmul.f32 %v2352, %v2368
    %v2370 = vadd.f32 %v2287, %v2369
    %v2371 = vtanh.pop %v2370
    %v2372 = vsub.f32 1.0, %v2367
    %v2373 = vmul.f32 %v2372, %v2371
    %v2374 = vmul.f32 %v2367, %v2283
    %v2375 = vadd.f32 %v2373, %v2374
    %2376 = vst [vmem:[#allocation3 + $0x10] sm:$0xff] %v2375
    %v2377 = vld [vmem:[#allocation5 + $0x48] sm:$0xff]
    %v2378 = vld [vmem:[#allocation5 + $0x50] sm:$0xff]
    %v2379 = vld [vmem:[#allocation5 + $0x58] sm:$0xff]
    %v2380 = vpack.c.bf16 %v2375, %v2375
    %2381 = vmatpush.bf16.msra.mxu0 %v2078
    %2382 = vmatpush.bf16.msra.mxu0 %v2075
    %2383 = vmatpush.bf16.msra.mxu0 %v2072
    %2384 = vmatpush.bf16.msra.mxu0 %v2069
    %2385 = vmatpush.bf16.msra.mxu0 %v2066
    %2386 = vmatpush.bf16.msra.mxu0 %v2063
    %2387 = vmatpush.bf16.msra.mxu0 %v2060
    %2388 = vmatpush.bf16.msra.mxu0 %v2057
    %2389 = vmatmul.bf16.gmra.mxu0 %v2380
    %v2390 = vpop.f32.mrf.mxu0
    %v2391 = vadd.f32 0.0, %v2390
    %v2392 = vpop.f32.mrf.mxu0
    %2393 = vdwg.mxu0
    %2394 = vmatpush.bf16.msra.mxu0 %v2079
    %2395 = vmatpush.bf16.msra.mxu0 %v2076
    %2396 = vmatpush.bf16.msra.mxu0 %v2073
    %2397 = vmatpush.bf16.msra.mxu0 %v2070
    %2398 = vmatpush.bf16.msra.mxu0 %v2067
    %2399 = vmatpush.bf16.msra.mxu0 %v2064
    %2400 = vmatpush.bf16.msra.mxu0 %v2061
    %2401 = vmatpush.bf16.msra.mxu0 %v2058
    %2402 = vmatmul.bf16.gmra.mxu0 %v2380
    %v2403 = vpop.f32.mrf.mxu0
    %v2404 = vadd.f32 0.0, %v2403
    %v2405 = vpop.f32.mrf.mxu0
    %2406 = vdwg.mxu0
    %2407 = vmatpush.bf16.msra.mxu0 %v2080
    %2408 = vmatpush.bf16.msra.mxu0 %v2077
    %2409 = vmatpush.bf16.msra.mxu0 %v2074
    %2410 = vmatpush.bf16.msra.mxu0 %v2071
    %2411 = vmatpush.bf16.msra.mxu0 %v2068
    %2412 = vmatpush.bf16.msra.mxu0 %v2065
    %2413 = vmatpush.bf16.msra.mxu0 %v2062
    %2414 = vmatpush.bf16.msra.mxu0 %v2059
    %2415 = vmatmul.bf16.gmra.mxu0 %v2380
    %v2416 = vpop.f32.mrf.mxu0
    %v2417 = vadd.f32 0.0, %v2416
    %v2418 = vpop.f32.mrf.mxu0
    %2419 = vdwg.mxu0
    %v2420 = vadd.f32 %v2377, %v2391
    %v2421 = vadd.f32 %v2378, %v2404
    %v2422 = vxor.u32 %v2420, 2147483648
    %v2423 = vxor.u32 %v2421, 2147483648
    %v2424 = vmul.f32 %v2422, 1.442695
    %v2425 = vpow.pop %v2424
    %v2426 = vmul.f32 %v2423, 1.442695
    %v2427 = vpow.pop %v2426
    %v2428 = vadd.f32 %v2425, 1.0
    %v2429 = vadd.f32 %v2427, 1.0
    %v2430 = vrcp.pop %v2428
    %v2431 = vmul.f32 %v2428, %v2430
    %v2432 = vsub.f32 1.0, %v2431
    %v2433 = vmul.f32 %v2430, %v2432
    %v2434 = vadd.f32 %v2430, %v2433
    %vm2435 = vweird.f32 %v2428
    %vm2436 = vweird.f32 %v2430
    %vm2437 = vmor %vm2435, %vm2436
    %v2438 = vsel %vm2437, %v2430, %v2434
    %v2439 = vand.u32 2147483647, %v2428
    %vm2440 = vcmp.eq.f32.partialorder %v2439, 8.507059e+37
    %v2441 = vand.u32 %v2428, 2147483648
    %v2442 = vor.u32 1.1754944e-38, %v2441
    %v2443 = vsel %vm2440, %v2442, %v2438
    %v2444 = vmul.f32 1.0, %v2443
    %v2445 = vrcp.pop %v2429
    %v2446 = vmul.f32 %v2429, %v2445
    %v2447 = vsub.f32 1.0, %v2446
    %v2448 = vmul.f32 %v2445, %v2447
    %v2449 = vadd.f32 %v2445, %v2448
    %vm2450 = vweird.f32 %v2429
    %vm2451 = vweird.f32 %v2445
    %vm2452 = vmor %vm2450, %vm2451
    %v2453 = vsel %vm2452, %v2445, %v2449
    %v2454 = vand.u32 2147483647, %v2429
    %vm2455 = vcmp.eq.f32.partialorder %v2454, 8.507059e+37
    %v2456 = vand.u32 %v2429, 2147483648
    %v2457 = vor.u32 1.1754944e-38, %v2456
    %v2458 = vsel %vm2455, %v2457, %v2453
    %v2459 = vmul.f32 1.0, %v2458
    %v2460 = vadd.f32 %v2417, %v1971
    %v2461 = vmul.f32 %v2444, %v2460
    %v2462 = vadd.f32 %v2379, %v2461
    %v2463 = vtanh.pop %v2462
    %v2464 = vsub.f32 1.0, %v2459
    %v2465 = vmul.f32 %v2464, %v2463
    %v2466 = vmul.f32 %v2459, %v2375
    %v2467 = vadd.f32 %v2465, %v2466
    %2468 = vst [vmem:[#allocation3 + $0x18] sm:$0xff] %v2467
    %v2469 = vld [vmem:[#allocation5 + $0x60] sm:$0xff]
    %v2470 = vld [vmem:[#allocation5 + $0x68] sm:$0xff]
    %v2471 = vld [vmem:[#allocation5 + $0x70] sm:$0xff]
    %v2472 = vpack.c.bf16 %v2467, %v2467
    %2473 = vmatpush.bf16.msra.mxu0 %v2078
    %2474 = vmatpush.bf16.msra.mxu0 %v2075
    %2475 = vmatpush.bf16.msra.mxu0 %v2072
    %2476 = vmatpush.bf16.msra.mxu0 %v2069
    %2477 = vmatpush.bf16.msra.mxu0 %v2066
    %2478 = vmatpush.bf16.msra.mxu0 %v2063
    %2479 = vmatpush.bf16.msra.mxu0 %v2060
    %2480 = vmatpush.bf16.msra.mxu0 %v2057
    %2481 = vmatmul.bf16.gmra.mxu0 %v2472
    %v2482 = vpop.f32.mrf.mxu0
    %v2483 = vadd.f32 0.0, %v2482
    %v2484 = vpop.f32.mrf.mxu0
    %2485 = vdwg.mxu0
    %2486 = vmatpush.bf16.msra.mxu0 %v2079
    %2487 = vmatpush.bf16.msra.mxu0 %v2076
    %2488 = vmatpush.bf16.msra.mxu0 %v2073
    %2489 = vmatpush.bf16.msra.mxu0 %v2070
    %2490 = vmatpush.bf16.msra.mxu0 %v2067
    %2491 = vmatpush.bf16.msra.mxu0 %v2064
    %2492 = vmatpush.bf16.msra.mxu0 %v2061
    %2493 = vmatpush.bf16.msra.mxu0 %v2058
    %2494 = vmatmul.bf16.gmra.mxu0 %v2472
    %v2495 = vpop.f32.mrf.mxu0
    %v2496 = vadd.f32 0.0, %v2495
    %v2497 = vpop.f32.mrf.mxu0
    %2498 = vdwg.mxu0
    %2499 = vmatpush.bf16.msra.mxu0 %v2080
    %2500 = vmatpush.bf16.msra.mxu0 %v2077
    %2501 = vmatpush.bf16.msra.mxu0 %v2074
    %2502 = vmatpush.bf16.msra.mxu0 %v2071
    %2503 = vmatpush.bf16.msra.mxu0 %v2068
    %2504 = vmatpush.bf16.msra.mxu0 %v2065
    %2505 = vmatpush.bf16.msra.mxu0 %v2062
    %2506 = vmatpush.bf16.msra.mxu0 %v2059
    %2507 = vmatmul.bf16.gmra.mxu0 %v2472
    %v2508 = vpop.f32.mrf.mxu0
    %v2509 = vadd.f32 0.0, %v2508
    %v2510 = vpop.f32.mrf.mxu0
    %2511 = vdwg.mxu0
    %v2512 = vadd.f32 %v2469, %v2483
    %v2513 = vadd.f32 %v2470, %v2496
    %v2514 = vxor.u32 %v2512, 2147483648
    %v2515 = vxor.u32 %v2513, 2147483648
    %v2516 = vmul.f32 %v2514, 1.442695
    %v2517 = vpow.pop %v2516
    %v2518 = vmul.f32 %v2515, 1.442695
    %v2519 = vpow.pop %v2518
    %v2520 = vadd.f32 %v2517, 1.0
    %v2521 = vadd.f32 %v2519, 1.0
    %v2522 = vrcp.pop %v2520
    %v2523 = vmul.f32 %v2520, %v2522
    %v2524 = vsub.f32 1.0, %v2523
    %v2525 = vmul.f32 %v2522, %v2524
    %v2526 = vadd.f32 %v2522, %v2525
    %vm2527 = vweird.f32 %v2520
    %vm2528 = vweird.f32 %v2522
    %vm2529 = vmor %vm2527, %vm2528
    %v2530 = vsel %vm2529, %v2522, %v2526
    %v2531 = vand.u32 2147483647, %v2520
    %vm2532 = vcmp.eq.f32.partialorder %v2531, 8.507059e+37
    %v2533 = vand.u32 %v2520, 2147483648
    %v2534 = vor.u32 1.1754944e-38, %v2533
    %v2535 = vsel %vm2532, %v2534, %v2530
    %v2536 = vmul.f32 1.0, %v2535
    %v2537 = vrcp.pop %v2521
    %v2538 = vmul.f32 %v2521, %v2537
    %v2539 = vsub.f32 1.0, %v2538
    %v2540 = vmul.f32 %v2537, %v2539
    %v2541 = vadd.f32 %v2537, %v2540
    %vm2542 = vweird.f32 %v2521
    %vm2543 = vweird.f32 %v2537
    %vm2544 = vmor %vm2542, %vm2543
    %v2545 = vsel %vm2544, %v2537, %v2541
    %v2546 = vand.u32 2147483647, %v2521
    %vm2547 = vcmp.eq.f32.partialorder %v2546, 8.507059e+37
    %v2548 = vand.u32 %v2521, 2147483648
    %v2549 = vor.u32 1.1754944e-38, %v2548
    %v2550 = vsel %vm2547, %v2549, %v2545
    %v2551 = vmul.f32 1.0, %v2550
    %v2552 = vadd.f32 %v2509, %v1971
    %v2553 = vmul.f32 %v2536, %v2552
    %v2554 = vadd.f32 %v2471, %v2553
    %v2555 = vtanh.pop %v2554
    %v2556 = vsub.f32 1.0, %v2551
    %v2557 = vmul.f32 %v2556, %v2555
    %v2558 = vmul.f32 %v2551, %v2467
    %v2559 = vadd.f32 %v2557, %v2558
    %2560 = vst [vmem:[#allocation3 + $0x20] sm:$0xff] %v2559
    %v2561 = vld [vmem:[#allocation5 + $0x78] sm:$0xff]
    %v2562 = vld [vmem:[#allocation5 + $0x80] sm:$0xff]
    %v2563 = vld [vmem:[#allocation5 + $0x88] sm:$0xff]
    %v2564 = vpack.c.bf16 %v2559, %v2559
    %2565 = vmatpush.bf16.msra.mxu0 %v2078
    %2566 = vmatpush.bf16.msra.mxu0 %v2075
    %2567 = vmatpush.bf16.msra.mxu0 %v2072
    %2568 = vmatpush.bf16.msra.mxu0 %v2069
    %2569 = vmatpush.bf16.msra.mxu0 %v2066
    %2570 = vmatpush.bf16.msra.mxu0 %v2063
    %2571 = vmatpush.bf16.msra.mxu0 %v2060
    %2572 = vmatpush.bf16.msra.mxu0 %v2057
    %2573 = vmatmul.bf16.gmra.mxu0 %v2564
    %v2574 = vpop.f32.mrf.mxu0
    %v2575 = vadd.f32 0.0, %v2574
    %v2576 = vpop.f32.mrf.mxu0
    %2577 = vdwg.mxu0
    %2578 = vmatpush.bf16.msra.mxu0 %v2079
    %2579 = vmatpush.bf16.msra.mxu0 %v2076
    %2580 = vmatpush.bf16.msra.mxu0 %v2073
    %2581 = vmatpush.bf16.msra.mxu0 %v2070
    %2582 = vmatpush.bf16.msra.mxu0 %v2067
    %2583 = vmatpush.bf16.msra.mxu0 %v2064
    %2584 = vmatpush.bf16.msra.mxu0 %v2061
    %2585 = vmatpush.bf16.msra.mxu0 %v2058
    %2586 = vmatmul.bf16.gmra.mxu0 %v2564
    %v2587 = vpop.f32.mrf.mxu0
    %v2588 = vadd.f32 0.0, %v2587
    %v2589 = vpop.f32.mrf.mxu0
    %2590 = vdwg.mxu0
    %2591 = vmatpush.bf16.msra.mxu0 %v2080
    %2592 = vmatpush.bf16.msra.mxu0 %v2077
    %2593 = vmatpush.bf16.msra.mxu0 %v2074
    %2594 = vmatpush.bf16.msra.mxu0 %v2071
    %2595 = vmatpush.bf16.msra.mxu0 %v2068
    %2596 = vmatpush.bf16.msra.mxu0 %v2065
    %2597 = vmatpush.bf16.msra.mxu0 %v2062
    %2598 = vmatpush.bf16.msra.mxu0 %v2059
    %2599 = vmatmul.bf16.gmra.mxu0 %v2564
    %v2600 = vpop.f32.mrf.mxu0
    %v2601 = vadd.f32 0.0, %v2600
    %v2602 = vpop.f32.mrf.mxu0
    %2603 = vdwg.mxu0
    %v2604 = vadd.f32 %v2561, %v2575
    %v2605 = vadd.f32 %v2562, %v2588
    %v2606 = vxor.u32 %v2604, 2147483648
    %v2607 = vxor.u32 %v2605, 2147483648
    %v2608 = vmul.f32 %v2606, 1.442695
    %v2609 = vpow.pop %v2608
    %v2610 = vmul.f32 %v2607, 1.442695
    %v2611 = vpow.pop %v2610
    %v2612 = vadd.f32 %v2609, 1.0
    %v2613 = vadd.f32 %v2611, 1.0
    %v2614 = vrcp.pop %v2612
    %v2615 = vmul.f32 %v2612, %v2614
    %v2616 = vsub.f32 1.0, %v2615
    %v2617 = vmul.f32 %v2614, %v2616
    %v2618 = vadd.f32 %v2614, %v2617
    %vm2619 = vweird.f32 %v2612
    %vm2620 = vweird.f32 %v2614
    %vm2621 = vmor %vm2619, %vm2620
    %v2622 = vsel %vm2621, %v2614, %v2618
    %v2623 = vand.u32 2147483647, %v2612
    %vm2624 = vcmp.eq.f32.partialorder %v2623, 8.507059e+37
    %v2625 = vand.u32 %v2612, 2147483648
    %v2626 = vor.u32 1.1754944e-38, %v2625
    %v2627 = vsel %vm2624, %v2626, %v2622
    %v2628 = vmul.f32 1.0, %v2627
    %v2629 = vrcp.pop %v2613
    %v2630 = vmul.f32 %v2613, %v2629
    %v2631 = vsub.f32 1.0, %v2630
    %v2632 = vmul.f32 %v2629, %v2631
    %v2633 = vadd.f32 %v2629, %v2632
    %vm2634 = vweird.f32 %v2613
    %vm2635 = vweird.f32 %v2629
    %vm2636 = vmor %vm2634, %vm2635
    %v2637 = vsel %vm2636, %v2629, %v2633
    %v2638 = vand.u32 2147483647, %v2613
    %vm2639 = vcmp.eq.f32.partialorder %v2638, 8.507059e+37
    %v2640 = vand.u32 %v2613, 2147483648
    %v2641 = vor.u32 1.1754944e-38, %v2640
    %v2642 = vsel %vm2639, %v2641, %v2637
    %v2643 = vmul.f32 1.0, %v2642
    %v2644 = vadd.f32 %v2601, %v1971
    %v2645 = vmul.f32 %v2628, %v2644
    %v2646 = vadd.f32 %v2563, %v2645
    %v2647 = vtanh.pop %v2646
    %v2648 = vsub.f32 1.0, %v2643
    %v2649 = vmul.f32 %v2648, %v2647
    %v2650 = vmul.f32 %v2643, %v2559
    %v2651 = vadd.f32 %v2649, %v2650
    %2652 = vst [vmem:[#allocation3 + $0x28] sm:$0xff] %v2651
    %v2653 = vld [vmem:[#allocation5 + $0x90] sm:$0xff]
    %v2654 = vld [vmem:[#allocation5 + $0x98] sm:$0xff]
    %v2655 = vld [vmem:[#allocation5 + $0xa0] sm:$0xff]
    %v2656 = vpack.c.bf16 %v2651, %v2651
    %2657 = vmatpush.bf16.msra.mxu0 %v2078
    %2658 = vmatpush.bf16.msra.mxu0 %v2075
    %2659 = vmatpush.bf16.msra.mxu0 %v2072
    %2660 = vmatpush.bf16.msra.mxu0 %v2069
    %2661 = vmatpush.bf16.msra.mxu0 %v2066
    %2662 = vmatpush.bf16.msra.mxu0 %v2063
    %2663 = vmatpush.bf16.msra.mxu0 %v2060
    %2664 = vmatpush.bf16.msra.mxu0 %v2057
    %2665 = vmatmul.bf16.gmra.mxu0 %v2656
    %v2666 = vpop.f32.mrf.mxu0
    %v2667 = vadd.f32 0.0, %v2666
    %v2668 = vpop.f32.mrf.mxu0
    %2669 = vdwg.mxu0
    %2670 = vmatpush.bf16.msra.mxu0 %v2079
    %2671 = vmatpush.bf16.msra.mxu0 %v2076
    %2672 = vmatpush.bf16.msra.mxu0 %v2073
    %2673 = vmatpush.bf16.msra.mxu0 %v2070
    %2674 = vmatpush.bf16.msra.mxu0 %v2067
    %2675 = vmatpush.bf16.msra.mxu0 %v2064
    %2676 = vmatpush.bf16.msra.mxu0 %v2061
    %2677 = vmatpush.bf16.msra.mxu0 %v2058
    %2678 = vmatmul.bf16.gmra.mxu0 %v2656
    %v2679 = vpop.f32.mrf.mxu0
    %v2680 = vadd.f32 0.0, %v2679
    %v2681 = vpop.f32.mrf.mxu0
    %2682 = vdwg.mxu0
    %2683 = vmatpush.bf16.msra.mxu0 %v2080
    %2684 = vmatpush.bf16.msra.mxu0 %v2077
    %2685 = vmatpush.bf16.msra.mxu0 %v2074
    %2686 = vmatpush.bf16.msra.mxu0 %v2071
    %2687 = vmatpush.bf16.msra.mxu0 %v2068
    %2688 = vmatpush.bf16.msra.mxu0 %v2065
    %2689 = vmatpush.bf16.msra.mxu0 %v2062
    %2690 = vmatpush.bf16.msra.mxu0 %v2059
    %2691 = vmatmul.bf16.gmra.mxu0 %v2656
    %v2692 = vpop.f32.mrf.mxu0
    %v2693 = vadd.f32 0.0, %v2692
    %v2694 = vpop.f32.mrf.mxu0
    %2695 = vdwg.mxu0
    %v2696 = vadd.f32 %v2653, %v2667
    %v2697 = vadd.f32 %v2654, %v2680
    %v2698 = vxor.u32 %v2696, 2147483648
    %v2699 = vxor.u32 %v2697, 2147483648
    %v2700 = vmul.f32 %v2698, 1.442695
    %v2701 = vpow.pop %v2700
    %v2702 = vmul.f32 %v2699, 1.442695
    %v2703 = vpow.pop %v2702
    %v2704 = vadd.f32 %v2701, 1.0
    %v2705 = vadd.f32 %v2703, 1.0
    %v2706 = vrcp.pop %v2704
    %v2707 = vmul.f32 %v2704, %v2706
    %v2708 = vsub.f32 1.0, %v2707
    %v2709 = vmul.f32 %v2706, %v2708
    %v2710 = vadd.f32 %v2706, %v2709
    %vm2711 = vweird.f32 %v2704
    %vm2712 = vweird.f32 %v2706
    %vm2713 = vmor %vm2711, %vm2712
    %v2714 = vsel %vm2713, %v2706, %v2710
    %v2715 = vand.u32 2147483647, %v2704
    %vm2716 = vcmp.eq.f32.partialorder %v2715, 8.507059e+37
    %v2717 = vand.u32 %v2704, 2147483648
    %v2718 = vor.u32 1.1754944e-38, %v2717
    %v2719 = vsel %vm2716, %v2718, %v2714
    %v2720 = vmul.f32 1.0, %v2719
    %v2721 = vrcp.pop %v2705
    %v2722 = vmul.f32 %v2705, %v2721
    %v2723 = vsub.f32 1.0, %v2722
    %v2724 = vmul.f32 %v2721, %v2723
    %v2725 = vadd.f32 %v2721, %v2724
    %vm2726 = vweird.f32 %v2705
    %vm2727 = vweird.f32 %v2721
    %vm2728 = vmor %vm2726, %vm2727
    %v2729 = vsel %vm2728, %v2721, %v2725
    %v2730 = vand.u32 2147483647, %v2705
    %vm2731 = vcmp.eq.f32.partialorder %v2730, 8.507059e+37
    %v2732 = vand.u32 %v2705, 2147483648
    %v2733 = vor.u32 1.1754944e-38, %v2732
    %v2734 = vsel %vm2731, %v2733, %v2729
    %v2735 = vmul.f32 1.0, %v2734
    %v2736 = vadd.f32 %v2693, %v1971
    %v2737 = vmul.f32 %v2720, %v2736
    %v2738 = vadd.f32 %v2655, %v2737
    %v2739 = vtanh.pop %v2738
    %v2740 = vsub.f32 1.0, %v2735
    %v2741 = vmul.f32 %v2740, %v2739
    %v2742 = vmul.f32 %v2735, %v2651
    %v2743 = vadd.f32 %v2741, %v2742
    %2744 = vst [vmem:[#allocation3 + $0x30] sm:$0xff] %v2743
    %v2745 = vld [vmem:[#allocation5 + $0xa8] sm:$0xff]
    %v2746 = vld [vmem:[#allocation5 + $0xb0] sm:$0xff]
    %v2747 = vld [vmem:[#allocation5 + $0xb8] sm:$0xff]
    %v2748 = vpack.c.bf16 %v2743, %v2743
    %2749 = vmatpush.bf16.msra.mxu0 %v2078
    %2750 = vmatpush.bf16.msra.mxu0 %v2075
    %2751 = vmatpush.bf16.msra.mxu0 %v2072
    %2752 = vmatpush.bf16.msra.mxu0 %v2069
    %2753 = vmatpush.bf16.msra.mxu0 %v2066
    %2754 = vmatpush.bf16.msra.mxu0 %v2063
    %2755 = vmatpush.bf16.msra.mxu0 %v2060
    %2756 = vmatpush.bf16.msra.mxu0 %v2057
    %2757 = vmatmul.bf16.gmra.mxu0 %v2748
    %v2758 = vpop.f32.mrf.mxu0
    %v2759 = vadd.f32 0.0, %v2758
    %v2760 = vpop.f32.mrf.mxu0
    %2761 = vdwg.mxu0
    %2762 = vmatpush.bf16.msra.mxu0 %v2079
    %2763 = vmatpush.bf16.msra.mxu0 %v2076
    %2764 = vmatpush.bf16.msra.mxu0 %v2073
    %2765 = vmatpush.bf16.msra.mxu0 %v2070
    %2766 = vmatpush.bf16.msra.mxu0 %v2067
    %2767 = vmatpush.bf16.msra.mxu0 %v2064
    %2768 = vmatpush.bf16.msra.mxu0 %v2061
    %2769 = vmatpush.bf16.msra.mxu0 %v2058
    %2770 = vmatmul.bf16.gmra.mxu0 %v2748
    %v2771 = vpop.f32.mrf.mxu0
    %v2772 = vadd.f32 0.0, %v2771
    %v2773 = vpop.f32.mrf.mxu0
    %2774 = vdwg.mxu0
    %2775 = vmatpush.bf16.msra.mxu0 %v2080
    %2776 = vmatpush.bf16.msra.mxu0 %v2077
    %2777 = vmatpush.bf16.msra.mxu0 %v2074
    %2778 = vmatpush.bf16.msra.mxu0 %v2071
    %2779 = vmatpush.bf16.msra.mxu0 %v2068
    %2780 = vmatpush.bf16.msra.mxu0 %v2065
    %2781 = vmatpush.bf16.msra.mxu0 %v2062
    %2782 = vmatpush.bf16.msra.mxu0 %v2059
    %2783 = vmatmul.bf16.gmra.mxu0 %v2748
    %v2784 = vpop.f32.mrf.mxu0
    %v2785 = vadd.f32 0.0, %v2784
    %v2786 = vpop.f32.mrf.mxu0
    %2787 = vdwg.mxu0
    %v2788 = vadd.f32 %v2745, %v2759
    %v2789 = vadd.f32 %v2746, %v2772
    %v2790 = vxor.u32 %v2788, 2147483648
    %v2791 = vxor.u32 %v2789, 2147483648
    %v2792 = vmul.f32 %v2790, 1.442695
    %v2793 = vpow.pop %v2792
    %v2794 = vmul.f32 %v2791, 1.442695
    %v2795 = vpow.pop %v2794
    %v2796 = vadd.f32 %v2793, 1.0
    %v2797 = vadd.f32 %v2795, 1.0
    %v2798 = vrcp.pop %v2796
    %v2799 = vmul.f32 %v2796, %v2798
    %v2800 = vsub.f32 1.0, %v2799
    %v2801 = vmul.f32 %v2798, %v2800
    %v2802 = vadd.f32 %v2798, %v2801
    %vm2803 = vweird.f32 %v2796
    %vm2804 = vweird.f32 %v2798
    %vm2805 = vmor %vm2803, %vm2804
    %v2806 = vsel %vm2805, %v2798, %v2802
    %v2807 = vand.u32 2147483647, %v2796
    %vm2808 = vcmp.eq.f32.partialorder %v2807, 8.507059e+37
    %v2809 = vand.u32 %v2796, 2147483648
    %v2810 = vor.u32 1.1754944e-38, %v2809
    %v2811 = vsel %vm2808, %v2810, %v2806
    %v2812 = vmul.f32 1.0, %v2811
    %v2813 = vrcp.pop %v2797
    %v2814 = vmul.f32 %v2797, %v2813
    %v2815 = vsub.f32 1.0, %v2814
    %v2816 = vmul.f32 %v2813, %v2815
    %v2817 = vadd.f32 %v2813, %v2816
    %vm2818 = vweird.f32 %v2797
    %vm2819 = vweird.f32 %v2813
    %vm2820 = vmor %vm2818, %vm2819
    %v2821 = vsel %vm2820, %v2813, %v2817
    %v2822 = vand.u32 2147483647, %v2797
    %vm2823 = vcmp.eq.f32.partialorder %v2822, 8.507059e+37
    %v2824 = vand.u32 %v2797, 2147483648
    %v2825 = vor.u32 1.1754944e-38, %v2824
    %v2826 = vsel %vm2823, %v2825, %v2821
    %v2827 = vmul.f32 1.0, %v2826
    %v2828 = vadd.f32 %v2785, %v1971
    %v2829 = vmul.f32 %v2812, %v2828
    %v2830 = vadd.f32 %v2747, %v2829
    %v2831 = vtanh.pop %v2830
    %v2832 = vsub.f32 1.0, %v2827
    %v2833 = vmul.f32 %v2832, %v2831
    %v2834 = vmul.f32 %v2827, %v2743
    %v2835 = vadd.f32 %v2833, %v2834
    %2836 = vst [vmem:[#allocation3 + $0x38] sm:$0xff] %v2835
    %v2837 = vlaneseq
    %v2838 = vand.u32 %v2837, 127
    %v2839 = vand.u32 %v2838, 7
    %vm2840 = vcmp.eq.s32.totalorder %v103, %v2839
    %vm2841 = vcmp.eq.s32.totalorder %v104, %v2839
    %vm2842 = vcmp.eq.s32.totalorder %v105, %v2839
    %vm2843 = vcmp.eq.s32.totalorder %v106, %v2839
    %vm2844 = vcmp.eq.s32.totalorder %v107, %v2839
    %vm2845 = vcmp.eq.s32.totalorder %v108, %v2839
    %vm2846 = vcmp.eq.s32.totalorder %v109, %v2839
    %vm2847 = vcmp.eq.s32.totalorder %v110, %v2839
    %v2848 = vshra.s32 %v2838, 3
    %vm2849 = vcmp.eq.s32.totalorder %v2839, 0
    %s2850 = sld [smem:[#allocation7]]
    %v2851 = vstv %s2850
    %v2852 = vsel %vm2849, %v2851, 0
    %vm2853 = vcmp.eq.s32.totalorder %v2839, 1
    %s2854 = sld [smem:[#allocation7 + $0x1]]
    %v2855 = vstv %s2854
    %v2856 = vsel %vm2853, %v2855, %v2852
    %vm2857 = vcmp.eq.s32.totalorder %v2839, 2
    %s2858 = sld [smem:[#allocation7 + $0x2]]
    %v2859 = vstv %s2858
    %v2860 = vsel %vm2857, %v2859, %v2856
    %vm2861 = vcmp.eq.s32.totalorder %v2839, 3
    %s2862 = sld [smem:[#allocation7 + $0x3]]
    %v2863 = vstv %s2862
    %v2864 = vsel %vm2861, %v2863, %v2860
    %vm2865 = vcmp.eq.s32.totalorder %v2839, 4
    %s2866 = sld [smem:[#allocation7 + $0x4]]
    %v2867 = vstv %s2866
    %v2868 = vsel %vm2865, %v2867, %v2864
    %vm2869 = vcmp.eq.s32.totalorder %v2839, 5
    %s2870 = sld [smem:[#allocation7 + $0x5]]
    %v2871 = vstv %s2870
    %v2872 = vsel %vm2869, %v2871, %v2868
    %vm2873 = vcmp.eq.s32.totalorder %v2839, 6
    %s2874 = sld [smem:[#allocation7 + $0x6]]
    %v2875 = vstv %s2874
    %v2876 = vsel %vm2873, %v2875, %v2872
    %vm2877 = vcmp.eq.s32.totalorder %v2839, 7
    %s2878 = sld [smem:[#allocation7 + $0x7]]
    %v2879 = vstv %s2878
    %v2880 = vsel %vm2877, %v2879, %v2876
    %vm2881 = vcmp.lt.s32.totalorder %v2848, %v2880
    %v2882 = vsel %vm2881, 1, 0
    %vm2883 = vcmp.eq.s32.totalorder %v2882, 1
    %vm2884 = vmand %vm2840, %vm2883
    %vm2885 = vmand %vm2841, %vm2883
    %vm2886 = vmand %vm2842, %vm2883
    %vm2887 = vmand %vm2843, %vm2883
    %vm2888 = vmand %vm2844, %vm2883
    %vm2889 = vmand %vm2845, %vm2883
    %vm2890 = vmand %vm2846, %vm2883
    %vm2891 = vmand %vm2847, %vm2883
    %v2892 = vsel %vm2884, 0.0, -1e+30
    %v2893 = vsel %vm2885, 0.0, -1e+30
    %v2894 = vsel %vm2886, 0.0, -1e+30
    %v2895 = vsel %vm2887, 0.0, -1e+30
    %v2896 = vsel %vm2888, 0.0, -1e+30
    %v2897 = vsel %vm2889, 0.0, -1e+30
    %v2898 = vsel %vm2890, 0.0, -1e+30
    %v2899 = vsel %vm2891, 0.0, -1e+30
    %v2900 = vld [vmem:[#allocation2] sm:$0xff]
    %v2901 = vld [vmem:[#allocation2 + $0x8] sm:$0xff]
    %v2902 = vld [vmem:[#allocation2 + $0x10] sm:$0xff]
    %v2903 = vld [vmem:[#allocation2 + $0x18] sm:$0xff]
    %v2904 = vld [vmem:[#allocation2 + $0x20] sm:$0xff]
    %v2905 = vld [vmem:[#allocation2 + $0x28] sm:$0xff]
    %v2906 = vld [vmem:[#allocation2 + $0x30] sm:$0xff]
    %v2907 = vld [vmem:[#allocation2 + $0x38] sm:$0xff]
    %v2908 = vpack.c.bf16 %v2901, %v2900
    %v2909 = vpack.c.bf16 %v2903, %v2902
    %v2910 = vpack.c.bf16 %v2905, %v2904
    %v2911 = vpack.c.bf16 %v2907, %v2906
    %v2912 = vld [vmem:[#allocation3] sm:$0xff]
    %v2913 = vld [vmem:[#allocation3 + $0x8] sm:$0xff]
    %v2914 = vld [vmem:[#allocation3 + $0x10] sm:$0xff]
    %v2915 = vld [vmem:[#allocation3 + $0x18] sm:$0xff]
    %v2916 = vld [vmem:[#allocation3 + $0x20] sm:$0xff]
    %v2917 = vld [vmem:[#allocation3 + $0x28] sm:$0xff]
    %v2918 = vld [vmem:[#allocation3 + $0x30] sm:$0xff]
    %v2919 = vld [vmem:[#allocation3 + $0x38] sm:$0xff]
    %v2920 = vpack.c.bf16 %v2912, %v2912
    %v2921 = vpack.c.bf16 %v2913, %v2913
    %v2922 = vpack.c.bf16 %v2914, %v2914
    %v2923 = vpack.c.bf16 %v2915, %v2915
    %v2924 = vpack.c.bf16 %v2916, %v2916
    %v2925 = vpack.c.bf16 %v2917, %v2917
    %v2926 = vpack.c.bf16 %v2918, %v2918
    %v2927 = vpack.c.bf16 %v2919, %v2919
    %v2936 = vunpack.c.l.b16 %v2920
    %v2937 = vunpack.c.l.b16 %v2921
    %v2938 = vunpack.c.l.b16 %v2922
    %v2939 = vunpack.c.l.b16 %v2923
    %v2940 = vunpack.c.l.b16 %v2924
    %v2941 = vunpack.c.l.b16 %v2925
    %v2942 = vunpack.c.l.b16 %v2926
    %v2943 = vunpack.c.l.b16 %v2927
    %v2944 = vpack.c.b16 %v2937, %v2936
    %v2945 = vpack.c.b16 %v2939, %v2938
    %v2946 = vpack.c.b16 %v2941, %v2940
    %v2947 = vpack.c.b16 %v2943, %v2942
    %2952 = vmatpush.bf16.xpose.msra.mxu0 0
    %2953 = vmatpush.bf16.xpose.msra.mxu0 0
    %2954 = vmatpush.bf16.xpose.msra.mxu0 0
    %2955 = vmatpush.bf16.xpose.msra.mxu0 0
    %2956 = vmatpush.bf16.xpose.msra.mxu0 %v2911
    %2957 = vmatpush.bf16.xpose.msra.mxu0 %v2910
    %2958 = vmatpush.bf16.xpose.msra.mxu0 %v2909
    %2959 = vmatpush.bf16.xpose.msra.mxu0 %v2908
    %2960 = vmatmul.bf16.gmra.mxu0 %v2944
    %v2961 = vpop.f32.mrf.mxu0
    %v2962 = vadd.f32 %v2892, %v2961
    %v2963 = vpop.f32.mrf.mxu0
    %v2964 = vadd.f32 %v2893, %v2963
    %2965 = vmatmul.bf16.gmra.mxu0 %v2945
    %v2966 = vpop.f32.mrf.mxu0
    %v2967 = vadd.f32 %v2894, %v2966
    %v2968 = vpop.f32.mrf.mxu0
    %v2969 = vadd.f32 %v2895, %v2968
    %2970 = vmatmul.bf16.gmra.mxu0 %v2946
    %v2971 = vpop.f32.mrf.mxu0
    %v2972 = vadd.f32 %v2896, %v2971
    %v2973 = vpop.f32.mrf.mxu0
    %v2974 = vadd.f32 %v2897, %v2973
    %2975 = vmatmul.bf16.gmra.mxu0 %v2947
    %v2976 = vpop.f32.mrf.mxu0
    %v2977 = vadd.f32 %v2898, %v2976
    %v2978 = vpop.f32.mrf.mxu0
    %v2979 = vadd.f32 %v2899, %v2978
    %2980 = vdwg.mxu0
    %vm2981 = vcmask 523264
    %v2982 = vsel %vm2981, %v2962, -inf
    %2983 = vmax.xlane.f32.xlu0 %v2982
    %v2984 = vpop.xlane.xlu0 %2983
    %v2985 = vsel %vm2981, %v2964, -inf
    %2986 = vmax.xlane.f32.xlu0 %v2985
    %v2987 = vpop.xlane.xlu0 %2986
    %v2988 = vsel %vm2981, %v2967, -inf
    %2989 = vmax.xlane.f32.xlu0 %v2988
    %v2990 = vpop.xlane.xlu0 %2989
    %v2991 = vsel %vm2981, %v2969, -inf
    %2992 = vmax.xlane.f32.xlu0 %v2991
    %v2993 = vpop.xlane.xlu0 %2992
    %v2994 = vsel %vm2981, %v2972, -inf
    %2995 = vmax.xlane.f32.xlu0 %v2994
    %v2996 = vpop.xlane.xlu0 %2995
    %v2997 = vsel %vm2981, %v2974, -inf
    %2998 = vmax.xlane.f32.xlu0 %v2997
    %v2999 = vpop.xlane.xlu0 %2998
    %v3000 = vsel %vm2981, %v2977, -inf
    %3001 = vmax.xlane.f32.xlu0 %v3000
    %v3002 = vpop.xlane.xlu0 %3001
    %v3003 = vsel %vm2981, %v2979, -inf
    %3004 = vmax.xlane.f32.xlu0 %v3003
    %v3005 = vpop.xlane.xlu0 %3004
    %v3006 = vsub.f32 %v2962, %v2984
    %v3007 = vsub.f32 %v2964, %v2987
    %v3008 = vsub.f32 %v2967, %v2990
    %v3009 = vsub.f32 %v2969, %v2993
    %v3010 = vsub.f32 %v2972, %v2996
    %v3011 = vsub.f32 %v2974, %v2999
    %v3012 = vsub.f32 %v2977, %v3002
    %v3013 = vsub.f32 %v2979, %v3005
    %v3014 = vmul.f32 %v3006, 1.442695
    %v3015 = vpow.pop %v3014
    %v3016 = vmul.f32 %v3007, 1.442695
    %v3017 = vpow.pop %v3016
    %v3018 = vmul.f32 %v3008, 1.442695
    %v3019 = vpow.pop %v3018
    %v3020 = vmul.f32 %v3009, 1.442695
    %v3021 = vpow.pop %v3020
    %v3022 = vmul.f32 %v3010, 1.442695
    %v3023 = vpow.pop %v3022
    %v3024 = vmul.f32 %v3011, 1.442695
    %v3025 = vpow.pop %v3024
    %v3026 = vmul.f32 %v3012, 1.442695
    %v3027 = vpow.pop %v3026
    %v3028 = vmul.f32 %v3013, 1.442695
    %v3029 = vpow.pop %v3028
    %v3030 = vsel %vm2981, %v3015, 0.0
    %3031 = vadd.xlane.f32.xlu0 %v3030
    %v3032 = vpop.xlane.xlu0 %3031
    %v3033 = vsel %vm2981, %v3017, 0.0
    %3034 = vadd.xlane.f32.xlu0 %v3033
    %v3035 = vpop.xlane.xlu0 %3034
    %v3036 = vsel %vm2981, %v3019, 0.0
    %3037 = vadd.xlane.f32.xlu0 %v3036
    %v3038 = vpop.xlane.xlu0 %3037
    %v3039 = vsel %vm2981, %v3021, 0.0
    %3040 = vadd.xlane.f32.xlu0 %v3039
    %v3041 = vpop.xlane.xlu0 %3040
    %v3042 = vsel %vm2981, %v3023, 0.0
    %3043 = vadd.xlane.f32.xlu0 %v3042
    %v3044 = vpop.xlane.xlu0 %3043
    %v3045 = vsel %vm2981, %v3025, 0.0
    %3046 = vadd.xlane.f32.xlu0 %v3045
    %v3047 = vpop.xlane.xlu0 %3046
    %v3048 = vsel %vm2981, %v3027, 0.0
    %3049 = vadd.xlane.f32.xlu0 %v3048
    %v3050 = vpop.xlane.xlu0 %3049
    %v3051 = vsel %vm2981, %v3029, 0.0
    %3052 = vadd.xlane.f32.xlu0 %v3051
    %v3053 = vpop.xlane.xlu0 %3052
    %v3054 = vrcp.pop %v3032
    %v3055 = vmul.f32 %v3032, %v3054
    %v3056 = vsub.f32 1.0, %v3055
    %v3057 = vmul.f32 %v3054, %v3056
    %v3058 = vadd.f32 %v3054, %v3057
    %vm3059 = vweird.f32 %v3032
    %vm3060 = vweird.f32 %v3054
    %vm3061 = vmor %vm3059, %vm3060
    %v3062 = vsel %vm3061, %v3054, %v3058
    %v3063 = vand.u32 2147483647, %v3032
    %vm3064 = vcmp.eq.f32.partialorder %v3063, 8.507059e+37
    %v3065 = vand.u32 %v3032, 2147483648
    %v3066 = vor.u32 1.1754944e-38, %v3065
    %v3067 = vsel %vm3064, %v3066, %v3062
    %v3068 = vmul.f32 %v3015, %v3067
    %v3069 = vrcp.pop %v3035
    %v3070 = vmul.f32 %v3035, %v3069
    %v3071 = vsub.f32 1.0, %v3070
    %v3072 = vmul.f32 %v3069, %v3071
    %v3073 = vadd.f32 %v3069, %v3072
    %vm3074 = vweird.f32 %v3035
    %vm3075 = vweird.f32 %v3069
    %vm3076 = vmor %vm3074, %vm3075
    %v3077 = vsel %vm3076, %v3069, %v3073
    %v3078 = vand.u32 2147483647, %v3035
    %vm3079 = vcmp.eq.f32.partialorder %v3078, 8.507059e+37
    %v3080 = vand.u32 %v3035, 2147483648
    %v3081 = vor.u32 1.1754944e-38, %v3080
    %v3082 = vsel %vm3079, %v3081, %v3077
    %v3083 = vmul.f32 %v3017, %v3082
    %v3084 = vrcp.pop %v3038
    %v3085 = vmul.f32 %v3038, %v3084
    %v3086 = vsub.f32 1.0, %v3085
    %v3087 = vmul.f32 %v3084, %v3086
    %v3088 = vadd.f32 %v3084, %v3087
    %vm3089 = vweird.f32 %v3038
    %vm3090 = vweird.f32 %v3084
    %vm3091 = vmor %vm3089, %vm3090
    %v3092 = vsel %vm3091, %v3084, %v3088
    %v3093 = vand.u32 2147483647, %v3038
    %vm3094 = vcmp.eq.f32.partialorder %v3093, 8.507059e+37
    %v3095 = vand.u32 %v3038, 2147483648
    %v3096 = vor.u32 1.1754944e-38, %v3095
    %v3097 = vsel %vm3094, %v3096, %v3092
    %v3098 = vmul.f32 %v3019, %v3097
    %v3099 = vrcp.pop %v3041
    %v3100 = vmul.f32 %v3041, %v3099
    %v3101 = vsub.f32 1.0, %v3100
    %v3102 = vmul.f32 %v3099, %v3101
    %v3103 = vadd.f32 %v3099, %v3102
    %vm3104 = vweird.f32 %v3041
    %vm3105 = vweird.f32 %v3099
    %vm3106 = vmor %vm3104, %vm3105
    %v3107 = vsel %vm3106, %v3099, %v3103
    %v3108 = vand.u32 2147483647, %v3041
    %vm3109 = vcmp.eq.f32.partialorder %v3108, 8.507059e+37
    %v3110 = vand.u32 %v3041, 2147483648
    %v3111 = vor.u32 1.1754944e-38, %v3110
    %v3112 = vsel %vm3109, %v3111, %v3107
    %v3113 = vmul.f32 %v3021, %v3112
    %v3114 = vrcp.pop %v3044
    %v3115 = vmul.f32 %v3044, %v3114
    %v3116 = vsub.f32 1.0, %v3115
    %v3117 = vmul.f32 %v3114, %v3116
    %v3118 = vadd.f32 %v3114, %v3117
    %vm3119 = vweird.f32 %v3044
    %vm3120 = vweird.f32 %v3114
    %vm3121 = vmor %vm3119, %vm3120
    %v3122 = vsel %vm3121, %v3114, %v3118
    %v3123 = vand.u32 2147483647, %v3044
    %vm3124 = vcmp.eq.f32.partialorder %v3123, 8.507059e+37
    %v3125 = vand.u32 %v3044, 2147483648
    %v3126 = vor.u32 1.1754944e-38, %v3125
    %v3127 = vsel %vm3124, %v3126, %v3122
    %v3128 = vmul.f32 %v3023, %v3127
    %v3129 = vrcp.pop %v3047
    %v3130 = vmul.f32 %v3047, %v3129
    %v3131 = vsub.f32 1.0, %v3130
    %v3132 = vmul.f32 %v3129, %v3131
    %v3133 = vadd.f32 %v3129, %v3132
    %vm3134 = vweird.f32 %v3047
    %vm3135 = vweird.f32 %v3129
    %vm3136 = vmor %vm3134, %vm3135
    %v3137 = vsel %vm3136, %v3129, %v3133
    %v3138 = vand.u32 2147483647, %v3047
    %vm3139 = vcmp.eq.f32.partialorder %v3138, 8.507059e+37
    %v3140 = vand.u32 %v3047, 2147483648
    %v3141 = vor.u32 1.1754944e-38, %v3140
    %v3142 = vsel %vm3139, %v3141, %v3137
    %v3143 = vmul.f32 %v3025, %v3142
    %v3144 = vrcp.pop %v3050
    %v3145 = vmul.f32 %v3050, %v3144
    %v3146 = vsub.f32 1.0, %v3145
    %v3147 = vmul.f32 %v3144, %v3146
    %v3148 = vadd.f32 %v3144, %v3147
    %vm3149 = vweird.f32 %v3050
    %vm3150 = vweird.f32 %v3144
    %vm3151 = vmor %vm3149, %vm3150
    %v3152 = vsel %vm3151, %v3144, %v3148
    %v3153 = vand.u32 2147483647, %v3050
    %vm3154 = vcmp.eq.f32.partialorder %v3153, 8.507059e+37
    %v3155 = vand.u32 %v3050, 2147483648
    %v3156 = vor.u32 1.1754944e-38, %v3155
    %v3157 = vsel %vm3154, %v3156, %v3152
    %v3158 = vmul.f32 %v3027, %v3157
    %v3159 = vrcp.pop %v3053
    %v3160 = vmul.f32 %v3053, %v3159
    %v3161 = vsub.f32 1.0, %v3160
    %v3162 = vmul.f32 %v3159, %v3161
    %v3163 = vadd.f32 %v3159, %v3162
    %vm3164 = vweird.f32 %v3053
    %vm3165 = vweird.f32 %v3159
    %vm3166 = vmor %vm3164, %vm3165
    %v3167 = vsel %vm3166, %v3159, %v3163
    %v3168 = vand.u32 2147483647, %v3053
    %vm3169 = vcmp.eq.f32.partialorder %v3168, 8.507059e+37
    %v3170 = vand.u32 %v3053, 2147483648
    %v3171 = vor.u32 1.1754944e-38, %v3170
    %v3172 = vsel %vm3169, %v3171, %v3167
    %v3173 = vmul.f32 %v3029, %v3172
    %v3174 = vpack.c.bf16 %v3083, %v3068
    %v3175 = vpack.c.bf16 %v3113, %v3098
    %v3176 = vpack.c.bf16 %v3143, %v3128
    %v3177 = vpack.c.bf16 %v3173, %v3158
    %v3179 = vsel %vm2981, %v3174, 0
    %v3182 = vsel %vm2981, %v3175, 0
    %v3185 = vsel %vm2981, %v3176, 0
    %v3188 = vsel %vm2981, %v3177, 0
    %3190 = vmatpush.bf16.msra.mxu0 0
    %3191 = vmatpush.bf16.msra.mxu0 0
    %3192 = vmatpush.bf16.msra.mxu0 0
    %3193 = vmatpush.bf16.msra.mxu0 0
    %3194 = vmatpush.bf16.msra.mxu0 %v2911
    %3195 = vmatpush.bf16.msra.mxu0 %v2910
    %3196 = vmatpush.bf16.msra.mxu0 %v2909
    %3197 = vmatpush.bf16.msra.mxu0 %v2908
    %3198 = vmatmul.bf16.gmra.mxu0 %v3179
    %v3199 = vpop.f32.mrf.mxu0
    %v3200 = vadd.f32 0.0, %v3199
    %v3201 = vpop.f32.mrf.mxu0
    %v3202 = vadd.f32 0.0, %v3201
    %3203 = vmatmul.bf16.gmra.mxu0 %v3182
    %v3204 = vpop.f32.mrf.mxu0
    %v3205 = vadd.f32 0.0, %v3204
    %v3206 = vpop.f32.mrf.mxu0
    %v3207 = vadd.f32 0.0, %v3206
    %3208 = vmatmul.bf16.gmra.mxu0 %v3185
    %v3209 = vpop.f32.mrf.mxu0
    %v3210 = vadd.f32 0.0, %v3209
    %v3211 = vpop.f32.mrf.mxu0
    %v3212 = vadd.f32 0.0, %v3211
    %3213 = vmatmul.bf16.gmra.mxu0 %v3188
    %v3214 = vpop.f32.mrf.mxu0
    %v3215 = vadd.f32 0.0, %v3214
    %v3216 = vpop.f32.mrf.mxu0
    %v3217 = vadd.f32 0.0, %v3216
    %3218 = vdwg.mxu0
    %v3219 = vpack.c.bf16 %v3200, %v3200
    %v3220 = vpack.c.bf16 %v3202, %v3202
    %v3221 = vpack.c.bf16 %v3205, %v3205
    %v3222 = vpack.c.bf16 %v3207, %v3207
    %v3223 = vpack.c.bf16 %v3210, %v3210
    %v3224 = vpack.c.bf16 %v3212, %v3212
    %v3225 = vpack.c.bf16 %v3215, %v3215
    %v3226 = vpack.c.bf16 %v3217, %v3217
    %v3235 = vunpack.c.l.b16 %v3219
    %v3236 = vunpack.c.l.b16 %v3220
    %v3237 = vunpack.c.l.b16 %v3221
    %v3238 = vunpack.c.l.b16 %v3222
    %v3239 = vunpack.c.l.b16 %v3223
    %v3240 = vunpack.c.l.b16 %v3224
    %v3241 = vunpack.c.l.b16 %v3225
    %v3242 = vunpack.c.l.b16 %v3226
    %v3243 = vpack.c.b16 %v3236, %v3235
    %v3244 = vpack.c.b16 %v3238, %v3237
    %v3245 = vpack.c.b16 %v3240, %v3239
    %v3246 = vpack.c.b16 %v3242, %v3241
    %v3251 = vld [vmem:[#allocation11] sm:$0xf]
    %v3252 = vld [vmem:[#allocation11 + $0x4] sm:$0xf]
    %v3253 = vld [vmem:[#allocation11 + $0x8] sm:$0xf]
    %v3254 = vld [vmem:[#allocation11 + $0xc] sm:$0xf]
    %v3255 = vld [vmem:[#allocation11 + $0x10] sm:$0xf]
    %v3256 = vld [vmem:[#allocation11 + $0x14] sm:$0xf]
    %v3257 = vld [vmem:[#allocation11 + $0x18] sm:$0xf]
    %v3258 = vld [vmem:[#allocation11 + $0x1c] sm:$0xf]
    %v3259 = vld [vmem:[#allocation11 + $0x20] sm:$0xf]
    %v3260 = vld [vmem:[#allocation11 + $0x24] sm:$0xf]
    %v3261 = vld [vmem:[#allocation11 + $0x28] sm:$0xf]
    %v3262 = vld [vmem:[#allocation11 + $0x2c] sm:$0xf]
    %v3263 = vld [vmem:[#allocation11 + $0x30] sm:$0xf]
    %v3264 = vld [vmem:[#allocation11 + $0x34] sm:$0xf]
    %v3265 = vld [vmem:[#allocation11 + $0x38] sm:$0xf]
    %v3266 = vld [vmem:[#allocation11 + $0x3c] sm:$0xf]
    %v3267 = vld [vmem:[#allocation11 + $0x40] sm:$0xf]
    %v3268 = vld [vmem:[#allocation11 + $0x44] sm:$0xf]
    %v3269 = vld [vmem:[#allocation11 + $0x48] sm:$0xf]
    %v3270 = vld [vmem:[#allocation11 + $0x4c] sm:$0xf]
    %v3271 = vld [vmem:[#allocation11 + $0x50] sm:$0xf]
    %v3272 = vld [vmem:[#allocation11 + $0x54] sm:$0xf]
    %v3273 = vld [vmem:[#allocation11 + $0x58] sm:$0xf]
    %v3274 = vld [vmem:[#allocation11 + $0x5c] sm:$0xf]
    %v3275 = vld [vmem:[#allocation11 + $0x60] sm:$0xf]
    %v3276 = vld [vmem:[#allocation11 + $0x64] sm:$0xf]
    %v3277 = vld [vmem:[#allocation11 + $0x68] sm:$0xf]
    %v3278 = vld [vmem:[#allocation11 + $0x6c] sm:$0xf]
    %v3279 = vld [vmem:[#allocation11 + $0x70] sm:$0xf]
    %v3280 = vld [vmem:[#allocation11 + $0x74] sm:$0xf]
    %v3281 = vld [vmem:[#allocation11 + $0x78] sm:$0xf]
    %v3282 = vld [vmem:[#allocation11 + $0x7c] sm:$0xf]
    %v3315 = vunpack.c.l.b16 %v3251
    %v3316 = vunpack.c.l.b16 %v3252
    %v3317 = vunpack.c.l.b16 %v3253
    %v3318 = vunpack.c.l.b16 %v3254
    %v3319 = vunpack.c.l.b16 %v3255
    %v3320 = vunpack.c.l.b16 %v3256
    %v3321 = vunpack.c.l.b16 %v3257
    %v3322 = vunpack.c.l.b16 %v3258
    %v3323 = vunpack.c.l.b16 %v3259
    %v3324 = vunpack.c.l.b16 %v3260
    %v3325 = vunpack.c.l.b16 %v3261
    %v3326 = vunpack.c.l.b16 %v3262
    %v3327 = vunpack.c.l.b16 %v3263
    %v3328 = vunpack.c.l.b16 %v3264
    %v3329 = vunpack.c.l.b16 %v3265
    %v3330 = vunpack.c.l.b16 %v3266
    %v3331 = vunpack.c.l.b16 %v3267
    %v3332 = vunpack.c.l.b16 %v3268
    %v3333 = vunpack.c.l.b16 %v3269
    %v3334 = vunpack.c.l.b16 %v3270
    %v3335 = vunpack.c.l.b16 %v3271
    %v3336 = vunpack.c.l.b16 %v3272
    %v3337 = vunpack.c.l.b16 %v3273
    %v3338 = vunpack.c.l.b16 %v3274
    %v3339 = vunpack.c.l.b16 %v3275
    %v3340 = vunpack.c.l.b16 %v3276
    %v3341 = vunpack.c.l.b16 %v3277
    %v3342 = vunpack.c.l.b16 %v3278
    %v3343 = vunpack.c.l.b16 %v3279
    %v3344 = vunpack.c.l.b16 %v3280
    %v3345 = vunpack.c.l.b16 %v3281
    %v3346 = vunpack.c.l.b16 %v3282
    %v3347 = vpack.c.b16 %v3316, %v3315
    %v3348 = vpack.c.b16 %v3318, %v3317
    %v3349 = vpack.c.b16 %v3320, %v3319
    %v3350 = vpack.c.b16 %v3322, %v3321
    %v3351 = vpack.c.b16 %v3324, %v3323
    %v3352 = vpack.c.b16 %v3326, %v3325
    %v3353 = vpack.c.b16 %v3328, %v3327
    %v3354 = vpack.c.b16 %v3330, %v3329
    %v3355 = vpack.c.b16 %v3332, %v3331
    %v3356 = vpack.c.b16 %v3334, %v3333
    %v3357 = vpack.c.b16 %v3336, %v3335
    %v3358 = vpack.c.b16 %v3338, %v3337
    %v3359 = vpack.c.b16 %v3340, %v3339
    %v3360 = vpack.c.b16 %v3342, %v3341
    %v3361 = vpack.c.b16 %v3344, %v3343
    %v3362 = vpack.c.b16 %v3346, %v3345
    %3379 = vmatpush.bf16.msra.mxu0 %v3354
    %3380 = vmatpush.bf16.msra.mxu0 %v3353
    %3381 = vmatpush.bf16.msra.mxu0 %v3352
    %3382 = vmatpush.bf16.msra.mxu0 %v3351
    %3383 = vmatpush.bf16.msra.mxu0 %v3350
    %3384 = vmatpush.bf16.msra.mxu0 %v3349
    %3385 = vmatpush.bf16.msra.mxu0 %v3348
    %3386 = vmatpush.bf16.msra.mxu0 %v3347
    %3387 = vmatmul.bf16.gmra.mxu0 %v2944
    %v3388 = vpop.f32.mrf.mxu0
    %v3389 = vadd.f32 0.0, %v3388
    %v3390 = vpop.f32.mrf.mxu0
    %v3391 = vadd.f32 0.0, %v3390
    %3392 = vmatmul.bf16.gmra.mxu0 %v2945
    %v3393 = vpop.f32.mrf.mxu0
    %v3394 = vadd.f32 0.0, %v3393
    %v3395 = vpop.f32.mrf.mxu0
    %v3396 = vadd.f32 0.0, %v3395
    %3397 = vmatmul.bf16.gmra.mxu0 %v2946
    %v3398 = vpop.f32.mrf.mxu0
    %v3399 = vadd.f32 0.0, %v3398
    %v3400 = vpop.f32.mrf.mxu0
    %v3401 = vadd.f32 0.0, %v3400
    %3402 = vmatmul.bf16.gmra.mxu0 %v2947
    %v3403 = vpop.f32.mrf.mxu0
    %v3404 = vadd.f32 0.0, %v3403
    %v3405 = vpop.f32.mrf.mxu0
    %v3406 = vadd.f32 0.0, %v3405
    %3407 = vdwg.mxu0
    %3408 = vmatpush.bf16.msra.mxu0 %v3362
    %3409 = vmatpush.bf16.msra.mxu0 %v3361
    %3410 = vmatpush.bf16.msra.mxu0 %v3360
    %3411 = vmatpush.bf16.msra.mxu0 %v3359
    %3412 = vmatpush.bf16.msra.mxu0 %v3358
    %3413 = vmatpush.bf16.msra.mxu0 %v3357
    %3414 = vmatpush.bf16.msra.mxu0 %v3356
    %3415 = vmatpush.bf16.msra.mxu0 %v3355
    %3416 = vmatmul.bf16.gmra.mxu0 %v3243
    %v3417 = vpop.f32.mrf.mxu0
    %v3418 = vadd.f32 %v3389, %v3417
    %v3419 = vpop.f32.mrf.mxu0
    %v3420 = vadd.f32 %v3391, %v3419
    %3421 = vmatmul.bf16.gmra.mxu0 %v3244
    %v3422 = vpop.f32.mrf.mxu0
    %v3423 = vadd.f32 %v3394, %v3422
    %v3424 = vpop.f32.mrf.mxu0
    %v3425 = vadd.f32 %v3396, %v3424
    %3426 = vmatmul.bf16.gmra.mxu0 %v3245
    %v3427 = vpop.f32.mrf.mxu0
    %v3428 = vadd.f32 %v3399, %v3427
    %v3429 = vpop.f32.mrf.mxu0
    %v3430 = vadd.f32 %v3401, %v3429
    %3431 = vmatmul.bf16.gmra.mxu0 %v3246
    %v3432 = vpop.f32.mrf.mxu0
    %v3433 = vadd.f32 %v3404, %v3432
    %v3434 = vpop.f32.mrf.mxu0
    %v3435 = vadd.f32 %v3406, %v3434
    %3436 = vdwg.mxu0
    %v3437 = vtanh.pop %v3418
    %v3438 = vtanh.pop %v3420
    %v3439 = vtanh.pop %v3423
    %v3440 = vtanh.pop %v3425
    %v3441 = vtanh.pop %v3428
    %v3442 = vtanh.pop %v3430
    %v3443 = vtanh.pop %v3433
    %v3444 = vtanh.pop %v3435
    %v3445 = vpack.c.bf16 %v3438, %v3437
    %v3446 = vpack.c.bf16 %v3440, %v3439
    %v3447 = vpack.c.bf16 %v3442, %v3441
    %v3448 = vpack.c.bf16 %v3444, %v3443
    %v3449 = vld [vmem:[#allocation12] sm:$0xf]
    %v3450 = vld [vmem:[#allocation12 + $0x4] sm:$0xf]
    %v3451 = vld [vmem:[#allocation12 + $0x8] sm:$0xf]
    %v3452 = vld [vmem:[#allocation12 + $0xc] sm:$0xf]
    %v3453 = vld [vmem:[#allocation12 + $0x10] sm:$0xf]
    %v3454 = vld [vmem:[#allocation12 + $0x14] sm:$0xf]
    %v3455 = vld [vmem:[#allocation12 + $0x18] sm:$0xf]
    %v3456 = vld [vmem:[#allocation12 + $0x1c] sm:$0xf]
    %v3457 = vld [vmem:[#allocation12 + $0x20] sm:$0xf]
    %v3458 = vld [vmem:[#allocation12 + $0x24] sm:$0xf]
    %v3459 = vld [vmem:[#allocation12 + $0x28] sm:$0xf]
    %v3460 = vld [vmem:[#allocation12 + $0x2c] sm:$0xf]
    %v3461 = vld [vmem:[#allocation12 + $0x30] sm:$0xf]
    %v3462 = vld [vmem:[#allocation12 + $0x34] sm:$0xf]
    %v3463 = vld [vmem:[#allocation12 + $0x38] sm:$0xf]
    %v3464 = vld [vmem:[#allocation12 + $0x3c] sm:$0xf]
    %v3465 = vld [vmem:[%s13] sm:$0x1]
    %v3467 = vperm.slane %v3465, 0
    %v3485 = vunpack.c.l.b16 %v3449
    %v3486 = vunpack.c.l.b16 %v3450
    %v3487 = vunpack.c.l.b16 %v3451
    %v3488 = vunpack.c.l.b16 %v3452
    %v3489 = vunpack.c.l.b16 %v3453
    %v3490 = vunpack.c.l.b16 %v3454
    %v3491 = vunpack.c.l.b16 %v3455
    %v3492 = vunpack.c.l.b16 %v3456
    %v3493 = vunpack.c.l.b16 %v3457
    %v3494 = vunpack.c.l.b16 %v3458
    %v3495 = vunpack.c.l.b16 %v3459
    %v3496 = vunpack.c.l.b16 %v3460
    %v3497 = vunpack.c.l.b16 %v3461
    %v3498 = vunpack.c.l.b16 %v3462
    %v3499 = vunpack.c.l.b16 %v3463
    %v3500 = vunpack.c.l.b16 %v3464
    %v3501 = vpack.c.b16 %v3486, %v3485
    %v3502 = vpack.c.b16 %v3488, %v3487
    %v3503 = vpack.c.b16 %v3490, %v3489
    %v3504 = vpack.c.b16 %v3492, %v3491
    %v3505 = vpack.c.b16 %v3494, %v3493
    %v3506 = vpack.c.b16 %v3496, %v3495
    %v3507 = vpack.c.b16 %v3498, %v3497
    %v3508 = vpack.c.b16 %v3500, %v3499
    %3517 = vmatpush.bf16.msra.mxu0 %v3508
    %3518 = vmatpush.bf16.msra.mxu0 %v3507
    %3519 = vmatpush.bf16.msra.mxu0 %v3506
    %3520 = vmatpush.bf16.msra.mxu0 %v3505
    %3521 = vmatpush.bf16.msra.mxu0 %v3504
    %3522 = vmatpush.bf16.msra.mxu0 %v3503
    %3523 = vmatpush.bf16.msra.mxu0 %v3502
    %3524 = vmatpush.bf16.msra.mxu0 %v3501
    %3525 = vmatmul.bf16.gmra.mxu0 %v3445
    %v3526 = vpop.f32.mrf.mxu0
    %v3527 = vadd.f32 %v3467, %v3526
    %v3528 = vpop.f32.mrf.mxu0
    %v3529 = vadd.f32 %v3467, %v3528
    %3530 = vmatmul.bf16.gmra.mxu0 %v3446
    %v3531 = vpop.f32.mrf.mxu0
    %v3532 = vadd.f32 %v3467, %v3531
    %v3533 = vpop.f32.mrf.mxu0
    %v3534 = vadd.f32 %v3467, %v3533
    %3535 = vmatmul.bf16.gmra.mxu0 %v3447
    %v3536 = vpop.f32.mrf.mxu0
    %v3537 = vadd.f32 %v3467, %v3536
    %v3538 = vpop.f32.mrf.mxu0
    %v3539 = vadd.f32 %v3467, %v3538
    %3540 = vmatmul.bf16.gmra.mxu0 %v3448
    %v3541 = vpop.f32.mrf.mxu0
    %v3542 = vadd.f32 %v3467, %v3541
    %v3543 = vpop.f32.mrf.mxu0
    %v3544 = vadd.f32 %v3467, %v3543
    %3545 = vdwg.mxu0
    %3546 = vst [vmem:[#allocation14] sm:$0xff] %v3527
    %3547 = vst [vmem:[#allocation14 + $0x8] sm:$0xff] %v3529
    %3548 = vst [vmem:[#allocation14 + $0x10] sm:$0xff] %v3532
    %3549 = vst [vmem:[#allocation14 + $0x18] sm:$0xff] %v3534
    %3550 = vst [vmem:[#allocation14 + $0x20] sm:$0xff] %v3537
    %3551 = vst [vmem:[#allocation14 + $0x28] sm:$0xff] %v3539
    %3552 = vst [vmem:[#allocation14 + $0x30] sm:$0xff] %v3542
    %3553 = vst [vmem:[#allocation14 + $0x38] sm:$0xff] %v3544
    // Predicated region
    $region70: #{seq2set_forward.1} parent=1 // pred_check
      _
    $region71: #{seq2set_forward.1} parent=1 // pred_check_branch
      %3555 = sbr.rel (0) target = $region73
    $region72: #{seq2set_forward.1} parent=1 // pred_region
      %3557 = vsyncadd [#allocation9], 0
      %s3558 = sshll.u32 [#allocation14], 4
      %s3559 = int_to_ptr.vmem [resolvable:$true] %s3558
      %s3560 = sshll.u32 %s14, 4
      %s3561 = int_to_ptr.hbm [resolvable:$true] %s3560
      %3566 = dma.vmem_to_hbm [thread:$0]  %s3559, 1024, %s3561, [#allocation9], 128, 128, 8
    $region73: #{seq2set_forward.1} parent=1 // pred_fallthru
      _
    // Predicated region
    $region74: #{seq2set_forward.1} parent=1 // pred_check
      _
    $region75: #{seq2set_forward.1} parent=1 // pred_check_branch
      %3568 = sbr.rel (0) target = $region77
    $region76: #{seq2set_forward.1} parent=1 // pred_region
      %3570 = dma.done [#allocation9], 1024
    $region77: #{seq2set_forward.1} parent=1 // pred_fallthru
      _
    %3571 = vsyncpa [#allocation8], 1
    %3572 = vsyncpa [#allocation13], 1
    %3573 = vsyncpa [#allocation9], 1
    %3574 = vsyncpa [#allocation10], 1

</llo_original>
